<compile_context>
chip_gen: v5e
topology: v5e:2x2
jax: 0.10.0
libtpu: 0.0.40
codegen_flags: <defaults>
</compile_context>

<pallas_src>
import functools

import jax
import jax.numpy as jnp
from jax.experimental import pallas as pl
from jax.experimental.pallas import tpu as pltpu


# ---------------------------------------------------------------------------
# Fused RCAB kernel: one image (grid step) per invocation.
# ---------------------------------------------------------------------------
def _rcab_kernel(x_ref, w1_ref, b1_ref, w2_ref, b2_ref,
                 wd1t_ref, bd1_ref, wd2_ref, bd2_ref, o_ref,
                 pad_ref, col_ref, *, tpg, slot_w, n_slots):
    # x_ref / o_ref : (1, H, W, C)
    # w1_ref, w2_ref: (n_slots*slot_w, C)  conv weights, taps densely packed
    # b1_ref, b2_ref: (1, C)
    # wd1t_ref: (Cr, C)  squeeze weight (transposed), bd1_ref: (Cr, 1)
    # wd2_ref : (Cr, C)  excite  weight,              bd2_ref: (1, C)
    # pad_ref : VMEM (H+2, W+16, C) f32   zero-bordered conv input buffer
    # col_ref : VMEM (H*W, n_slots*slot_w) f32   densely packed im2col matrix
    H, W, C = o_ref.shape[1], o_ref.shape[2], o_ref.shape[3]
    HW = H * W
    P = 8                       # 8-aligned sublane offset of the image interior
    f32 = jnp.float32

    # ---- Zero ONLY the halo cells the taps read (rows 0 / H+1, and the two
    # ---- 8-wide aligned column stripes covering columns P-1 and P+W).
    # ---- Done every grid step (cheap) so correctness never depends on which
    # ---- core ran step 0 under dimension_semantics=("parallel",).
    zrow = jnp.zeros((1, pad_ref.shape[1], C), f32)
    pad_ref[0:1, :, :] = zrow
    pad_ref[H + 1:H + 2, :, :] = zrow
    zcol = jnp.zeros((H, 8, C), f32)
    pad_ref[1:H + 1, P - 8:P, :] = zcol            # covers column P-1
    pad_ref[1:H + 1, P + W:P + W + 8, :] = zcol    # covers column P+W

    def conv3x3(inp_hwc_f32, w_ref, b_ref, relu):
        # Write the image interior into the zero-bordered buffer (row offset 1
        # is a leading-dim index; column offset P=8 and width W are
        # sublane-aligned -> plain stores, no host-side jnp.pad).
        pad_ref[1:H + 1, P:P + W, :] = inp_hwc_f32
        # Dense im2col: `tpg` taps per 128-lane slot.  Each slot is assembled
        # in registers (lane concat) and stored once, full lane width.
        for s in range(n_slots):
            pieces, used = [], 0
            for j in range(tpg):
                t = s * tpg + j
                if t >= 9:
                    break
                kh, kw = divmod(t, 3)
                patch = pad_ref[kh:kh + H, P - 1 + kw:P - 1 + kw + W, :]
                pieces.append(patch.reshape(HW, C))
                used += C
            if used < slot_w:
                pieces.append(jnp.zeros((HW, slot_w - used), f32))
            slot_val = pieces[0] if len(pieces) == 1 else jnp.concatenate(
                pieces, axis=-1)
            col_ref[:, s * slot_w:(s + 1) * slot_w] = slot_val
        # Single MXU matmul per conv; accumulation stays inside the MXU.
        acc = jnp.dot(col_ref[...], w_ref[...],
                      preferred_element_type=f32) + b_ref[...]
        if relu:
            acc = jnp.maximum(acc, 0.0)
        return acc                                              # (H*W, C) f32

    h = conv3x3(x_ref[0].astype(f32), w1_ref, b1_ref, relu=True)   # conv1+ReLU
    h = conv3x3(h.reshape(H, W, C), w2_ref, b2_ref, relu=False)    # conv2

    # ---- Channel attention on the VPU/XLU (no M=1 MXU round trips) ----
    y = jnp.sum(h, axis=0, keepdims=True) * (1.0 / HW)              # (1, C)
    z = jnp.sum(y * wd1t_ref[...], axis=1, keepdims=True)           # (Cr, 1)
    z = jnp.maximum(z + bd1_ref[...], 0.0)
    gate = jax.nn.sigmoid(
        jnp.sum(z * wd2_ref[...], axis=0, keepdims=True) + bd2_ref[...])  # (1, C)

    # ---- Channel-wise scale + residual add (x re-read from its VMEM block
    # ---- instead of being kept live across the whole kernel).
    out = h.reshape(H, W, C) * gate + x_ref[0].astype(f32)
    o_ref[0] = out.astype(o_ref.dtype)


def _pack_conv_weight(w_hwio, tpg, slot_w, n_slots):
    """(3,3,Cin,Cout) HWIO -> (n_slots*slot_w, Cout), taps densely packed so
    tap t lives at rows [ (t//tpg)*slot_w + (t%tpg)*Cin , ... + Cin )."""
    kh, kw, cin, cout = w_hwio.shape
    taps = w_hwio.reshape(kh * kw, cin, cout)
    packed = jnp.zeros((n_slots * slot_w, cout), w_hwio.dtype)
    for t in range(kh * kw):
        s, j = divmod(t, tpg)
        r0 = s * slot_w + j * cin
        packed = packed.at[r0:r0 + cin, :].set(taps[t])
    return packed


# ---------------------------------------------------------------------------
# RCAB forward (NHWC), one fused pallas_call.
# ---------------------------------------------------------------------------
def rcab_forward(x_nhwc, params):
    N, H, W, C = x_nhwc.shape
    Cr = params["ca_w1"].shape[1]

    # Dense tap packing: tpg taps share one 128-lane slot when C divides 128;
    # otherwise fall back to one tap per (C rounded up to 128)-lane slot.
    if C <= 128 and 128 % C == 0:
        tpg, slot_w = 128 // C, 128
    else:
        tpg, slot_w = 1, ((C + 127) // 128) * 128
    n_slots = -(-9 // tpg)           # ceil(9 / tpg)
    k_pad = n_slots * slot_w

    w1p = _pack_conv_weight(params["conv1_w"], tpg, slot_w, n_slots)
    w2p = _pack_conv_weight(params["conv2_w"], tpg, slot_w, n_slots)
    b1 = params["conv1_b"].reshape(1, C)
    b2 = params["conv2_b"].reshape(1, C)
    wd1t = params["ca_w1"].T                      # (Cr, C)
    bd1 = params["ca_b1"].reshape(Cr, 1)
    wd2 = params["ca_w2"]                         # (Cr, C)
    bd2 = params["ca_b2"].reshape(1, C)

    kernel = functools.partial(_rcab_kernel, tpg=tpg, slot_w=slot_w,
                               n_slots=n_slots)
    const = lambda n: (0, 0)

    # Explicit VMEM budget (lane-padded estimate + double-buffered HBM blocks),
    # floor 8 MiB, cap 32 MiB so it is valid on v5e/v6e/v7x.
    lane = lambda c: ((c + 127) // 128) * 128
    pad_bytes = (H + 2) * (W + 16) * lane(C) * 4
    col_bytes = H * W * k_pad * 4
    blk_bytes = H * W * lane(C) * x_nhwc.dtype.itemsize
    wgt_bytes = 2 * k_pad * lane(C) * 4 + 4 * max(Cr, 1) * lane(C) * 4
    need = pad_bytes + col_bytes + 4 * blk_bytes + 2 * wgt_bytes + (1 << 20)
    vmem_limit = int(min(max(2 * need, 8 << 20), 32 << 20))

    return pl.pallas_call(
        kernel,
        out_shape=jax.ShapeDtypeStruct((N, H, W, C), x_nhwc.dtype),
        grid_spec=pltpu.PrefetchScalarGridSpec(
            num_scalar_prefetch=0,
            grid=(N,),
            in_specs=[
                pl.BlockSpec((1, H, W, C), lambda n: (n, 0, 0, 0)),
                pl.BlockSpec((k_pad, C), const),
                pl.BlockSpec((1, C), const),
                pl.BlockSpec((k_pad, C), const),
                pl.BlockSpec((1, C), const),
                pl.BlockSpec((Cr, C), const),
                pl.BlockSpec((Cr, 1), const),
                pl.BlockSpec((Cr, C), const),
                pl.BlockSpec((1, C), const),
            ],
            out_specs=pl.BlockSpec((1, H, W, C), lambda n: (n, 0, 0, 0)),
            scratch_shapes=[
                pltpu.VMEM((H + 2, W + 16, C), jnp.float32),   # padded image
                pltpu.VMEM((H * W, k_pad), jnp.float32),       # dense im2col
            ],
        ),
        compiler_params=pltpu.CompilerParams(
            dimension_semantics=("parallel",),
            vmem_limit_bytes=vmem_limit),
    )(x_nhwc, w1p, b1, w2p, b2, wd1t, bd1, wd2, bd2)


# ---------------------------------------------------------------------------
# Pure-JAX reference for verification.
# ---------------------------------------------------------------------------
def rcab_reference(x_nhwc, params):
    hp = jax.lax.Precision.HIGHEST

    def conv(x, w, b):
        return jax.lax.conv_general_dilated(
            x, w, window_strides=(1, 1), padding="SAME",
            dimension_numbers=("NHWC", "HWIO", "NHWC"),
            precision=hp) + b.reshape(1, 1, 1, -1)

    h = jax.nn.relu(conv(x_nhwc, params["conv1_w"], params["conv1_b"]))
    h = conv(h, params["conv2_w"], params["conv2_b"])
    y = jnp.mean(h, axis=(1, 2), keepdims=True)                   # (N,1,1,C)
    y = jax.nn.relu(jnp.einsum("nhwc,cd->nhwd", y, params["ca_w1"], precision=hp)
                    + params["ca_b1"].reshape(1, 1, 1, -1))
    y = jax.nn.sigmoid(jnp.einsum("nhwc,cd->nhwd", y, params["ca_w2"], precision=hp)
                       + params["ca_b2"].reshape(1, 1, 1, -1))
    return h * y + x_nhwc


if __name__ == "__main__":
    # Shapes consistent with RCAB(n_feat=32, kernel_size=3, reduction=16).
    N, H, W, C = 2, 16, 16, 32
    reduction = 16
    Cr = C // reduction  # 2

    keys = jax.random.split(jax.random.PRNGKey(0), 9)
    params = {
        "conv1_w": 0.05 * jax.random.normal(keys[0], (3, 3, C, C), jnp.float32),
        "conv1_b": 0.01 * jax.random.normal(keys[1], (C,), jnp.float32),
        "conv2_w": 0.05 * jax.random.normal(keys[2], (3, 3, C, C), jnp.float32),
        "conv2_b": 0.01 * jax.random.normal(keys[3], (C,), jnp.float32),
        "ca_w1": 0.1 * jax.random.normal(keys[4], (C, Cr), jnp.float32),
        "ca_b1": 0.01 * jax.random.normal(keys[5], (Cr,), jnp.float32),
        "ca_w2": 0.1 * jax.random.normal(keys[6], (Cr, C), jnp.float32),
        "ca_b2": 0.01 * jax.random.normal(keys[7], (C,), jnp.float32),
    }
    # NHWC input (PyTorch NCHW equivalent: (2, 32, 16, 16)).
    x = jax.random.normal(keys[8], (N, H, W, C), jnp.float32)

    fwd = jax.jit(rcab_forward)
    out = jax.block_until_ready(fwd(x, params))
    ref = jax.block_until_ready(rcab_reference(x, params))

    assert out.shape == (N, H, W, C)
    max_err = float(jnp.max(jnp.abs(out - ref)))
    assert max_err < 2e-4, f"mismatch vs reference: {max_err}"

    print("KERNEL_OK")
</pallas_src>

<mosaic_0001>
module attributes {stable_mosaic.version = 11 : i64} {
  func.func @_rcab_kernel(%arg0: i32, %arg1: memref<1x16x16x32xf32, #tpu.memory_space<vmem>>, %arg2: memref<384x32xf32, #tpu.memory_space<vmem>>, %arg3: memref<1x32xf32, #tpu.memory_space<vmem>>, %arg4: memref<384x32xf32, #tpu.memory_space<vmem>>, %arg5: memref<1x32xf32, #tpu.memory_space<vmem>>, %arg6: memref<2x32xf32, #tpu.memory_space<vmem>>, %arg7: memref<2x1xf32, #tpu.memory_space<vmem>>, %arg8: memref<2x32xf32, #tpu.memory_space<vmem>>, %arg9: memref<1x32xf32, #tpu.memory_space<vmem>>, %arg10: memref<1x16x16x32xf32, #tpu.memory_space<vmem>>, %arg11: memref<18x32x32xf32, #tpu.memory_space<vmem>>, %arg12: memref<256x384xf32, #tpu.memory_space<vmem>>) attributes {dimension_semantics = [#tpu.dimension_semantics<parallel>], iteration_bounds = array<i64: 2>, scalar_prefetch = 0 : i64, scratch_operands = 2 : i64, tpu.core_type = #tpu.core_type<tc>, window_params = [{transform_indices = @transform_0, window_bounds = array<i64: 1, 16, 16, 32>}, {pipeline_mode = #tpu.pipeline_mode<synchronous>, transform_indices = @transform_1, window_bounds = array<i64: 384, 32>}, {pipeline_mode = #tpu.pipeline_mode<synchronous>, transform_indices = @transform_2, window_bounds = array<i64: 1, 32>}, {pipeline_mode = #tpu.pipeline_mode<synchronous>, transform_indices = @transform_3, window_bounds = array<i64: 384, 32>}, {pipeline_mode = #tpu.pipeline_mode<synchronous>, transform_indices = @transform_4, window_bounds = array<i64: 1, 32>}, {pipeline_mode = #tpu.pipeline_mode<synchronous>, transform_indices = @transform_5, window_bounds = array<i64: 2, 32>}, {pipeline_mode = #tpu.pipeline_mode<synchronous>, transform_indices = @transform_6, window_bounds = array<i64: 2, 1>}, {pipeline_mode = #tpu.pipeline_mode<synchronous>, transform_indices = @transform_7, window_bounds = array<i64: 2, 32>}, {pipeline_mode = #tpu.pipeline_mode<synchronous>, transform_indices = @transform_8, window_bounds = array<i64: 1, 32>}, {transform_indices = @transform_9, window_bounds = array<i64: 1, 16, 16, 32>}]} {
    %cst = arith.constant 0.000000e+00 : f32
    %0 = vector.broadcast %cst : f32 to vector<1x32x32xf32>
    %c0 = arith.constant 0 : index
    %c0_0 = arith.constant 0 : index
    %c0_1 = arith.constant 0 : index
    %1 = vector.load %arg11[%c0, %c0_0, %c0_1] : memref<18x32x32xf32, #tpu.memory_space<vmem>>, vector<1x32x32xf32>
    tpu.vector_store %arg11[%c0, %c0_0, %c0_1], %0 {strides = array<i32>} : memref<18x32x32xf32, #tpu.memory_space<vmem>>, vector<1x32x32xf32>,
    %c17 = arith.constant 17 : index
    %c0_2 = arith.constant 0 : index
    %c0_3 = arith.constant 0 : index
    %2 = vector.load %arg11[%c17, %c0_2, %c0_3] : memref<18x32x32xf32, #tpu.memory_space<vmem>>, vector<1x32x32xf32>
    tpu.vector_store %arg11[%c17, %c0_2, %c0_3], %0 {strides = array<i32>} : memref<18x32x32xf32, #tpu.memory_space<vmem>>, vector<1x32x32xf32>,
    %cst_4 = arith.constant 0.000000e+00 : f32
    %3 = vector.broadcast %cst_4 : f32 to vector<16x8x32xf32>
    %c1 = arith.constant 1 : index
    %c0_5 = arith.constant 0 : index
    %c0_6 = arith.constant 0 : index
    %4 = vector.load %arg11[%c1, %c0_5, %c0_6] : memref<18x32x32xf32, #tpu.memory_space<vmem>>, vector<16x8x32xf32>
    tpu.vector_store %arg11[%c1, %c0_5, %c0_6], %3 {strides = array<i32>} : memref<18x32x32xf32, #tpu.memory_space<vmem>>, vector<16x8x32xf32>,
    %c1_7 = arith.constant 1 : index
    %c24 = arith.constant 24 : index
    %c0_8 = arith.constant 0 : index
    %5 = vector.load %arg11[%c1_7, %c24, %c0_8] : memref<18x32x32xf32, #tpu.memory_space<vmem>>, vector<16x8x32xf32>
    tpu.vector_store %arg11[%c1_7, %c24, %c0_8], %3 {strides = array<i32>} : memref<18x32x32xf32, #tpu.memory_space<vmem>>, vector<16x8x32xf32>,
    %c0_9 = arith.constant 0 : index
    %c0_10 = arith.constant 0 : index
    %c0_11 = arith.constant 0 : index
    %c0_12 = arith.constant 0 : index
    %6 = vector.load %arg1[%c0_9, %c0_10, %c0_11, %c0_12] : memref<1x16x16x32xf32, #tpu.memory_space<vmem>>, vector<1x16x16x32xf32>
    %7 = vector.shape_cast %6 : vector<1x16x16x32xf32> to vector<16x16x32xf32>
    %c1_13 = arith.constant 1 : index
    %c8 = arith.constant 8 : index
    %c0_14 = arith.constant 0 : index
    %8 = vector.load %arg11[%c1_13, %c8, %c0_14] : memref<18x32x32xf32, #tpu.memory_space<vmem>>, vector<16x16x32xf32>
    tpu.vector_store %arg11[%c1_13, %c8, %c0_14], %7 {strides = array<i32>} : memref<18x32x32xf32, #tpu.memory_space<vmem>>, vector<16x16x32xf32>,
    %c0_15 = arith.constant 0 : index
    %c7 = arith.constant 7 : index
    %c0_16 = arith.constant 0 : index
    %9 = vector.load %arg11[%c0_15, %c7, %c0_16] : memref<18x32x32xf32, #tpu.memory_space<vmem>>, vector<16x16x32xf32>
    %10 = vector.shape_cast %9 : vector<16x16x32xf32> to vector<256x32xf32>
    %c0_17 = arith.constant 0 : index
    %c8_18 = arith.constant 8 : index
    %c0_19 = arith.constant 0 : index
    %11 = vector.load %arg11[%c0_17, %c8_18, %c0_19] : memref<18x32x32xf32, #tpu.memory_space<vmem>>, vector<16x16x32xf32>
    %12 = vector.shape_cast %11 : vector<16x16x32xf32> to vector<256x32xf32>
    %c0_20 = arith.constant 0 : index
    %c9 = arith.constant 9 : index
    %c0_21 = arith.constant 0 : index
    %13 = vector.load %arg11[%c0_20, %c9, %c0_21] : memref<18x32x32xf32, #tpu.memory_space<vmem>>, vector<16x16x32xf32>
    %14 = vector.shape_cast %13 : vector<16x16x32xf32> to vector<256x32xf32>
    %c1_22 = arith.constant 1 : index
    %c7_23 = arith.constant 7 : index
    %c0_24 = arith.constant 0 : index
    %15 = vector.load %arg11[%c1_22, %c7_23, %c0_24] : memref<18x32x32xf32, #tpu.memory_space<vmem>>, vector<16x16x32xf32>
    %16 = vector.shape_cast %15 : vector<16x16x32xf32> to vector<256x32xf32>
    %17 = tpu.concatenate %10, %12, %14, %16 in 1 : vector<256x32xf32>, vector<256x32xf32>, vector<256x32xf32>, vector<256x32xf32> -> vector<256x128xf32>
    %c0_25 = arith.constant 0 : index
    %c0_26 = arith.constant 0 : index
    %18 = vector.load %arg12[%c0_25, %c0_26] : memref<256x384xf32, #tpu.memory_space<vmem>>, vector<256x128xf32>
    tpu.vector_store %arg12[%c0_25, %c0_26], %17 {strides = array<i32>} : memref<256x384xf32, #tpu.memory_space<vmem>>, vector<256x128xf32>,
    %c1_27 = arith.constant 1 : index
    %c8_28 = arith.constant 8 : index
    %c0_29 = arith.constant 0 : index
    %19 = vector.load %arg11[%c1_27, %c8_28, %c0_29] : memref<18x32x32xf32, #tpu.memory_space<vmem>>, vector<16x16x32xf32>
    %20 = vector.shape_cast %19 : vector<16x16x32xf32> to vector<256x32xf32>
    %c1_30 = arith.constant 1 : index
    %c9_31 = arith.constant 9 : index
    %c0_32 = arith.constant 0 : index
    %21 = vector.load %arg11[%c1_30, %c9_31, %c0_32] : memref<18x32x32xf32, #tpu.memory_space<vmem>>, vector<16x16x32xf32>
    %22 = vector.shape_cast %21 : vector<16x16x32xf32> to vector<256x32xf32>
    %c2 = arith.constant 2 : index
    %c7_33 = arith.constant 7 : index
    %c0_34 = arith.constant 0 : index
    %23 = vector.load %arg11[%c2, %c7_33, %c0_34] : memref<18x32x32xf32, #tpu.memory_space<vmem>>, vector<16x16x32xf32>
    %24 = vector.shape_cast %23 : vector<16x16x32xf32> to vector<256x32xf32>
    %c2_35 = arith.constant 2 : index
    %c8_36 = arith.constant 8 : index
    %c0_37 = arith.constant 0 : index
    %25 = vector.load %arg11[%c2_35, %c8_36, %c0_37] : memref<18x32x32xf32, #tpu.memory_space<vmem>>, vector<16x16x32xf32>
    %26 = vector.shape_cast %25 : vector<16x16x32xf32> to vector<256x32xf32>
    %27 = tpu.concatenate %20, %22, %24, %26 in 1 : vector<256x32xf32>, vector<256x32xf32>, vector<256x32xf32>, vector<256x32xf32> -> vector<256x128xf32>
    %c0_38 = arith.constant 0 : index
    %c128 = arith.constant 128 : index
    %28 = vector.load %arg12[%c0_38, %c128] : memref<256x384xf32, #tpu.memory_space<vmem>>, vector<256x128xf32>
    tpu.vector_store %arg12[%c0_38, %c128], %27 {strides = array<i32>} : memref<256x384xf32, #tpu.memory_space<vmem>>, vector<256x128xf32>,
    %c2_39 = arith.constant 2 : index
    %c9_40 = arith.constant 9 : index
    %c0_41 = arith.constant 0 : index
    %29 = vector.load %arg11[%c2_39, %c9_40, %c0_41] : memref<18x32x32xf32, #tpu.memory_space<vmem>>, vector<16x16x32xf32>
    %30 = vector.shape_cast %29 : vector<16x16x32xf32> to vector<256x32xf32>
    %cst_42 = arith.constant 0.000000e+00 : f32
    %31 = vector.broadcast %cst_42 : f32 to vector<256x96xf32>
    %32 = tpu.concatenate %30, %31 in 1 : vector<256x32xf32>, vector<256x96xf32> -> vector<256x128xf32>
    %c0_43 = arith.constant 0 : index
    %c256 = arith.constant 256 : index
    %33 = vector.load %arg12[%c0_43, %c256] : memref<256x384xf32, #tpu.memory_space<vmem>>, vector<256x128xf32>
    tpu.vector_store %arg12[%c0_43, %c256], %32 {strides = array<i32>} : memref<256x384xf32, #tpu.memory_space<vmem>>, vector<256x128xf32>,
    %c0_44 = arith.constant 0 : index
    %c0_45 = arith.constant 0 : index
    %34 = vector.load %arg12[%c0_44, %c0_45] : memref<256x384xf32, #tpu.memory_space<vmem>>, vector<256x384xf32>
    %c0_46 = arith.constant 0 : index
    %c0_47 = arith.constant 0 : index
    %35 = vector.load %arg2[%c0_46, %c0_47] : memref<384x32xf32, #tpu.memory_space<vmem>>, vector<384x32xf32>
    %cst_48 = arith.constant dense<0.000000e+00> : vector<256x32xf32>
    %36 = tpu.matmul %34, %35, %cst_48 {dimension_numbers = #tpu.dot_dimension_numbers<[1], [0], [0], [1], [0, 0, 1, 1], [], []>} : vector<256x384xf32>, vector<384x32xf32>, vector<256x32xf32> -> vector<256x32xf32>
    %c0_49 = arith.constant 0 : index
    %c0_50 = arith.constant 0 : index
    %37 = vector.load %arg3[%c0_49, %c0_50] : memref<1x32xf32, #tpu.memory_space<vmem>>, vector<1x32xf32>
    %38 = vector.broadcast %37 : vector<1x32xf32> to vector<256x32xf32>
    %39 = arith.addf %36, %38 : vector<256x32xf32>
    %cst_51 = arith.constant 0.000000e+00 : f32
    %40 = vector.broadcast %cst_51 : f32 to vector<256x32xf32>
    %41 = arith.maximumf %39, %40 : vector<256x32xf32>
    %42 = vector.shape_cast %41 : vector<256x32xf32> to vector<16x16x32xf32>
    %c1_52 = arith.constant 1 : index
    %c8_53 = arith.constant 8 : index
    %c0_54 = arith.constant 0 : index
    %43 = vector.load %arg11[%c1_52, %c8_53, %c0_54] : memref<18x32x32xf32, #tpu.memory_space<vmem>>, vector<16x16x32xf32>
    tpu.vector_store %arg11[%c1_52, %c8_53, %c0_54], %42 {strides = array<i32>} : memref<18x32x32xf32, #tpu.memory_space<vmem>>, vector<16x16x32xf32>,
    %c0_55 = arith.constant 0 : index
    %c7_56 = arith.constant 7 : index
    %c0_57 = arith.constant 0 : index
    %44 = vector.load %arg11[%c0_55, %c7_56, %c0_57] : memref<18x32x32xf32, #tpu.memory_space<vmem>>, vector<16x16x32xf32>
    %45 = vector.shape_cast %44 : vector<16x16x32xf32> to vector<256x32xf32>
    %c0_58 = arith.constant 0 : index
    %c8_59 = arith.constant 8 : index
    %c0_60 = arith.constant 0 : index
    %46 = vector.load %arg11[%c0_58, %c8_59, %c0_60] : memref<18x32x32xf32, #tpu.memory_space<vmem>>, vector<16x16x32xf32>
    %47 = vector.shape_cast %46 : vector<16x16x32xf32> to vector<256x32xf32>
    %c0_61 = arith.constant 0 : index
    %c9_62 = arith.constant 9 : index
    %c0_63 = arith.constant 0 : index
    %48 = vector.load %arg11[%c0_61, %c9_62, %c0_63] : memref<18x32x32xf32, #tpu.memory_space<vmem>>, vector<16x16x32xf32>
    %49 = vector.shape_cast %48 : vector<16x16x32xf32> to vector<256x32xf32>
    %c1_64 = arith.constant 1 : index
    %c7_65 = arith.constant 7 : index
    %c0_66 = arith.constant 0 : index
    %50 = vector.load %arg11[%c1_64, %c7_65, %c0_66] : memref<18x32x32xf32, #tpu.memory_space<vmem>>, vector<16x16x32xf32>
    %51 = vector.shape_cast %50 : vector<16x16x32xf32> to vector<256x32xf32>
    %52 = tpu.concatenate %45, %47, %49, %51 in 1 : vector<256x32xf32>, vector<256x32xf32>, vector<256x32xf32>, vector<256x32xf32> -> vector<256x128xf32>
    %c0_67 = arith.constant 0 : index
    %c0_68 = arith.constant 0 : index
    %53 = vector.load %arg12[%c0_67, %c0_68] : memref<256x384xf32, #tpu.memory_space<vmem>>, vector<256x128xf32>
    tpu.vector_store %arg12[%c0_67, %c0_68], %52 {strides = array<i32>} : memref<256x384xf32, #tpu.memory_space<vmem>>, vector<256x128xf32>,
    %c1_69 = arith.constant 1 : index
    %c8_70 = arith.constant 8 : index
    %c0_71 = arith.constant 0 : index
    %54 = vector.load %arg11[%c1_69, %c8_70, %c0_71] : memref<18x32x32xf32, #tpu.memory_space<vmem>>, vector<16x16x32xf32>
    %55 = vector.shape_cast %54 : vector<16x16x32xf32> to vector<256x32xf32>
    %c1_72 = arith.constant 1 : index
    %c9_73 = arith.constant 9 : index
    %c0_74 = arith.constant 0 : index
    %56 = vector.load %arg11[%c1_72, %c9_73, %c0_74] : memref<18x32x32xf32, #tpu.memory_space<vmem>>, vector<16x16x32xf32>
    %57 = vector.shape_cast %56 : vector<16x16x32xf32> to vector<256x32xf32>
    %c2_75 = arith.constant 2 : index
    %c7_76 = arith.constant 7 : index
    %c0_77 = arith.constant 0 : index
    %58 = vector.load %arg11[%c2_75, %c7_76, %c0_77] : memref<18x32x32xf32, #tpu.memory_space<vmem>>, vector<16x16x32xf32>
    %59 = vector.shape_cast %58 : vector<16x16x32xf32> to vector<256x32xf32>
    %c2_78 = arith.constant 2 : index
    %c8_79 = arith.constant 8 : index
    %c0_80 = arith.constant 0 : index
    %60 = vector.load %arg11[%c2_78, %c8_79, %c0_80] : memref<18x32x32xf32, #tpu.memory_space<vmem>>, vector<16x16x32xf32>
    %61 = vector.shape_cast %60 : vector<16x16x32xf32> to vector<256x32xf32>
    %62 = tpu.concatenate %55, %57, %59, %61 in 1 : vector<256x32xf32>, vector<256x32xf32>, vector<256x32xf32>, vector<256x32xf32> -> vector<256x128xf32>
    %c0_81 = arith.constant 0 : index
    %c128_82 = arith.constant 128 : index
    %63 = vector.load %arg12[%c0_81, %c128_82] : memref<256x384xf32, #tpu.memory_space<vmem>>, vector<256x128xf32>
    tpu.vector_store %arg12[%c0_81, %c128_82], %62 {strides = array<i32>} : memref<256x384xf32, #tpu.memory_space<vmem>>, vector<256x128xf32>,
    %c2_83 = arith.constant 2 : index
    %c9_84 = arith.constant 9 : index
    %c0_85 = arith.constant 0 : index
    %64 = vector.load %arg11[%c2_83, %c9_84, %c0_85] : memref<18x32x32xf32, #tpu.memory_space<vmem>>, vector<16x16x32xf32>
    %65 = vector.shape_cast %64 : vector<16x16x32xf32> to vector<256x32xf32>
    %cst_86 = arith.constant 0.000000e+00 : f32
    %66 = vector.broadcast %cst_86 : f32 to vector<256x96xf32>
    %67 = tpu.concatenate %65, %66 in 1 : vector<256x32xf32>, vector<256x96xf32> -> vector<256x128xf32>
    %c0_87 = arith.constant 0 : index
    %c256_88 = arith.constant 256 : index
    %68 = vector.load %arg12[%c0_87, %c256_88] : memref<256x384xf32, #tpu.memory_space<vmem>>, vector<256x128xf32>
    tpu.vector_store %arg12[%c0_87, %c256_88], %67 {strides = array<i32>} : memref<256x384xf32, #tpu.memory_space<vmem>>, vector<256x128xf32>,
    %c0_89 = arith.constant 0 : index
    %c0_90 = arith.constant 0 : index
    %69 = vector.load %arg12[%c0_89, %c0_90] : memref<256x384xf32, #tpu.memory_space<vmem>>, vector<256x384xf32>
    %c0_91 = arith.constant 0 : index
    %c0_92 = arith.constant 0 : index
    %70 = vector.load %arg4[%c0_91, %c0_92] : memref<384x32xf32, #tpu.memory_space<vmem>>, vector<384x32xf32>
    %cst_93 = arith.constant dense<0.000000e+00> : vector<256x32xf32>
    %71 = tpu.matmul %69, %70, %cst_93 {dimension_numbers = #tpu.dot_dimension_numbers<[1], [0], [0], [1], [0, 0, 1, 1], [], []>} : vector<256x384xf32>, vector<384x32xf32>, vector<256x32xf32> -> vector<256x32xf32>
    %c0_94 = arith.constant 0 : index
    %c0_95 = arith.constant 0 : index
    %72 = vector.load %arg5[%c0_94, %c0_95] : memref<1x32xf32, #tpu.memory_space<vmem>>, vector<1x32xf32>
    %73 = vector.broadcast %72 : vector<1x32xf32> to vector<256x32xf32>
    %74 = arith.addf %71, %73 : vector<256x32xf32>
    %cst_96 = arith.constant dense<0.000000e+00> : vector<32xf32>
    %75 = vector.multi_reduction <add>, %74, %cst_96 [0] : vector<256x32xf32> to vector<32xf32>
    %76 = vector.shape_cast %75 : vector<32xf32> to vector<1x32xf32>
    %cst_97 = arith.constant 3.906250e-03 : f32
    %77 = vector.broadcast %cst_97 : f32 to vector<1x32xf32>
    %78 = arith.mulf %76, %77 : vector<1x32xf32>
    %c0_98 = arith.constant 0 : index
    %c0_99 = arith.constant 0 : index
    %79 = vector.load %arg6[%c0_98, %c0_99] : memref<2x32xf32, #tpu.memory_space<vmem>>, vector<2x32xf32>
    %80 = vector.broadcast %78 : vector<1x32xf32> to vector<2x32xf32>
    %81 = arith.mulf %80, %79 : vector<2x32xf32>
    %cst_100 = arith.constant dense<0.000000e+00> : vector<2xf32>
    %82 = vector.multi_reduction <add>, %81, %cst_100 [1] : vector<2x32xf32> to vector<2xf32>
    %83 = vector.shape_cast %82 : vector<2xf32> to vector<2x1xf32>
    %c0_101 = arith.constant 0 : index
    %c0_102 = arith.constant 0 : index
    %84 = vector.load %arg7[%c0_101, %c0_102] : memref<2x1xf32, #tpu.memory_space<vmem>>, vector<2x1xf32>
    %85 = arith.addf %83, %84 : vector<2x1xf32>
    %cst_103 = arith.constant 0.000000e+00 : f32
    %86 = vector.broadcast %cst_103 : f32 to vector<2x1xf32>
    %87 = arith.maximumf %85, %86 : vector<2x1xf32>
    %c0_104 = arith.constant 0 : index
    %c0_105 = arith.constant 0 : index
    %88 = vector.load %arg8[%c0_104, %c0_105] : memref<2x32xf32, #tpu.memory_space<vmem>>, vector<2x32xf32>
    %89 = vector.broadcast %87 : vector<2x1xf32> to vector<2x32xf32>
    %90 = arith.mulf %89, %88 : vector<2x32xf32>
    %cst_106 = arith.constant dense<0.000000e+00> : vector<32xf32>
    %91 = vector.multi_reduction <add>, %90, %cst_106 [0] : vector<2x32xf32> to vector<32xf32>
    %92 = vector.shape_cast %91 : vector<32xf32> to vector<1x32xf32>
    %c0_107 = arith.constant 0 : index
    %c0_108 = arith.constant 0 : index
    %93 = vector.load %arg9[%c0_107, %c0_108] : memref<1x32xf32, #tpu.memory_space<vmem>>, vector<1x32xf32>
    %94 = arith.addf %92, %93 : vector<1x32xf32>
    %95 = arith.negf %94 : vector<1x32xf32>
    %96 = math.exp %95 : vector<1x32xf32>
    %cst_109 = arith.constant 1.000000e+00 : f32
    %97 = vector.broadcast %cst_109 : f32 to vector<1x32xf32>
    %98 = arith.addf %97, %96 : vector<1x32xf32>
    %99 = arith.divf %97, %98 : vector<1x32xf32>
    %100 = vector.shape_cast %74 : vector<256x32xf32> to vector<16x16x32xf32>
    %101 = vector.shape_cast %99 : vector<1x32xf32> to vector<1x1x32xf32>
    %102 = vector.broadcast %101 : vector<1x1x32xf32> to vector<16x16x32xf32>
    %103 = arith.mulf %100, %102 : vector<16x16x32xf32>
    %c0_110 = arith.constant 0 : index
    %c0_111 = arith.constant 0 : index
    %c0_112 = arith.constant 0 : index
    %c0_113 = arith.constant 0 : index
    %104 = vector.load %arg1[%c0_110, %c0_111, %c0_112, %c0_113] : memref<1x16x16x32xf32, #tpu.memory_space<vmem>>, vector<1x16x16x32xf32>
    %105 = vector.shape_cast %104 : vector<1x16x16x32xf32> to vector<16x16x32xf32>
    %106 = arith.addf %103, %105 : vector<16x16x32xf32>
    %c0_114 = arith.constant 0 : index
    %c0_115 = arith.constant 0 : index
    %c0_116 = arith.constant 0 : index
    %c0_117 = arith.constant 0 : index
    %107 = vector.load %arg10[%c0_114, %c0_115, %c0_116, %c0_117] : memref<1x16x16x32xf32, #tpu.memory_space<vmem>>, vector<1x16x16x32xf32>
    %108 = vector.shape_cast %107 : vector<1x16x16x32xf32> to vector<16x16x32xf32>
    %109 = vector.shape_cast %106 : vector<16x16x32xf32> to vector<1x16x16x32xf32>
    tpu.vector_store %arg10[%c0_114, %c0_115, %c0_116, %c0_117], %109 {strides = array<i32>} : memref<1x16x16x32xf32, #tpu.memory_space<vmem>>, vector<1x16x16x32xf32>,
    return
  }
  func.func @transform_0(%arg0: i32) -> (i32, i32, i32, i32) {
    %c0_i32 = arith.constant 0 : i32
    %c0_i32_0 = arith.constant 0 : i32
    %c0_i32_1 = arith.constant 0 : i32
    %c0_i32_2 = arith.constant 0 : i32
    return %arg0, %c0_i32, %c0_i32_0, %c0_i32_1 : i32, i32, i32, i32
  }
  func.func @transform_1(%arg0: i32) -> (i32, i32) {
    %c0_i32 = arith.constant 0 : i32
    %c0_i32_0 = arith.constant 0 : i32
    %c0_i32_1 = arith.constant 0 : i32
    return %c0_i32, %c0_i32_0 : i32, i32
  }
  func.func @transform_2(%arg0: i32) -> (i32, i32) {
    %c0_i32 = arith.constant 0 : i32
    %c0_i32_0 = arith.constant 0 : i32
    %c0_i32_1 = arith.constant 0 : i32
    return %c0_i32, %c0_i32_0 : i32, i32
  }
  func.func @transform_3(%arg0: i32) -> (i32, i32) {
    %c0_i32 = arith.constant 0 : i32
    %c0_i32_0 = arith.constant 0 : i32
    %c0_i32_1 = arith.constant 0 : i32
    return %c0_i32, %c0_i32_0 : i32, i32
  }
  func.func @transform_4(%arg0: i32) -> (i32, i32) {
    %c0_i32 = arith.constant 0 : i32
    %c0_i32_0 = arith.constant 0 : i32
    %c0_i32_1 = arith.constant 0 : i32
    return %c0_i32, %c0_i32_0 : i32, i32
  }
  func.func @transform_5(%arg0: i32) -> (i32, i32) {
    %c0_i32 = arith.constant 0 : i32
    %c0_i32_0 = arith.constant 0 : i32
    %c0_i32_1 = arith.constant 0 : i32
    return %c0_i32, %c0_i32_0 : i32, i32
  }
  func.func @transform_6(%arg0: i32) -> (i32, i32) {
    %c0_i32 = arith.constant 0 : i32
    %c0_i32_0 = arith.constant 0 : i32
    %c0_i32_1 = arith.constant 0 : i32
    return %c0_i32, %c0_i32_0 : i32, i32
  }
  func.func @transform_7(%arg0: i32) -> (i32, i32) {
    %c0_i32 = arith.constant 0 : i32
    %c0_i32_0 = arith.constant 0 : i32
    %c0_i32_1 = arith.constant 0 : i32
    return %c0_i32, %c0_i32_0 : i32, i32
  }
  func.func @transform_8(%arg0: i32) -> (i32, i32) {
    %c0_i32 = arith.constant 0 : i32
    %c0_i32_0 = arith.constant 0 : i32
    %c0_i32_1 = arith.constant 0 : i32
    return %c0_i32, %c0_i32_0 : i32, i32
  }
  func.func @transform_9(%arg0: i32) -> (i32, i32, i32, i32) {
    %c0_i32 = arith.constant 0 : i32
    %c0_i32_0 = arith.constant 0 : i32
    %c0_i32_1 = arith.constant 0 : i32
    %c0_i32_2 = arith.constant 0 : i32
    return %arg0, %c0_i32, %c0_i32_0, %c0_i32_1 : i32, i32, i32, i32
  }
}

</mosaic_0001>

<llo_original>
// kernel: rcab_forward.1
$region0: #{rcab_forward.1}
  #allocation0 [shape = 'u32[]', space=smem, size = 0x4, offset = 0x4, fixed_abs, tag = 'smem constant byte address 0x4 - core index']
  #allocation1 [shape = 'u32[72,128]{1,0:T(1,128)}', space=vmem, size = 0x9000, scoped, tag = 'internal scratch']
  #allocation2 [shape = 'f32[18,32,32]{2,1,0:T(8,128)}', space=vmem, size = 0x48000, scoped, tag = 'scratch operand']
  #allocation3 [shape = 'f32[256,384]{1,0:T(8,128)}', space=vmem, size = 0x60000, scoped, tag = 'scratch operand']
  %s0 = inlined_call_operand.vmem [shape: f32[2,16,16,32], index: 0, kind: input, shape index: {}]
  %s1 = inlined_call_operand.vmem [shape: f32[384,32], index: 1, kind: input, shape index: {}]
  %s2 = inlined_call_operand.vmem [shape: f32[1,32], index: 2, kind: input, shape index: {}]
  %s3 = inlined_call_operand.vmem [shape: f32[384,32], index: 3, kind: input, shape index: {}]
  %s4 = inlined_call_operand.vmem [shape: f32[1,32], index: 4, kind: input, shape index: {}]
  %s5 = inlined_call_operand.vmem [shape: f32[2,32], index: 5, kind: input, shape index: {}]
  %s6 = inlined_call_operand.vmem [shape: f32[2,1], index: 6, kind: input, shape index: {}]
  %s7 = inlined_call_operand.vmem [shape: f32[2,32], index: 7, kind: input, shape index: {}]
  %s8 = inlined_call_operand.vmem [shape: f32[1,32], index: 8, kind: input, shape index: {}]
  %s9 = inlined_call_operand.hbm [shape: f32[2,16,16,32], index: 9, kind: output, shape index: {}]
  %s10 = sld [smem:[#allocation0]]
  $region69: #{rcab_forward.1} parent=0
    _
  %s12 = ssub.s32 1, %s10
  %s13 = scalar_select 0, %s12, %s10
  $region1: #{rcab_forward.1} parent=0
    #allocation4 [shape = 'u8[262144]{0}', space=vmem, size = 0x40000, scoped, tag = 'output window, operand 0']
    #allocation5 [shape = 's32[2]{0}', space=sflag, size = 0x8, scoped, tag = 'scoped memory for rcab_forward.1']
    %14 = vsyncpa [#allocation5], 0
    %s15 = scalar_lea.sflag [#allocation5], 1
    %16 = vsyncpa %s15, 0
    loop: start=0, step=1, limit=4
    $region2: #{rcab_forward.1} parent=1 // loop_pre_header
      _
    $region3: #{rcab_forward.1} parent=1 // loop_header
      %s18 = sphi 0, %s22
      %p19 = scmp.ge.s32.totalorder %s18, 4
      %s28 = sphi 0, %s30
      %s31 = sphi 0, %s28
      %s32 = sphi 0, %s31
      %s48 = sphi 0, %s32
      %s52 = sphi 0, %s52
      %s54 = sphi 0, %s52
      %s55 = sphi 0, %s54
      %s69 = sphi 0, %s55
      %s73 = sphi 0, %s73
      %s75 = sphi 0, %s73
      %s76 = sphi 0, %s75
      %s90 = sphi 0, %s76
      %s94 = sphi 0, %s94
      %s96 = sphi 0, %s94
      %s97 = sphi 0, %s96
      %s111 = sphi 0, %s97
      %s115 = sphi 0, %s115
      %s117 = sphi 0, %s115
      %s118 = sphi 0, %s117
      %s132 = sphi 0, %s118
      %s136 = sphi 0, %s136
      %s138 = sphi 0, %s136
      %s139 = sphi 0, %s138
      %s153 = sphi 0, %s139
      %s157 = sphi 0, %s157
      %s159 = sphi 0, %s157
      %s160 = sphi 0, %s159
      %s174 = sphi 0, %s160
      %s178 = sphi 0, %s178
      %s180 = sphi 0, %s178
      %s181 = sphi 0, %s180
      %s195 = sphi 0, %s181
      %s199 = sphi 0, %s199
      %s201 = sphi 0, %s199
      %s202 = sphi 0, %s201
      %s216 = sphi 0, %s202
      %s222 = sphi 0, %s224
      %s225 = sphi 0, %s222
      %s226 = sphi 0, %s225
      %s242 = sphi 0, %s226
    $region4: #{rcab_forward.1} parent=1 // loop_header_branch
      %21 = sbr.rel (%p19) target = $region8
    $region5: #{rcab_forward.1} parent=1 // loop_body
      %s23 = ssub.s32 %s18, 1
      %s24 = ssub.s32 %s18, 2
      %s25 = sadd.s32 %s18, 1
      %s26 = ssub.s32 %s18, %s25
      %p27 = scmp.eq.s32.totalorder %s26, 0
      %s29 = sadd.s32 %s28, 1
      %s30 = scalar_select %p27, %s28, %s29
      %p33 = pneg %p27
      %p34 = scmp.eq.s32.totalorder %s18, 1
      %p35 = por %p33, %p34
      %p36 = scmp.ne.s32.totalorder %s28, %s31
      %p37 = scmp.eq.s32.totalorder %s18, 0
      %p38 = por %p36, %p37
      %p39 = scmp.ne.s32.totalorder %s28, %s31
      %p40 = scmp.eq.s32.totalorder %s23, 1
      %p41 = por %p39, %p40
      %p42 = scmp.ne.s32.totalorder %s31, %s32
      %p43 = scmp.eq.s32.totalorder %s23, 0
      %p44 = por %p42, %p43
      %p45 = scmp.ne.s32.totalorder %s31, %s32
      %p46 = scmp.eq.s32.totalorder %s24, 1
      %p47 = por %p45, %p46
      %p49 = scmp.ne.s32.totalorder %s32, %s48
      %p50 = scmp.eq.s32.totalorder %s24, 0
      %p51 = por %p49, %p50
      %s53 = sadd.s32 %s52, 1
      %p56 = scmp.eq.s32.totalorder %s18, 1
      %p57 = scmp.ne.s32.totalorder %s52, %s54
      %p58 = scmp.eq.s32.totalorder %s18, 0
      %p59 = por %p57, %p58
      %p60 = scmp.ne.s32.totalorder %s52, %s54
      %p61 = scmp.eq.s32.totalorder %s23, 1
      %p62 = por %p60, %p61
      %p63 = scmp.ne.s32.totalorder %s54, %s55
      %p64 = scmp.eq.s32.totalorder %s23, 0
      %p65 = por %p63, %p64
      %p66 = scmp.ne.s32.totalorder %s54, %s55
      %p67 = scmp.eq.s32.totalorder %s24, 1
      %p68 = por %p66, %p67
      %p70 = scmp.ne.s32.totalorder %s55, %s69
      %p71 = scmp.eq.s32.totalorder %s24, 0
      %p72 = por %p70, %p71
      %s74 = sadd.s32 %s73, 1
      %p77 = scmp.eq.s32.totalorder %s18, 1
      %p78 = scmp.ne.s32.totalorder %s73, %s75
      %p79 = scmp.eq.s32.totalorder %s18, 0
      %p80 = por %p78, %p79
      %p81 = scmp.ne.s32.totalorder %s73, %s75
      %p82 = scmp.eq.s32.totalorder %s23, 1
      %p83 = por %p81, %p82
      %p84 = scmp.ne.s32.totalorder %s75, %s76
      %p85 = scmp.eq.s32.totalorder %s23, 0
      %p86 = por %p84, %p85
      %p87 = scmp.ne.s32.totalorder %s75, %s76
      %p88 = scmp.eq.s32.totalorder %s24, 1
      %p89 = por %p87, %p88
      %p91 = scmp.ne.s32.totalorder %s76, %s90
      %p92 = scmp.eq.s32.totalorder %s24, 0
      %p93 = por %p91, %p92
      %s95 = sadd.s32 %s94, 1
      %p98 = scmp.eq.s32.totalorder %s18, 1
      %p99 = scmp.ne.s32.totalorder %s94, %s96
      %p100 = scmp.eq.s32.totalorder %s18, 0
      %p101 = por %p99, %p100
      %p102 = scmp.ne.s32.totalorder %s94, %s96
      %p103 = scmp.eq.s32.totalorder %s23, 1
      %p104 = por %p102, %p103
      %p105 = scmp.ne.s32.totalorder %s96, %s97
      %p106 = scmp.eq.s32.totalorder %s23, 0
      %p107 = por %p105, %p106
      %p108 = scmp.ne.s32.totalorder %s96, %s97
      %p109 = scmp.eq.s32.totalorder %s24, 1
      %p110 = por %p108, %p109
      %p112 = scmp.ne.s32.totalorder %s97, %s111
      %p113 = scmp.eq.s32.totalorder %s24, 0
      %p114 = por %p112, %p113
      %s116 = sadd.s32 %s115, 1
      %p119 = scmp.eq.s32.totalorder %s18, 1
      %p120 = scmp.ne.s32.totalorder %s115, %s117
      %p121 = scmp.eq.s32.totalorder %s18, 0
      %p122 = por %p120, %p121
      %p123 = scmp.ne.s32.totalorder %s115, %s117
      %p124 = scmp.eq.s32.totalorder %s23, 1
      %p125 = por %p123, %p124
      %p126 = scmp.ne.s32.totalorder %s117, %s118
      %p127 = scmp.eq.s32.totalorder %s23, 0
      %p128 = por %p126, %p127
      %p129 = scmp.ne.s32.totalorder %s117, %s118
      %p130 = scmp.eq.s32.totalorder %s24, 1
      %p131 = por %p129, %p130
      %p133 = scmp.ne.s32.totalorder %s118, %s132
      %p134 = scmp.eq.s32.totalorder %s24, 0
      %p135 = por %p133, %p134
      %s137 = sadd.s32 %s136, 1
      %p140 = scmp.eq.s32.totalorder %s18, 1
      %p141 = scmp.ne.s32.totalorder %s136, %s138
      %p142 = scmp.eq.s32.totalorder %s18, 0
      %p143 = por %p141, %p142
      %p144 = scmp.ne.s32.totalorder %s136, %s138
      %p145 = scmp.eq.s32.totalorder %s23, 1
      %p146 = por %p144, %p145
      %p147 = scmp.ne.s32.totalorder %s138, %s139
      %p148 = scmp.eq.s32.totalorder %s23, 0
      %p149 = por %p147, %p148
      %p150 = scmp.ne.s32.totalorder %s138, %s139
      %p151 = scmp.eq.s32.totalorder %s24, 1
      %p152 = por %p150, %p151
      %p154 = scmp.ne.s32.totalorder %s139, %s153
      %p155 = scmp.eq.s32.totalorder %s24, 0
      %p156 = por %p154, %p155
      %s158 = sadd.s32 %s157, 1
      %p161 = scmp.eq.s32.totalorder %s18, 1
      %p162 = scmp.ne.s32.totalorder %s157, %s159
      %p163 = scmp.eq.s32.totalorder %s18, 0
      %p164 = por %p162, %p163
      %p165 = scmp.ne.s32.totalorder %s157, %s159
      %p166 = scmp.eq.s32.totalorder %s23, 1
      %p167 = por %p165, %p166
      %p168 = scmp.ne.s32.totalorder %s159, %s160
      %p169 = scmp.eq.s32.totalorder %s23, 0
      %p170 = por %p168, %p169
      %p171 = scmp.ne.s32.totalorder %s159, %s160
      %p172 = scmp.eq.s32.totalorder %s24, 1
      %p173 = por %p171, %p172
      %p175 = scmp.ne.s32.totalorder %s160, %s174
      %p176 = scmp.eq.s32.totalorder %s24, 0
      %p177 = por %p175, %p176
      %s179 = sadd.s32 %s178, 1
      %p182 = scmp.eq.s32.totalorder %s18, 1
      %p183 = scmp.ne.s32.totalorder %s178, %s180
      %p184 = scmp.eq.s32.totalorder %s18, 0
      %p185 = por %p183, %p184
      %p186 = scmp.ne.s32.totalorder %s178, %s180
      %p187 = scmp.eq.s32.totalorder %s23, 1
      %p188 = por %p186, %p187
      %p189 = scmp.ne.s32.totalorder %s180, %s181
      %p190 = scmp.eq.s32.totalorder %s23, 0
      %p191 = por %p189, %p190
      %p192 = scmp.ne.s32.totalorder %s180, %s181
      %p193 = scmp.eq.s32.totalorder %s24, 1
      %p194 = por %p192, %p193
      %p196 = scmp.ne.s32.totalorder %s181, %s195
      %p197 = scmp.eq.s32.totalorder %s24, 0
      %p198 = por %p196, %p197
      %s200 = sadd.s32 %s199, 1
      %p203 = scmp.eq.s32.totalorder %s18, 1
      %p204 = scmp.ne.s32.totalorder %s199, %s201
      %p205 = scmp.eq.s32.totalorder %s18, 0
      %p206 = por %p204, %p205
      %p207 = scmp.ne.s32.totalorder %s199, %s201
      %p208 = scmp.eq.s32.totalorder %s23, 1
      %p209 = por %p207, %p208
      %p210 = scmp.ne.s32.totalorder %s201, %s202
      %p211 = scmp.eq.s32.totalorder %s23, 0
      %p212 = por %p210, %p211
      %p213 = scmp.ne.s32.totalorder %s201, %s202
      %p214 = scmp.eq.s32.totalorder %s24, 1
      %p215 = por %p213, %p214
      %p217 = scmp.ne.s32.totalorder %s202, %s216
      %p218 = scmp.eq.s32.totalorder %s24, 0
      %p219 = por %p217, %p218
      %s220 = ssub.s32 %s18, %s25
      %p221 = scmp.eq.s32.totalorder %s220, 0
      %s223 = sadd.s32 %s222, 1
      %s224 = scalar_select %p221, %s222, %s223
      %p227 = pneg %p221
      %p228 = scmp.eq.s32.totalorder %s18, 1
      %p229 = por %p227, %p228
      %p230 = scmp.ne.s32.totalorder %s222, %s225
      %p231 = scmp.eq.s32.totalorder %s18, 0
      %p232 = por %p230, %p231
      %p233 = scmp.ne.s32.totalorder %s222, %s225
      %p234 = scmp.eq.s32.totalorder %s23, 1
      %p235 = por %p233, %p234
      %p236 = scmp.ne.s32.totalorder %s225, %s226
      %p237 = scmp.eq.s32.totalorder %s23, 0
      %p238 = por %p236, %p237
      %p239 = scmp.ne.s32.totalorder %s225, %s226
      %p240 = scmp.eq.s32.totalorder %s24, 1
      %p241 = por %p239, %p240
      %p243 = scmp.ne.s32.totalorder %s226, %s242
      %p244 = scmp.eq.s32.totalorder %s24, 0
      %p245 = por %p243, %p244
      %p246 = scmp.le.s32.totalorder 1, %s18
      %p247 = scmp.lt.s32.totalorder %s18, 3
      %p248 = pnand %p246, %p247
      %p249 = pneg %p248
      // Predicated region
      $region9: #{rcab_forward.1} parent=5 // pred_check
        _
      $region10: #{rcab_forward.1} parent=5 // pred_check_branch
        %251 = sbr.rel (%p248) target = $region12
      $region11: #{rcab_forward.1} parent=5 // pred_region
        %s252 = ssub.s32 %s18, 1
        // Predicated region
        $region13: #{rcab_forward.1} parent=11 // pred_check
          %p253 = pneg %p65
        $region14: #{rcab_forward.1} parent=11 // pred_check_branch
          %255 = sbr.rel (%p253) target = $region16
        $region15: #{rcab_forward.1} parent=11 // pred_region
          _
        $region16: #{rcab_forward.1} parent=11 // pred_fallthru
          _
        // Predicated region
        $region17: #{rcab_forward.1} parent=11 // pred_check
          %p256 = pneg %p86
        $region18: #{rcab_forward.1} parent=11 // pred_check_branch
          %258 = sbr.rel (%p256) target = $region20
        $region19: #{rcab_forward.1} parent=11 // pred_region
          _
        $region20: #{rcab_forward.1} parent=11 // pred_fallthru
          _
        // Predicated region
        $region21: #{rcab_forward.1} parent=11 // pred_check
          %p259 = pneg %p107
        $region22: #{rcab_forward.1} parent=11 // pred_check_branch
          %261 = sbr.rel (%p259) target = $region24
        $region23: #{rcab_forward.1} parent=11 // pred_region
          _
        $region24: #{rcab_forward.1} parent=11 // pred_fallthru
          _
        // Predicated region
        $region25: #{rcab_forward.1} parent=11 // pred_check
          %p262 = pneg %p128
        $region26: #{rcab_forward.1} parent=11 // pred_check_branch
          %264 = sbr.rel (%p262) target = $region28
        $region27: #{rcab_forward.1} parent=11 // pred_region
          _
        $region28: #{rcab_forward.1} parent=11 // pred_fallthru
          _
        // Predicated region
        $region29: #{rcab_forward.1} parent=11 // pred_check
          %p265 = pneg %p149
        $region30: #{rcab_forward.1} parent=11 // pred_check_branch
          %267 = sbr.rel (%p265) target = $region32
        $region31: #{rcab_forward.1} parent=11 // pred_region
          _
        $region32: #{rcab_forward.1} parent=11 // pred_fallthru
          _
        // Predicated region
        $region33: #{rcab_forward.1} parent=11 // pred_check
          %p268 = pneg %p170
        $region34: #{rcab_forward.1} parent=11 // pred_check_branch
          %270 = sbr.rel (%p268) target = $region36
        $region35: #{rcab_forward.1} parent=11 // pred_region
          _
        $region36: #{rcab_forward.1} parent=11 // pred_fallthru
          _
        // Predicated region
        $region37: #{rcab_forward.1} parent=11 // pred_check
          %p271 = pneg %p191
        $region38: #{rcab_forward.1} parent=11 // pred_check_branch
          %273 = sbr.rel (%p271) target = $region40
        $region39: #{rcab_forward.1} parent=11 // pred_region
          _
        $region40: #{rcab_forward.1} parent=11 // pred_fallthru
          _
        // Predicated region
        $region41: #{rcab_forward.1} parent=11 // pred_check
          %p274 = pneg %p212
        $region42: #{rcab_forward.1} parent=11 // pred_check_branch
          %276 = sbr.rel (%p274) target = $region44
        $region43: #{rcab_forward.1} parent=11 // pred_region
          _
        $region44: #{rcab_forward.1} parent=11 // pred_fallthru
          _
      $region12: #{rcab_forward.1} parent=5 // pred_fallthru
        _
      %p277 = scmp.lt.s32.totalorder %s18, 2
      // Predicated region
      $region45: #{rcab_forward.1} parent=5 // pred_check
        %p278 = pneg %p277
      $region46: #{rcab_forward.1} parent=5 // pred_check_branch
        %280 = sbr.rel (%p278) target = $region48
      $region47: #{rcab_forward.1} parent=5 // pred_region
        // Predicated region
        $region49: #{rcab_forward.1} parent=47 // pred_check
          %p281 = pneg %p38
        $region50: #{rcab_forward.1} parent=47 // pred_check_branch
          %283 = sbr.rel (%p281) target = $region52
        $region51: #{rcab_forward.1} parent=47 // pred_region
          %p284 = scmp.lt.s32.totalorder %s18, 1
          %s285 = scalar_select %p284, %s18, 1
          %s286 = smul.addr %s285, 32
          %s287 = smul.addr %s286, 8
          %s288 = scalar_lea.vmem %s0, %s287
        $region52: #{rcab_forward.1} parent=47 // pred_fallthru
          _
      $region48: #{rcab_forward.1} parent=5 // pred_fallthru
        _
      %p289 = scmp.le.s32.totalorder 1, %s18
      %p290 = scmp.lt.s32.totalorder %s18, 3
      %p291 = pnand %p289, %p290
      %p292 = pneg %p291
      // Predicated region
      $region53: #{rcab_forward.1} parent=5 // pred_check
        _
      $region54: #{rcab_forward.1} parent=5 // pred_check_branch
        %294 = sbr.rel (%p291) target = $region56
      $region55: #{rcab_forward.1} parent=5 // pred_region
        %s295 = ssub.s32 %s18, 1
        %p296 = scmp.lt.s32.totalorder %s23, 1
        %s297 = scalar_select %p296, %s23, 1
        %s298 = smul.addr %s297, 32
        %s299 = smul.addr %s298, 8
        %s300 = scalar_lea.vmem %s0, %s299
        %p301 = pneg %p44
        %p302 = pneg %p41
        %p303 = pneg %p65
        %p304 = pneg %p62
        %p305 = pneg %p86
        %p306 = pneg %p83
        %p307 = pneg %p107
        %p308 = pneg %p104
        %p309 = pneg %p128
        %p310 = pneg %p125
        %p311 = pneg %p149
        %p312 = pneg %p146
        %p313 = pneg %p170
        %p314 = pneg %p167
        %p315 = pneg %p191
        %p316 = pneg %p188
        %p317 = pneg %p212
        %p318 = pneg %p209
        %p319 = pneg %p238
        %p320 = pneg %p235
        %s321 = sand.u32 %s225, 1
        %s322 = scalar_lea.sflag [#allocation5], %s321
        %s323 = sand.u32 %s225, 1
        %s324 = smul.addr %s323, 256
        %s325 = scalar_lea.vmem [#allocation4], %s324
        %p326 = scmp.lt.s32.totalorder %s23, 1
        %s327 = scalar_select %p326, %s23, 1
        %s328 = smul.addr %s327, 32
        %s329 = smul.addr %s328, 8
        %s330 = scalar_lea.vmem %s0, %s329
        %vm331 = vcmask 261120
        %332 = vst.msk [vmem:[#allocation2] sm:$0xff] %vm331, 0.0
        %333 = vst.msk [vmem:[#allocation2 + $0x8] sm:$0xff] %vm331, 0.0
        %334 = vst.msk [vmem:[#allocation2 + $0x10] sm:$0xff] %vm331, 0.0
        %335 = vst.msk [vmem:[#allocation2 + $0x18] sm:$0xff] %vm331, 0.0
        %s336 = scalar_lea.vmem [#allocation2], 544
        %337 = vst.msk [vmem:[%s336] sm:$0xff] %vm331, 0.0
        %338 = vst.msk [vmem:[%s336 + $0x8] sm:$0xff] %vm331, 0.0
        %339 = vst.msk [vmem:[%s336 + $0x10] sm:$0xff] %vm331, 0.0
        %340 = vst.msk [vmem:[%s336 + $0x18] sm:$0xff] %vm331, 0.0
        %s341 = scalar_lea.vmem [#allocation2], 32
        %342 = vst.msk [vmem:[%s341] sm:$0xff] %vm331, 0.0
        %343 = vst.msk [vmem:[%s341 + $0x20] sm:$0xff] %vm331, 0.0
        %344 = vst.msk [vmem:[%s341 + $0x40] sm:$0xff] %vm331, 0.0
        %345 = vst.msk [vmem:[%s341 + $0x60] sm:$0xff] %vm331, 0.0
        %346 = vst.msk [vmem:[%s341 + $0x80] sm:$0xff] %vm331, 0.0
        %347 = vst.msk [vmem:[%s341 + $0xa0] sm:$0xff] %vm331, 0.0
        %348 = vst.msk [vmem:[%s341 + $0xc0] sm:$0xff] %vm331, 0.0
        %349 = vst.msk [vmem:[%s341 + $0xe0] sm:$0xff] %vm331, 0.0
        %350 = vst.msk [vmem:[%s341 + $0x100] sm:$0xff] %vm331, 0.0
        %351 = vst.msk [vmem:[%s341 + $0x120] sm:$0xff] %vm331, 0.0
        %352 = vst.msk [vmem:[%s341 + $0x140] sm:$0xff] %vm331, 0.0
        %353 = vst.msk [vmem:[%s341 + $0x160] sm:$0xff] %vm331, 0.0
        %354 = vst.msk [vmem:[%s341 + $0x180] sm:$0xff] %vm331, 0.0
        %355 = vst.msk [vmem:[%s341 + $0x1a0] sm:$0xff] %vm331, 0.0
        %356 = vst.msk [vmem:[%s341 + $0x1c0] sm:$0xff] %vm331, 0.0
        %357 = vst.msk [vmem:[%s341 + $0x1e0] sm:$0xff] %vm331, 0.0
        %358 = vst.msk [vmem:[%s341 + $0x18] sm:$0xff] %vm331, 0.0
        %359 = vst.msk [vmem:[%s341 + $0x38] sm:$0xff] %vm331, 0.0
        %360 = vst.msk [vmem:[%s341 + $0x58] sm:$0xff] %vm331, 0.0
        %361 = vst.msk [vmem:[%s341 + $0x78] sm:$0xff] %vm331, 0.0
        %362 = vst.msk [vmem:[%s341 + $0x98] sm:$0xff] %vm331, 0.0
        %363 = vst.msk [vmem:[%s341 + $0xb8] sm:$0xff] %vm331, 0.0
        %364 = vst.msk [vmem:[%s341 + $0xd8] sm:$0xff] %vm331, 0.0
        %365 = vst.msk [vmem:[%s341 + $0xf8] sm:$0xff] %vm331, 0.0
        %366 = vst.msk [vmem:[%s341 + $0x118] sm:$0xff] %vm331, 0.0
        %367 = vst.msk [vmem:[%s341 + $0x138] sm:$0xff] %vm331, 0.0
        %368 = vst.msk [vmem:[%s341 + $0x158] sm:$0xff] %vm331, 0.0
        %369 = vst.msk [vmem:[%s341 + $0x178] sm:$0xff] %vm331, 0.0
        %370 = vst.msk [vmem:[%s341 + $0x198] sm:$0xff] %vm331, 0.0
        %371 = vst.msk [vmem:[%s341 + $0x1b8] sm:$0xff] %vm331, 0.0
        %372 = vst.msk [vmem:[%s341 + $0x1d8] sm:$0xff] %vm331, 0.0
        %373 = vst.msk [vmem:[%s341 + $0x1f8] sm:$0xff] %vm331, 0.0
        %v374 = vld [vmem:[%s330] sm:$0xff]
        %v375 = vld [vmem:[%s330 + $0x8] sm:$0xff]
        %v376 = vld [vmem:[%s330 + $0x10] sm:$0xff]
        %v377 = vld [vmem:[%s330 + $0x18] sm:$0xff]
        %v378 = vld [vmem:[%s330 + $0x20] sm:$0xff]
        %v379 = vld [vmem:[%s330 + $0x28] sm:$0xff]
        %v380 = vld [vmem:[%s330 + $0x30] sm:$0xff]
        %v381 = vld [vmem:[%s330 + $0x38] sm:$0xff]
        %v382 = vld [vmem:[%s330 + $0x40] sm:$0xff]
        %v383 = vld [vmem:[%s330 + $0x48] sm:$0xff]
        %v384 = vld [vmem:[%s330 + $0x50] sm:$0xff]
        %v385 = vld [vmem:[%s330 + $0x58] sm:$0xff]
        %v386 = vld [vmem:[%s330 + $0x60] sm:$0xff]
        %v387 = vld [vmem:[%s330 + $0x68] sm:$0xff]
        %v388 = vld [vmem:[%s330 + $0x70] sm:$0xff]
        %v389 = vld [vmem:[%s330 + $0x78] sm:$0xff]
        %v390 = vld [vmem:[%s330 + $0x80] sm:$0xff]
        %v391 = vld [vmem:[%s330 + $0x88] sm:$0xff]
        %v392 = vld [vmem:[%s330 + $0x90] sm:$0xff]
        %v393 = vld [vmem:[%s330 + $0x98] sm:$0xff]
        %v394 = vld [vmem:[%s330 + $0xa0] sm:$0xff]
        %v395 = vld [vmem:[%s330 + $0xa8] sm:$0xff]
        %v396 = vld [vmem:[%s330 + $0xb0] sm:$0xff]
        %v397 = vld [vmem:[%s330 + $0xb8] sm:$0xff]
        %v398 = vld [vmem:[%s330 + $0xc0] sm:$0xff]
        %v399 = vld [vmem:[%s330 + $0xc8] sm:$0xff]
        %v400 = vld [vmem:[%s330 + $0xd0] sm:$0xff]
        %v401 = vld [vmem:[%s330 + $0xd8] sm:$0xff]
        %v402 = vld [vmem:[%s330 + $0xe0] sm:$0xff]
        %v403 = vld [vmem:[%s330 + $0xe8] sm:$0xff]
        %v404 = vld [vmem:[%s330 + $0xf0] sm:$0xff]
        %v405 = vld [vmem:[%s330 + $0xf8] sm:$0xff]
        %406 = vst.msk [vmem:[%s341 + $0x8] sm:$0xff] %vm331, %v374
        %407 = vst.msk [vmem:[%s341 + $0x10] sm:$0xff] %vm331, %v375
        %408 = vst.msk [vmem:[%s341 + $0x28] sm:$0xff] %vm331, %v376
        %409 = vst.msk [vmem:[%s341 + $0x30] sm:$0xff] %vm331, %v377
        %410 = vst.msk [vmem:[%s341 + $0x48] sm:$0xff] %vm331, %v378
        %411 = vst.msk [vmem:[%s341 + $0x50] sm:$0xff] %vm331, %v379
        %412 = vst.msk [vmem:[%s341 + $0x68] sm:$0xff] %vm331, %v380
        %413 = vst.msk [vmem:[%s341 + $0x70] sm:$0xff] %vm331, %v381
        %414 = vst.msk [vmem:[%s341 + $0x88] sm:$0xff] %vm331, %v382
        %415 = vst.msk [vmem:[%s341 + $0x90] sm:$0xff] %vm331, %v383
        %416 = vst.msk [vmem:[%s341 + $0xa8] sm:$0xff] %vm331, %v384
        %417 = vst.msk [vmem:[%s341 + $0xb0] sm:$0xff] %vm331, %v385
        %418 = vst.msk [vmem:[%s341 + $0xc8] sm:$0xff] %vm331, %v386
        %419 = vst.msk [vmem:[%s341 + $0xd0] sm:$0xff] %vm331, %v387
        %420 = vst.msk [vmem:[%s341 + $0xe8] sm:$0xff] %vm331, %v388
        %421 = vst.msk [vmem:[%s341 + $0xf0] sm:$0xff] %vm331, %v389
        %422 = vst.msk [vmem:[%s341 + $0x108] sm:$0xff] %vm331, %v390
        %423 = vst.msk [vmem:[%s341 + $0x110] sm:$0xff] %vm331, %v391
        %424 = vst.msk [vmem:[%s341 + $0x128] sm:$0xff] %vm331, %v392
        %425 = vst.msk [vmem:[%s341 + $0x130] sm:$0xff] %vm331, %v393
        %426 = vst.msk [vmem:[%s341 + $0x148] sm:$0xff] %vm331, %v394
        %427 = vst.msk [vmem:[%s341 + $0x150] sm:$0xff] %vm331, %v395
        %428 = vst.msk [vmem:[%s341 + $0x168] sm:$0xff] %vm331, %v396
        %429 = vst.msk [vmem:[%s341 + $0x170] sm:$0xff] %vm331, %v397
        %430 = vst.msk [vmem:[%s341 + $0x188] sm:$0xff] %vm331, %v398
        %431 = vst.msk [vmem:[%s341 + $0x190] sm:$0xff] %vm331, %v399
        %432 = vst.msk [vmem:[%s341 + $0x1a8] sm:$0xff] %vm331, %v400
        %433 = vst.msk [vmem:[%s341 + $0x1b0] sm:$0xff] %vm331, %v401
        %434 = vst.msk [vmem:[%s341 + $0x1c8] sm:$0xff] %vm331, %v402
        %435 = vst.msk [vmem:[%s341 + $0x1d0] sm:$0xff] %vm331, %v403
        %436 = vst.msk [vmem:[%s341 + $0x1e8] sm:$0xff] %vm331, %v404
        %437 = vst.msk [vmem:[%s341 + $0x1f0] sm:$0xff] %vm331, %v405
        %v438 = vld [vmem:[#allocation2 + $0x7] sm:$0xff]
        %v439 = vld [vmem:[#allocation2 + $0xf] sm:$0xff]
        %v440 = vld [vmem:[#allocation2 + $0x27] sm:$0xff]
        %v441 = vld [vmem:[#allocation2 + $0x2f] sm:$0xff]
        %v442 = vld [vmem:[#allocation2 + $0x47] sm:$0xff]
        %v443 = vld [vmem:[#allocation2 + $0x4f] sm:$0xff]
        %v444 = vld [vmem:[#allocation2 + $0x67] sm:$0xff]
        %v445 = vld [vmem:[#allocation2 + $0x6f] sm:$0xff]
        %v446 = vld [vmem:[#allocation2 + $0x87] sm:$0xff]
        %v447 = vld [vmem:[#allocation2 + $0x8f] sm:$0xff]
        %v448 = vld [vmem:[#allocation2 + $0xa7] sm:$0xff]
        %v449 = vld [vmem:[#allocation2 + $0xaf] sm:$0xff]
        %v450 = vld [vmem:[#allocation2 + $0xc7] sm:$0xff]
        %v451 = vld [vmem:[#allocation2 + $0xcf] sm:$0xff]
        %v452 = vld [vmem:[#allocation2 + $0xe7] sm:$0xff]
        %v453 = vld [vmem:[#allocation2 + $0xef] sm:$0xff]
        %v454 = vld [vmem:[#allocation2 + $0x107] sm:$0xff]
        %v455 = vld [vmem:[#allocation2 + $0x10f] sm:$0xff]
        %v456 = vld [vmem:[#allocation2 + $0x127] sm:$0xff]
        %v457 = vld [vmem:[#allocation2 + $0x12f] sm:$0xff]
        %v458 = vld [vmem:[#allocation2 + $0x147] sm:$0xff]
        %v459 = vld [vmem:[#allocation2 + $0x14f] sm:$0xff]
        %v460 = vld [vmem:[#allocation2 + $0x167] sm:$0xff]
        %v461 = vld [vmem:[#allocation2 + $0x16f] sm:$0xff]
        %v462 = vld [vmem:[#allocation2 + $0x187] sm:$0xff]
        %v463 = vld [vmem:[#allocation2 + $0x18f] sm:$0xff]
        %v464 = vld [vmem:[#allocation2 + $0x1a7] sm:$0xff]
        %v465 = vld [vmem:[#allocation2 + $0x1af] sm:$0xff]
        %v466 = vld [vmem:[#allocation2 + $0x1c7] sm:$0xff]
        %v467 = vld [vmem:[#allocation2 + $0x1cf] sm:$0xff]
        %v468 = vld [vmem:[#allocation2 + $0x1e7] sm:$0xff]
        %v469 = vld [vmem:[#allocation2 + $0x1ef] sm:$0xff]
        %v470 = vld [vmem:[#allocation2 + $0x8] sm:$0xff]
        %v471 = vld [vmem:[#allocation2 + $0x10] sm:$0xff]
        %v472 = vld [vmem:[#allocation2 + $0x28] sm:$0xff]
        %v473 = vld [vmem:[#allocation2 + $0x30] sm:$0xff]
        %v474 = vld [vmem:[#allocation2 + $0x48] sm:$0xff]
        %v475 = vld [vmem:[#allocation2 + $0x50] sm:$0xff]
        %v476 = vld [vmem:[#allocation2 + $0x68] sm:$0xff]
        %v477 = vld [vmem:[#allocation2 + $0x70] sm:$0xff]
        %v478 = vld [vmem:[#allocation2 + $0x88] sm:$0xff]
        %v479 = vld [vmem:[#allocation2 + $0x90] sm:$0xff]
        %v480 = vld [vmem:[#allocation2 + $0xa8] sm:$0xff]
        %v481 = vld [vmem:[#allocation2 + $0xb0] sm:$0xff]
        %v482 = vld [vmem:[#allocation2 + $0xc8] sm:$0xff]
        %v483 = vld [vmem:[#allocation2 + $0xd0] sm:$0xff]
        %v484 = vld [vmem:[#allocation2 + $0xe8] sm:$0xff]
        %v485 = vld [vmem:[#allocation2 + $0xf0] sm:$0xff]
        %v486 = vld [vmem:[#allocation2 + $0x108] sm:$0xff]
        %v487 = vld [vmem:[#allocation2 + $0x110] sm:$0xff]
        %v488 = vld [vmem:[#allocation2 + $0x128] sm:$0xff]
        %v489 = vld [vmem:[#allocation2 + $0x130] sm:$0xff]
        %v490 = vld [vmem:[#allocation2 + $0x148] sm:$0xff]
        %v491 = vld [vmem:[#allocation2 + $0x150] sm:$0xff]
        %v492 = vld [vmem:[#allocation2 + $0x168] sm:$0xff]
        %v493 = vld [vmem:[#allocation2 + $0x170] sm:$0xff]
        %v494 = vld [vmem:[#allocation2 + $0x188] sm:$0xff]
        %v495 = vld [vmem:[#allocation2 + $0x190] sm:$0xff]
        %v496 = vld [vmem:[#allocation2 + $0x1a8] sm:$0xff]
        %v497 = vld [vmem:[#allocation2 + $0x1b0] sm:$0xff]
        %v498 = vld [vmem:[#allocation2 + $0x1c8] sm:$0xff]
        %v499 = vld [vmem:[#allocation2 + $0x1d0] sm:$0xff]
        %v500 = vld [vmem:[#allocation2 + $0x1e8] sm:$0xff]
        %v501 = vld [vmem:[#allocation2 + $0x1f0] sm:$0xff]
        %v502 = vld [vmem:[#allocation2 + $0x9] sm:$0xff]
        %v503 = vld [vmem:[#allocation2 + $0x11] sm:$0xff]
        %v504 = vld [vmem:[#allocation2 + $0x29] sm:$0xff]
        %v505 = vld [vmem:[#allocation2 + $0x31] sm:$0xff]
        %v506 = vld [vmem:[#allocation2 + $0x49] sm:$0xff]
        %v507 = vld [vmem:[#allocation2 + $0x51] sm:$0xff]
        %v508 = vld [vmem:[#allocation2 + $0x69] sm:$0xff]
        %v509 = vld [vmem:[#allocation2 + $0x71] sm:$0xff]
        %v510 = vld [vmem:[#allocation2 + $0x89] sm:$0xff]
        %v511 = vld [vmem:[#allocation2 + $0x91] sm:$0xff]
        %v512 = vld [vmem:[#allocation2 + $0xa9] sm:$0xff]
        %v513 = vld [vmem:[#allocation2 + $0xb1] sm:$0xff]
        %v514 = vld [vmem:[#allocation2 + $0xc9] sm:$0xff]
        %v515 = vld [vmem:[#allocation2 + $0xd1] sm:$0xff]
        %v516 = vld [vmem:[#allocation2 + $0xe9] sm:$0xff]
        %v517 = vld [vmem:[#allocation2 + $0xf1] sm:$0xff]
        %v518 = vld [vmem:[#allocation2 + $0x109] sm:$0xff]
        %v519 = vld [vmem:[#allocation2 + $0x111] sm:$0xff]
        %v520 = vld [vmem:[#allocation2 + $0x129] sm:$0xff]
        %v521 = vld [vmem:[#allocation2 + $0x131] sm:$0xff]
        %v522 = vld [vmem:[#allocation2 + $0x149] sm:$0xff]
        %v523 = vld [vmem:[#allocation2 + $0x151] sm:$0xff]
        %v524 = vld [vmem:[#allocation2 + $0x169] sm:$0xff]
        %v525 = vld [vmem:[#allocation2 + $0x171] sm:$0xff]
        %v526 = vld [vmem:[#allocation2 + $0x189] sm:$0xff]
        %v527 = vld [vmem:[#allocation2 + $0x191] sm:$0xff]
        %v528 = vld [vmem:[#allocation2 + $0x1a9] sm:$0xff]
        %v529 = vld [vmem:[#allocation2 + $0x1b1] sm:$0xff]
        %v530 = vld [vmem:[#allocation2 + $0x1c9] sm:$0xff]
        %v531 = vld [vmem:[#allocation2 + $0x1d1] sm:$0xff]
        %v532 = vld [vmem:[#allocation2 + $0x1e9] sm:$0xff]
        %v533 = vld [vmem:[#allocation2 + $0x1f1] sm:$0xff]
        %v534 = vld [vmem:[%s341 + $0x7] sm:$0xff]
        %v535 = vld [vmem:[%s341 + $0xf] sm:$0xff]
        %v536 = vld [vmem:[%s341 + $0x27] sm:$0xff]
        %v537 = vld [vmem:[%s341 + $0x2f] sm:$0xff]
        %v538 = vld [vmem:[%s341 + $0x47] sm:$0xff]
        %v539 = vld [vmem:[%s341 + $0x4f] sm:$0xff]
        %v540 = vld [vmem:[%s341 + $0x67] sm:$0xff]
        %v541 = vld [vmem:[%s341 + $0x6f] sm:$0xff]
        %v542 = vld [vmem:[%s341 + $0x87] sm:$0xff]
        %v543 = vld [vmem:[%s341 + $0x8f] sm:$0xff]
        %v544 = vld [vmem:[%s341 + $0xa7] sm:$0xff]
        %v545 = vld [vmem:[%s341 + $0xaf] sm:$0xff]
        %v546 = vld [vmem:[%s341 + $0xc7] sm:$0xff]
        %v547 = vld [vmem:[%s341 + $0xcf] sm:$0xff]
        %v548 = vld [vmem:[%s341 + $0xe7] sm:$0xff]
        %v549 = vld [vmem:[%s341 + $0xef] sm:$0xff]
        %v550 = vld [vmem:[%s341 + $0x107] sm:$0xff]
        %v551 = vld [vmem:[%s341 + $0x10f] sm:$0xff]
        %v552 = vld [vmem:[%s341 + $0x127] sm:$0xff]
        %v553 = vld [vmem:[%s341 + $0x12f] sm:$0xff]
        %v554 = vld [vmem:[%s341 + $0x147] sm:$0xff]
        %v555 = vld [vmem:[%s341 + $0x14f] sm:$0xff]
        %v556 = vld [vmem:[%s341 + $0x167] sm:$0xff]
        %v557 = vld [vmem:[%s341 + $0x16f] sm:$0xff]
        %v558 = vld [vmem:[%s341 + $0x187] sm:$0xff]
        %v559 = vld [vmem:[%s341 + $0x18f] sm:$0xff]
        %v560 = vld [vmem:[%s341 + $0x1a7] sm:$0xff]
        %v561 = vld [vmem:[%s341 + $0x1af] sm:$0xff]
        %v562 = vld [vmem:[%s341 + $0x1c7] sm:$0xff]
        %v563 = vld [vmem:[%s341 + $0x1cf] sm:$0xff]
        %v564 = vld [vmem:[%s341 + $0x1e7] sm:$0xff]
        %v565 = vld [vmem:[%s341 + $0x1ef] sm:$0xff]
        %598 = vrot.lane.b32.xlu0 %v470, 32
        %v599 = vpop.permute.xlu0 %598
        %600 = vrot.lane.b32.xlu0 %v471, 32
        %v601 = vpop.permute.xlu0 %600
        %602 = vrot.lane.b32.xlu0 %v472, 32
        %v603 = vpop.permute.xlu0 %602
        %604 = vrot.lane.b32.xlu0 %v473, 32
        %v605 = vpop.permute.xlu0 %604
        %606 = vrot.lane.b32.xlu0 %v474, 32
        %v607 = vpop.permute.xlu0 %606
        %608 = vrot.lane.b32.xlu0 %v475, 32
        %v609 = vpop.permute.xlu0 %608
        %610 = vrot.lane.b32.xlu0 %v476, 32
        %v611 = vpop.permute.xlu0 %610
        %612 = vrot.lane.b32.xlu0 %v477, 32
        %v613 = vpop.permute.xlu0 %612
        %614 = vrot.lane.b32.xlu0 %v478, 32
        %v615 = vpop.permute.xlu0 %614
        %616 = vrot.lane.b32.xlu0 %v479, 32
        %v617 = vpop.permute.xlu0 %616
        %618 = vrot.lane.b32.xlu0 %v480, 32
        %v619 = vpop.permute.xlu0 %618
        %620 = vrot.lane.b32.xlu0 %v481, 32
        %v621 = vpop.permute.xlu0 %620
        %622 = vrot.lane.b32.xlu0 %v482, 32
        %v623 = vpop.permute.xlu0 %622
        %624 = vrot.lane.b32.xlu0 %v483, 32
        %v625 = vpop.permute.xlu0 %624
        %626 = vrot.lane.b32.xlu0 %v484, 32
        %v627 = vpop.permute.xlu0 %626
        %628 = vrot.lane.b32.xlu0 %v485, 32
        %v629 = vpop.permute.xlu0 %628
        %630 = vrot.lane.b32.xlu0 %v486, 32
        %v631 = vpop.permute.xlu0 %630
        %632 = vrot.lane.b32.xlu0 %v487, 32
        %v633 = vpop.permute.xlu0 %632
        %634 = vrot.lane.b32.xlu0 %v488, 32
        %v635 = vpop.permute.xlu0 %634
        %636 = vrot.lane.b32.xlu0 %v489, 32
        %v637 = vpop.permute.xlu0 %636
        %638 = vrot.lane.b32.xlu0 %v490, 32
        %v639 = vpop.permute.xlu0 %638
        %640 = vrot.lane.b32.xlu0 %v491, 32
        %v641 = vpop.permute.xlu0 %640
        %642 = vrot.lane.b32.xlu0 %v492, 32
        %v643 = vpop.permute.xlu0 %642
        %644 = vrot.lane.b32.xlu0 %v493, 32
        %v645 = vpop.permute.xlu0 %644
        %646 = vrot.lane.b32.xlu0 %v494, 32
        %v647 = vpop.permute.xlu0 %646
        %648 = vrot.lane.b32.xlu0 %v495, 32
        %v649 = vpop.permute.xlu0 %648
        %650 = vrot.lane.b32.xlu0 %v496, 32
        %v651 = vpop.permute.xlu0 %650
        %652 = vrot.lane.b32.xlu0 %v497, 32
        %v653 = vpop.permute.xlu0 %652
        %654 = vrot.lane.b32.xlu0 %v498, 32
        %v655 = vpop.permute.xlu0 %654
        %656 = vrot.lane.b32.xlu0 %v499, 32
        %v657 = vpop.permute.xlu0 %656
        %658 = vrot.lane.b32.xlu0 %v500, 32
        %v659 = vpop.permute.xlu0 %658
        %660 = vrot.lane.b32.xlu0 %v501, 32
        %v661 = vpop.permute.xlu0 %660
        %726 = vrot.lane.b32.xlu0 %v502, 64
        %v727 = vpop.permute.xlu0 %726
        %728 = vrot.lane.b32.xlu0 %v503, 64
        %v729 = vpop.permute.xlu0 %728
        %730 = vrot.lane.b32.xlu0 %v504, 64
        %v731 = vpop.permute.xlu0 %730
        %732 = vrot.lane.b32.xlu0 %v505, 64
        %v733 = vpop.permute.xlu0 %732
        %734 = vrot.lane.b32.xlu0 %v506, 64
        %v735 = vpop.permute.xlu0 %734
        %736 = vrot.lane.b32.xlu0 %v507, 64
        %v737 = vpop.permute.xlu0 %736
        %738 = vrot.lane.b32.xlu0 %v508, 64
        %v739 = vpop.permute.xlu0 %738
        %740 = vrot.lane.b32.xlu0 %v509, 64
        %v741 = vpop.permute.xlu0 %740
        %742 = vrot.lane.b32.xlu0 %v510, 64
        %v743 = vpop.permute.xlu0 %742
        %744 = vrot.lane.b32.xlu0 %v511, 64
        %v745 = vpop.permute.xlu0 %744
        %746 = vrot.lane.b32.xlu0 %v512, 64
        %v747 = vpop.permute.xlu0 %746
        %748 = vrot.lane.b32.xlu0 %v513, 64
        %v749 = vpop.permute.xlu0 %748
        %750 = vrot.lane.b32.xlu0 %v514, 64
        %v751 = vpop.permute.xlu0 %750
        %752 = vrot.lane.b32.xlu0 %v515, 64
        %v753 = vpop.permute.xlu0 %752
        %754 = vrot.lane.b32.xlu0 %v516, 64
        %v755 = vpop.permute.xlu0 %754
        %756 = vrot.lane.b32.xlu0 %v517, 64
        %v757 = vpop.permute.xlu0 %756
        %758 = vrot.lane.b32.xlu0 %v518, 64
        %v759 = vpop.permute.xlu0 %758
        %760 = vrot.lane.b32.xlu0 %v519, 64
        %v761 = vpop.permute.xlu0 %760
        %762 = vrot.lane.b32.xlu0 %v520, 64
        %v763 = vpop.permute.xlu0 %762
        %764 = vrot.lane.b32.xlu0 %v521, 64
        %v765 = vpop.permute.xlu0 %764
        %766 = vrot.lane.b32.xlu0 %v522, 64
        %v767 = vpop.permute.xlu0 %766
        %768 = vrot.lane.b32.xlu0 %v523, 64
        %v769 = vpop.permute.xlu0 %768
        %770 = vrot.lane.b32.xlu0 %v524, 64
        %v771 = vpop.permute.xlu0 %770
        %772 = vrot.lane.b32.xlu0 %v525, 64
        %v773 = vpop.permute.xlu0 %772
        %774 = vrot.lane.b32.xlu0 %v526, 64
        %v775 = vpop.permute.xlu0 %774
        %776 = vrot.lane.b32.xlu0 %v527, 64
        %v777 = vpop.permute.xlu0 %776
        %778 = vrot.lane.b32.xlu0 %v528, 64
        %v779 = vpop.permute.xlu0 %778
        %780 = vrot.lane.b32.xlu0 %v529, 64
        %v781 = vpop.permute.xlu0 %780
        %782 = vrot.lane.b32.xlu0 %v530, 64
        %v783 = vpop.permute.xlu0 %782
        %784 = vrot.lane.b32.xlu0 %v531, 64
        %v785 = vpop.permute.xlu0 %784
        %786 = vrot.lane.b32.xlu0 %v532, 64
        %v787 = vpop.permute.xlu0 %786
        %788 = vrot.lane.b32.xlu0 %v533, 64
        %v789 = vpop.permute.xlu0 %788
        %854 = vrot.lane.b32.xlu0 %v534, 96
        %v855 = vpop.permute.xlu0 %854
        %856 = vrot.lane.b32.xlu0 %v535, 96
        %v857 = vpop.permute.xlu0 %856
        %858 = vrot.lane.b32.xlu0 %v536, 96
        %v859 = vpop.permute.xlu0 %858
        %860 = vrot.lane.b32.xlu0 %v537, 96
        %v861 = vpop.permute.xlu0 %860
        %862 = vrot.lane.b32.xlu0 %v538, 96
        %v863 = vpop.permute.xlu0 %862
        %864 = vrot.lane.b32.xlu0 %v539, 96
        %v865 = vpop.permute.xlu0 %864
        %866 = vrot.lane.b32.xlu0 %v540, 96
        %v867 = vpop.permute.xlu0 %866
        %868 = vrot.lane.b32.xlu0 %v541, 96
        %v869 = vpop.permute.xlu0 %868
        %870 = vrot.lane.b32.xlu0 %v542, 96
        %v871 = vpop.permute.xlu0 %870
        %872 = vrot.lane.b32.xlu0 %v543, 96
        %v873 = vpop.permute.xlu0 %872
        %874 = vrot.lane.b32.xlu0 %v544, 96
        %v875 = vpop.permute.xlu0 %874
        %876 = vrot.lane.b32.xlu0 %v545, 96
        %v877 = vpop.permute.xlu0 %876
        %878 = vrot.lane.b32.xlu0 %v546, 96
        %v879 = vpop.permute.xlu0 %878
        %880 = vrot.lane.b32.xlu0 %v547, 96
        %v881 = vpop.permute.xlu0 %880
        %882 = vrot.lane.b32.xlu0 %v548, 96
        %v883 = vpop.permute.xlu0 %882
        %884 = vrot.lane.b32.xlu0 %v549, 96
        %v885 = vpop.permute.xlu0 %884
        %886 = vrot.lane.b32.xlu0 %v550, 96
        %v887 = vpop.permute.xlu0 %886
        %888 = vrot.lane.b32.xlu0 %v551, 96
        %v889 = vpop.permute.xlu0 %888
        %890 = vrot.lane.b32.xlu0 %v552, 96
        %v891 = vpop.permute.xlu0 %890
        %892 = vrot.lane.b32.xlu0 %v553, 96
        %v893 = vpop.permute.xlu0 %892
        %894 = vrot.lane.b32.xlu0 %v554, 96
        %v895 = vpop.permute.xlu0 %894
        %896 = vrot.lane.b32.xlu0 %v555, 96
        %v897 = vpop.permute.xlu0 %896
        %898 = vrot.lane.b32.xlu0 %v556, 96
        %v899 = vpop.permute.xlu0 %898
        %900 = vrot.lane.b32.xlu0 %v557, 96
        %v901 = vpop.permute.xlu0 %900
        %902 = vrot.lane.b32.xlu0 %v558, 96
        %v903 = vpop.permute.xlu0 %902
        %904 = vrot.lane.b32.xlu0 %v559, 96
        %v905 = vpop.permute.xlu0 %904
        %906 = vrot.lane.b32.xlu0 %v560, 96
        %v907 = vpop.permute.xlu0 %906
        %908 = vrot.lane.b32.xlu0 %v561, 96
        %v909 = vpop.permute.xlu0 %908
        %910 = vrot.lane.b32.xlu0 %v562, 96
        %v911 = vpop.permute.xlu0 %910
        %912 = vrot.lane.b32.xlu0 %v563, 96
        %v913 = vpop.permute.xlu0 %912
        %914 = vrot.lane.b32.xlu0 %v564, 96
        %v915 = vpop.permute.xlu0 %914
        %916 = vrot.lane.b32.xlu0 %v565, 96
        %v917 = vpop.permute.xlu0 %916
        %v950 = vsel %vm331, %v438, %v599
        %v951 = vsel %vm331, %v439, %v601
        %v952 = vsel %vm331, %v440, %v603
        %v953 = vsel %vm331, %v441, %v605
        %v954 = vsel %vm331, %v442, %v607
        %v955 = vsel %vm331, %v443, %v609
        %v956 = vsel %vm331, %v444, %v611
        %v957 = vsel %vm331, %v445, %v613
        %v958 = vsel %vm331, %v446, %v615
        %v959 = vsel %vm331, %v447, %v617
        %v960 = vsel %vm331, %v448, %v619
        %v961 = vsel %vm331, %v449, %v621
        %v962 = vsel %vm331, %v450, %v623
        %v963 = vsel %vm331, %v451, %v625
        %v964 = vsel %vm331, %v452, %v627
        %v965 = vsel %vm331, %v453, %v629
        %v966 = vsel %vm331, %v454, %v631
        %v967 = vsel %vm331, %v455, %v633
        %v968 = vsel %vm331, %v456, %v635
        %v969 = vsel %vm331, %v457, %v637
        %v970 = vsel %vm331, %v458, %v639
        %v971 = vsel %vm331, %v459, %v641
        %v972 = vsel %vm331, %v460, %v643
        %v973 = vsel %vm331, %v461, %v645
        %v974 = vsel %vm331, %v462, %v647
        %v975 = vsel %vm331, %v463, %v649
        %v976 = vsel %vm331, %v464, %v651
        %v977 = vsel %vm331, %v465, %v653
        %v978 = vsel %vm331, %v466, %v655
        %v979 = vsel %vm331, %v467, %v657
        %v980 = vsel %vm331, %v468, %v659
        %v981 = vsel %vm331, %v469, %v661
        %vm982 = vcmask 523264
        %v983 = vsel %vm982, %v950, %v727
        %v984 = vsel %vm982, %v951, %v729
        %v985 = vsel %vm982, %v952, %v731
        %v986 = vsel %vm982, %v953, %v733
        %v987 = vsel %vm982, %v954, %v735
        %v988 = vsel %vm982, %v955, %v737
        %v989 = vsel %vm982, %v956, %v739
        %v990 = vsel %vm982, %v957, %v741
        %v991 = vsel %vm982, %v958, %v743
        %v992 = vsel %vm982, %v959, %v745
        %v993 = vsel %vm982, %v960, %v747
        %v994 = vsel %vm982, %v961, %v749
        %v995 = vsel %vm982, %v962, %v751
        %v996 = vsel %vm982, %v963, %v753
        %v997 = vsel %vm982, %v964, %v755
        %v998 = vsel %vm982, %v965, %v757
        %v999 = vsel %vm982, %v966, %v759
        %v1000 = vsel %vm982, %v967, %v761
        %v1001 = vsel %vm982, %v968, %v763
        %v1002 = vsel %vm982, %v969, %v765
        %v1003 = vsel %vm982, %v970, %v767
        %v1004 = vsel %vm982, %v971, %v769
        %v1005 = vsel %vm982, %v972, %v771
        %v1006 = vsel %vm982, %v973, %v773
        %v1007 = vsel %vm982, %v974, %v775
        %v1008 = vsel %vm982, %v975, %v777
        %v1009 = vsel %vm982, %v976, %v779
        %v1010 = vsel %vm982, %v977, %v781
        %v1011 = vsel %vm982, %v978, %v783
        %v1012 = vsel %vm982, %v979, %v785
        %v1013 = vsel %vm982, %v980, %v787
        %v1014 = vsel %vm982, %v981, %v789
        %vm1015 = vcmask 785408
        %v1016 = vsel %vm1015, %v983, %v855
        %v1017 = vsel %vm1015, %v984, %v857
        %v1018 = vsel %vm1015, %v985, %v859
        %v1019 = vsel %vm1015, %v986, %v861
        %v1020 = vsel %vm1015, %v987, %v863
        %v1021 = vsel %vm1015, %v988, %v865
        %v1022 = vsel %vm1015, %v989, %v867
        %v1023 = vsel %vm1015, %v990, %v869
        %v1024 = vsel %vm1015, %v991, %v871
        %v1025 = vsel %vm1015, %v992, %v873
        %v1026 = vsel %vm1015, %v993, %v875
        %v1027 = vsel %vm1015, %v994, %v877
        %v1028 = vsel %vm1015, %v995, %v879
        %v1029 = vsel %vm1015, %v996, %v881
        %v1030 = vsel %vm1015, %v997, %v883
        %v1031 = vsel %vm1015, %v998, %v885
        %v1032 = vsel %vm1015, %v999, %v887
        %v1033 = vsel %vm1015, %v1000, %v889
        %v1034 = vsel %vm1015, %v1001, %v891
        %v1035 = vsel %vm1015, %v1002, %v893
        %v1036 = vsel %vm1015, %v1003, %v895
        %v1037 = vsel %vm1015, %v1004, %v897
        %v1038 = vsel %vm1015, %v1005, %v899
        %v1039 = vsel %vm1015, %v1006, %v901
        %v1040 = vsel %vm1015, %v1007, %v903
        %v1041 = vsel %vm1015, %v1008, %v905
        %v1042 = vsel %vm1015, %v1009, %v907
        %v1043 = vsel %vm1015, %v1010, %v909
        %v1044 = vsel %vm1015, %v1011, %v911
        %v1045 = vsel %vm1015, %v1012, %v913
        %v1046 = vsel %vm1015, %v1013, %v915
        %v1047 = vsel %vm1015, %v1014, %v917
        %1048 = vst [vmem:[#allocation3] sm:$0xff] %v1016
        %1049 = vst [vmem:[#allocation3 + $0x18] sm:$0xff] %v1017
        %1050 = vst [vmem:[#allocation3 + $0x30] sm:$0xff] %v1018
        %1051 = vst [vmem:[#allocation3 + $0x48] sm:$0xff] %v1019
        %1052 = vst [vmem:[#allocation3 + $0x60] sm:$0xff] %v1020
        %1053 = vst [vmem:[#allocation3 + $0x78] sm:$0xff] %v1021
        %1054 = vst [vmem:[#allocation3 + $0x90] sm:$0xff] %v1022
        %1055 = vst [vmem:[#allocation3 + $0xa8] sm:$0xff] %v1023
        %1056 = vst [vmem:[#allocation3 + $0xc0] sm:$0xff] %v1024
        %1057 = vst [vmem:[#allocation3 + $0xd8] sm:$0xff] %v1025
        %1058 = vst [vmem:[#allocation3 + $0xf0] sm:$0xff] %v1026
        %1059 = vst [vmem:[#allocation3 + $0x108] sm:$0xff] %v1027
        %1060 = vst [vmem:[#allocation3 + $0x120] sm:$0xff] %v1028
        %1061 = vst [vmem:[#allocation3 + $0x138] sm:$0xff] %v1029
        %1062 = vst [vmem:[#allocation3 + $0x150] sm:$0xff] %v1030
        %1063 = vst [vmem:[#allocation3 + $0x168] sm:$0xff] %v1031
        %1064 = vst [vmem:[#allocation3 + $0x180] sm:$0xff] %v1032
        %1065 = vst [vmem:[#allocation3 + $0x198] sm:$0xff] %v1033
        %1066 = vst [vmem:[#allocation3 + $0x1b0] sm:$0xff] %v1034
        %1067 = vst [vmem:[#allocation3 + $0x1c8] sm:$0xff] %v1035
        %1068 = vst [vmem:[#allocation3 + $0x1e0] sm:$0xff] %v1036
        %1069 = vst [vmem:[#allocation3 + $0x1f8] sm:$0xff] %v1037
        %1070 = vst [vmem:[#allocation3 + $0x210] sm:$0xff] %v1038
        %1071 = vst [vmem:[#allocation3 + $0x228] sm:$0xff] %v1039
        %1072 = vst [vmem:[#allocation3 + $0x240] sm:$0xff] %v1040
        %1073 = vst [vmem:[#allocation3 + $0x258] sm:$0xff] %v1041
        %1074 = vst [vmem:[#allocation3 + $0x270] sm:$0xff] %v1042
        %1075 = vst [vmem:[#allocation3 + $0x288] sm:$0xff] %v1043
        %1076 = vst [vmem:[#allocation3 + $0x2a0] sm:$0xff] %v1044
        %1077 = vst [vmem:[#allocation3 + $0x2b8] sm:$0xff] %v1045
        %1078 = vst [vmem:[#allocation3 + $0x2d0] sm:$0xff] %v1046
        %1079 = vst [vmem:[#allocation3 + $0x2e8] sm:$0xff] %v1047
        %v1080 = vld [vmem:[%s341 + $0x8] sm:$0xff]
        %v1081 = vld [vmem:[%s341 + $0x10] sm:$0xff]
        %v1082 = vld [vmem:[%s341 + $0x28] sm:$0xff]
        %v1083 = vld [vmem:[%s341 + $0x30] sm:$0xff]
        %v1084 = vld [vmem:[%s341 + $0x48] sm:$0xff]
        %v1085 = vld [vmem:[%s341 + $0x50] sm:$0xff]
        %v1086 = vld [vmem:[%s341 + $0x68] sm:$0xff]
        %v1087 = vld [vmem:[%s341 + $0x70] sm:$0xff]
        %v1088 = vld [vmem:[%s341 + $0x88] sm:$0xff]
        %v1089 = vld [vmem:[%s341 + $0x90] sm:$0xff]
        %v1090 = vld [vmem:[%s341 + $0xa8] sm:$0xff]
        %v1091 = vld [vmem:[%s341 + $0xb0] sm:$0xff]
        %v1092 = vld [vmem:[%s341 + $0xc8] sm:$0xff]
        %v1093 = vld [vmem:[%s341 + $0xd0] sm:$0xff]
        %v1094 = vld [vmem:[%s341 + $0xe8] sm:$0xff]
        %v1095 = vld [vmem:[%s341 + $0xf0] sm:$0xff]
        %v1096 = vld [vmem:[%s341 + $0x108] sm:$0xff]
        %v1097 = vld [vmem:[%s341 + $0x110] sm:$0xff]
        %v1098 = vld [vmem:[%s341 + $0x128] sm:$0xff]
        %v1099 = vld [vmem:[%s341 + $0x130] sm:$0xff]
        %v1100 = vld [vmem:[%s341 + $0x148] sm:$0xff]
        %v1101 = vld [vmem:[%s341 + $0x150] sm:$0xff]
        %v1102 = vld [vmem:[%s341 + $0x168] sm:$0xff]
        %v1103 = vld [vmem:[%s341 + $0x170] sm:$0xff]
        %v1104 = vld [vmem:[%s341 + $0x188] sm:$0xff]
        %v1105 = vld [vmem:[%s341 + $0x190] sm:$0xff]
        %v1106 = vld [vmem:[%s341 + $0x1a8] sm:$0xff]
        %v1107 = vld [vmem:[%s341 + $0x1b0] sm:$0xff]
        %v1108 = vld [vmem:[%s341 + $0x1c8] sm:$0xff]
        %v1109 = vld [vmem:[%s341 + $0x1d0] sm:$0xff]
        %v1110 = vld [vmem:[%s341 + $0x1e8] sm:$0xff]
        %v1111 = vld [vmem:[%s341 + $0x1f0] sm:$0xff]
        %v1112 = vld [vmem:[%s341 + $0x9] sm:$0xff]
        %v1113 = vld [vmem:[%s341 + $0x11] sm:$0xff]
        %v1114 = vld [vmem:[%s341 + $0x29] sm:$0xff]
        %v1115 = vld [vmem:[%s341 + $0x31] sm:$0xff]
        %v1116 = vld [vmem:[%s341 + $0x49] sm:$0xff]
        %v1117 = vld [vmem:[%s341 + $0x51] sm:$0xff]
        %v1118 = vld [vmem:[%s341 + $0x69] sm:$0xff]
        %v1119 = vld [vmem:[%s341 + $0x71] sm:$0xff]
        %v1120 = vld [vmem:[%s341 + $0x89] sm:$0xff]
        %v1121 = vld [vmem:[%s341 + $0x91] sm:$0xff]
        %v1122 = vld [vmem:[%s341 + $0xa9] sm:$0xff]
        %v1123 = vld [vmem:[%s341 + $0xb1] sm:$0xff]
        %v1124 = vld [vmem:[%s341 + $0xc9] sm:$0xff]
        %v1125 = vld [vmem:[%s341 + $0xd1] sm:$0xff]
        %v1126 = vld [vmem:[%s341 + $0xe9] sm:$0xff]
        %v1127 = vld [vmem:[%s341 + $0xf1] sm:$0xff]
        %v1128 = vld [vmem:[%s341 + $0x109] sm:$0xff]
        %v1129 = vld [vmem:[%s341 + $0x111] sm:$0xff]
        %v1130 = vld [vmem:[%s341 + $0x129] sm:$0xff]
        %v1131 = vld [vmem:[%s341 + $0x131] sm:$0xff]
        %v1132 = vld [vmem:[%s341 + $0x149] sm:$0xff]
        %v1133 = vld [vmem:[%s341 + $0x151] sm:$0xff]
        %v1134 = vld [vmem:[%s341 + $0x169] sm:$0xff]
        %v1135 = vld [vmem:[%s341 + $0x171] sm:$0xff]
        %v1136 = vld [vmem:[%s341 + $0x189] sm:$0xff]
        %v1137 = vld [vmem:[%s341 + $0x191] sm:$0xff]
        %v1138 = vld [vmem:[%s341 + $0x1a9] sm:$0xff]
        %v1139 = vld [vmem:[%s341 + $0x1b1] sm:$0xff]
        %v1140 = vld [vmem:[%s341 + $0x1c9] sm:$0xff]
        %v1141 = vld [vmem:[%s341 + $0x1d1] sm:$0xff]
        %v1142 = vld [vmem:[%s341 + $0x1e9] sm:$0xff]
        %v1143 = vld [vmem:[%s341 + $0x1f1] sm:$0xff]
        %s1144 = scalar_lea.vmem [#allocation2], 64
        %v1145 = vld [vmem:[%s1144 + $0x7] sm:$0xff]
        %v1146 = vld [vmem:[%s1144 + $0xf] sm:$0xff]
        %v1147 = vld [vmem:[%s1144 + $0x27] sm:$0xff]
        %v1148 = vld [vmem:[%s1144 + $0x2f] sm:$0xff]
        %v1149 = vld [vmem:[%s1144 + $0x47] sm:$0xff]
        %v1150 = vld [vmem:[%s1144 + $0x4f] sm:$0xff]
        %v1151 = vld [vmem:[%s1144 + $0x67] sm:$0xff]
        %v1152 = vld [vmem:[%s1144 + $0x6f] sm:$0xff]
        %v1153 = vld [vmem:[%s1144 + $0x87] sm:$0xff]
        %v1154 = vld [vmem:[%s1144 + $0x8f] sm:$0xff]
        %v1155 = vld [vmem:[%s1144 + $0xa7] sm:$0xff]
        %v1156 = vld [vmem:[%s1144 + $0xaf] sm:$0xff]
        %v1157 = vld [vmem:[%s1144 + $0xc7] sm:$0xff]
        %v1158 = vld [vmem:[%s1144 + $0xcf] sm:$0xff]
        %v1159 = vld [vmem:[%s1144 + $0xe7] sm:$0xff]
        %v1160 = vld [vmem:[%s1144 + $0xef] sm:$0xff]
        %v1161 = vld [vmem:[%s1144 + $0x107] sm:$0xff]
        %v1162 = vld [vmem:[%s1144 + $0x10f] sm:$0xff]
        %v1163 = vld [vmem:[%s1144 + $0x127] sm:$0xff]
        %v1164 = vld [vmem:[%s1144 + $0x12f] sm:$0xff]
        %v1165 = vld [vmem:[%s1144 + $0x147] sm:$0xff]
        %v1166 = vld [vmem:[%s1144 + $0x14f] sm:$0xff]
        %v1167 = vld [vmem:[%s1144 + $0x167] sm:$0xff]
        %v1168 = vld [vmem:[%s1144 + $0x16f] sm:$0xff]
        %v1169 = vld [vmem:[%s1144 + $0x187] sm:$0xff]
        %v1170 = vld [vmem:[%s1144 + $0x18f] sm:$0xff]
        %v1171 = vld [vmem:[%s1144 + $0x1a7] sm:$0xff]
        %v1172 = vld [vmem:[%s1144 + $0x1af] sm:$0xff]
        %v1173 = vld [vmem:[%s1144 + $0x1c7] sm:$0xff]
        %v1174 = vld [vmem:[%s1144 + $0x1cf] sm:$0xff]
        %v1175 = vld [vmem:[%s1144 + $0x1e7] sm:$0xff]
        %v1176 = vld [vmem:[%s1144 + $0x1ef] sm:$0xff]
        %v1177 = vld [vmem:[%s1144 + $0x8] sm:$0xff]
        %v1178 = vld [vmem:[%s1144 + $0x10] sm:$0xff]
        %v1179 = vld [vmem:[%s1144 + $0x28] sm:$0xff]
        %v1180 = vld [vmem:[%s1144 + $0x30] sm:$0xff]
        %v1181 = vld [vmem:[%s1144 + $0x48] sm:$0xff]
        %v1182 = vld [vmem:[%s1144 + $0x50] sm:$0xff]
        %v1183 = vld [vmem:[%s1144 + $0x68] sm:$0xff]
        %v1184 = vld [vmem:[%s1144 + $0x70] sm:$0xff]
        %v1185 = vld [vmem:[%s1144 + $0x88] sm:$0xff]
        %v1186 = vld [vmem:[%s1144 + $0x90] sm:$0xff]
        %v1187 = vld [vmem:[%s1144 + $0xa8] sm:$0xff]
        %v1188 = vld [vmem:[%s1144 + $0xb0] sm:$0xff]
        %v1189 = vld [vmem:[%s1144 + $0xc8] sm:$0xff]
        %v1190 = vld [vmem:[%s1144 + $0xd0] sm:$0xff]
        %v1191 = vld [vmem:[%s1144 + $0xe8] sm:$0xff]
        %v1192 = vld [vmem:[%s1144 + $0xf0] sm:$0xff]
        %v1193 = vld [vmem:[%s1144 + $0x108] sm:$0xff]
        %v1194 = vld [vmem:[%s1144 + $0x110] sm:$0xff]
        %v1195 = vld [vmem:[%s1144 + $0x128] sm:$0xff]
        %v1196 = vld [vmem:[%s1144 + $0x130] sm:$0xff]
        %v1197 = vld [vmem:[%s1144 + $0x148] sm:$0xff]
        %v1198 = vld [vmem:[%s1144 + $0x150] sm:$0xff]
        %v1199 = vld [vmem:[%s1144 + $0x168] sm:$0xff]
        %v1200 = vld [vmem:[%s1144 + $0x170] sm:$0xff]
        %v1201 = vld [vmem:[%s1144 + $0x188] sm:$0xff]
        %v1202 = vld [vmem:[%s1144 + $0x190] sm:$0xff]
        %v1203 = vld [vmem:[%s1144 + $0x1a8] sm:$0xff]
        %v1204 = vld [vmem:[%s1144 + $0x1b0] sm:$0xff]
        %v1205 = vld [vmem:[%s1144 + $0x1c8] sm:$0xff]
        %v1206 = vld [vmem:[%s1144 + $0x1d0] sm:$0xff]
        %v1207 = vld [vmem:[%s1144 + $0x1e8] sm:$0xff]
        %v1208 = vld [vmem:[%s1144 + $0x1f0] sm:$0xff]
        %1241 = vrot.lane.b32.xlu0 %v1112, 32
        %v1242 = vpop.permute.xlu0 %1241
        %1243 = vrot.lane.b32.xlu0 %v1113, 32
        %v1244 = vpop.permute.xlu0 %1243
        %1245 = vrot.lane.b32.xlu0 %v1114, 32
        %v1246 = vpop.permute.xlu0 %1245
        %1247 = vrot.lane.b32.xlu0 %v1115, 32
        %v1248 = vpop.permute.xlu0 %1247
        %1249 = vrot.lane.b32.xlu0 %v1116, 32
        %v1250 = vpop.permute.xlu0 %1249
        %1251 = vrot.lane.b32.xlu0 %v1117, 32
        %v1252 = vpop.permute.xlu0 %1251
        %1253 = vrot.lane.b32.xlu0 %v1118, 32
        %v1254 = vpop.permute.xlu0 %1253
        %1255 = vrot.lane.b32.xlu0 %v1119, 32
        %v1256 = vpop.permute.xlu0 %1255
        %1257 = vrot.lane.b32.xlu0 %v1120, 32
        %v1258 = vpop.permute.xlu0 %1257
        %1259 = vrot.lane.b32.xlu0 %v1121, 32
        %v1260 = vpop.permute.xlu0 %1259
        %1261 = vrot.lane.b32.xlu0 %v1122, 32
        %v1262 = vpop.permute.xlu0 %1261
        %1263 = vrot.lane.b32.xlu0 %v1123, 32
        %v1264 = vpop.permute.xlu0 %1263
        %1265 = vrot.lane.b32.xlu0 %v1124, 32
        %v1266 = vpop.permute.xlu0 %1265
        %1267 = vrot.lane.b32.xlu0 %v1125, 32
        %v1268 = vpop.permute.xlu0 %1267
        %1269 = vrot.lane.b32.xlu0 %v1126, 32
        %v1270 = vpop.permute.xlu0 %1269
        %1271 = vrot.lane.b32.xlu0 %v1127, 32
        %v1272 = vpop.permute.xlu0 %1271
        %1273 = vrot.lane.b32.xlu0 %v1128, 32
        %v1274 = vpop.permute.xlu0 %1273
        %1275 = vrot.lane.b32.xlu0 %v1129, 32
        %v1276 = vpop.permute.xlu0 %1275
        %1277 = vrot.lane.b32.xlu0 %v1130, 32
        %v1278 = vpop.permute.xlu0 %1277
        %1279 = vrot.lane.b32.xlu0 %v1131, 32
        %v1280 = vpop.permute.xlu0 %1279
        %1281 = vrot.lane.b32.xlu0 %v1132, 32
        %v1282 = vpop.permute.xlu0 %1281
        %1283 = vrot.lane.b32.xlu0 %v1133, 32
        %v1284 = vpop.permute.xlu0 %1283
        %1285 = vrot.lane.b32.xlu0 %v1134, 32
        %v1286 = vpop.permute.xlu0 %1285
        %1287 = vrot.lane.b32.xlu0 %v1135, 32
        %v1288 = vpop.permute.xlu0 %1287
        %1289 = vrot.lane.b32.xlu0 %v1136, 32
        %v1290 = vpop.permute.xlu0 %1289
        %1291 = vrot.lane.b32.xlu0 %v1137, 32
        %v1292 = vpop.permute.xlu0 %1291
        %1293 = vrot.lane.b32.xlu0 %v1138, 32
        %v1294 = vpop.permute.xlu0 %1293
        %1295 = vrot.lane.b32.xlu0 %v1139, 32
        %v1296 = vpop.permute.xlu0 %1295
        %1297 = vrot.lane.b32.xlu0 %v1140, 32
        %v1298 = vpop.permute.xlu0 %1297
        %1299 = vrot.lane.b32.xlu0 %v1141, 32
        %v1300 = vpop.permute.xlu0 %1299
        %1301 = vrot.lane.b32.xlu0 %v1142, 32
        %v1302 = vpop.permute.xlu0 %1301
        %1303 = vrot.lane.b32.xlu0 %v1143, 32
        %v1304 = vpop.permute.xlu0 %1303
        %1369 = vrot.lane.b32.xlu0 %v1145, 64
        %v1370 = vpop.permute.xlu0 %1369
        %1371 = vrot.lane.b32.xlu0 %v1146, 64
        %v1372 = vpop.permute.xlu0 %1371
        %1373 = vrot.lane.b32.xlu0 %v1147, 64
        %v1374 = vpop.permute.xlu0 %1373
        %1375 = vrot.lane.b32.xlu0 %v1148, 64
        %v1376 = vpop.permute.xlu0 %1375
        %1377 = vrot.lane.b32.xlu0 %v1149, 64
        %v1378 = vpop.permute.xlu0 %1377
        %1379 = vrot.lane.b32.xlu0 %v1150, 64
        %v1380 = vpop.permute.xlu0 %1379
        %1381 = vrot.lane.b32.xlu0 %v1151, 64
        %v1382 = vpop.permute.xlu0 %1381
        %1383 = vrot.lane.b32.xlu0 %v1152, 64
        %v1384 = vpop.permute.xlu0 %1383
        %1385 = vrot.lane.b32.xlu0 %v1153, 64
        %v1386 = vpop.permute.xlu0 %1385
        %1387 = vrot.lane.b32.xlu0 %v1154, 64
        %v1388 = vpop.permute.xlu0 %1387
        %1389 = vrot.lane.b32.xlu0 %v1155, 64
        %v1390 = vpop.permute.xlu0 %1389
        %1391 = vrot.lane.b32.xlu0 %v1156, 64
        %v1392 = vpop.permute.xlu0 %1391
        %1393 = vrot.lane.b32.xlu0 %v1157, 64
        %v1394 = vpop.permute.xlu0 %1393
        %1395 = vrot.lane.b32.xlu0 %v1158, 64
        %v1396 = vpop.permute.xlu0 %1395
        %1397 = vrot.lane.b32.xlu0 %v1159, 64
        %v1398 = vpop.permute.xlu0 %1397
        %1399 = vrot.lane.b32.xlu0 %v1160, 64
        %v1400 = vpop.permute.xlu0 %1399
        %1401 = vrot.lane.b32.xlu0 %v1161, 64
        %v1402 = vpop.permute.xlu0 %1401
        %1403 = vrot.lane.b32.xlu0 %v1162, 64
        %v1404 = vpop.permute.xlu0 %1403
        %1405 = vrot.lane.b32.xlu0 %v1163, 64
        %v1406 = vpop.permute.xlu0 %1405
        %1407 = vrot.lane.b32.xlu0 %v1164, 64
        %v1408 = vpop.permute.xlu0 %1407
        %1409 = vrot.lane.b32.xlu0 %v1165, 64
        %v1410 = vpop.permute.xlu0 %1409
        %1411 = vrot.lane.b32.xlu0 %v1166, 64
        %v1412 = vpop.permute.xlu0 %1411
        %1413 = vrot.lane.b32.xlu0 %v1167, 64
        %v1414 = vpop.permute.xlu0 %1413
        %1415 = vrot.lane.b32.xlu0 %v1168, 64
        %v1416 = vpop.permute.xlu0 %1415
        %1417 = vrot.lane.b32.xlu0 %v1169, 64
        %v1418 = vpop.permute.xlu0 %1417
        %1419 = vrot.lane.b32.xlu0 %v1170, 64
        %v1420 = vpop.permute.xlu0 %1419
        %1421 = vrot.lane.b32.xlu0 %v1171, 64
        %v1422 = vpop.permute.xlu0 %1421
        %1423 = vrot.lane.b32.xlu0 %v1172, 64
        %v1424 = vpop.permute.xlu0 %1423
        %1425 = vrot.lane.b32.xlu0 %v1173, 64
        %v1426 = vpop.permute.xlu0 %1425
        %1427 = vrot.lane.b32.xlu0 %v1174, 64
        %v1428 = vpop.permute.xlu0 %1427
        %1429 = vrot.lane.b32.xlu0 %v1175, 64
        %v1430 = vpop.permute.xlu0 %1429
        %1431 = vrot.lane.b32.xlu0 %v1176, 64
        %v1432 = vpop.permute.xlu0 %1431
        %1497 = vrot.lane.b32.xlu0 %v1177, 96
        %v1498 = vpop.permute.xlu0 %1497
        %1499 = vrot.lane.b32.xlu0 %v1178, 96
        %v1500 = vpop.permute.xlu0 %1499
        %1501 = vrot.lane.b32.xlu0 %v1179, 96
        %v1502 = vpop.permute.xlu0 %1501
        %1503 = vrot.lane.b32.xlu0 %v1180, 96
        %v1504 = vpop.permute.xlu0 %1503
        %1505 = vrot.lane.b32.xlu0 %v1181, 96
        %v1506 = vpop.permute.xlu0 %1505
        %1507 = vrot.lane.b32.xlu0 %v1182, 96
        %v1508 = vpop.permute.xlu0 %1507
        %1509 = vrot.lane.b32.xlu0 %v1183, 96
        %v1510 = vpop.permute.xlu0 %1509
        %1511 = vrot.lane.b32.xlu0 %v1184, 96
        %v1512 = vpop.permute.xlu0 %1511
        %1513 = vrot.lane.b32.xlu0 %v1185, 96
        %v1514 = vpop.permute.xlu0 %1513
        %1515 = vrot.lane.b32.xlu0 %v1186, 96
        %v1516 = vpop.permute.xlu0 %1515
        %1517 = vrot.lane.b32.xlu0 %v1187, 96
        %v1518 = vpop.permute.xlu0 %1517
        %1519 = vrot.lane.b32.xlu0 %v1188, 96
        %v1520 = vpop.permute.xlu0 %1519
        %1521 = vrot.lane.b32.xlu0 %v1189, 96
        %v1522 = vpop.permute.xlu0 %1521
        %1523 = vrot.lane.b32.xlu0 %v1190, 96
        %v1524 = vpop.permute.xlu0 %1523
        %1525 = vrot.lane.b32.xlu0 %v1191, 96
        %v1526 = vpop.permute.xlu0 %1525
        %1527 = vrot.lane.b32.xlu0 %v1192, 96
        %v1528 = vpop.permute.xlu0 %1527
        %1529 = vrot.lane.b32.xlu0 %v1193, 96
        %v1530 = vpop.permute.xlu0 %1529
        %1531 = vrot.lane.b32.xlu0 %v1194, 96
        %v1532 = vpop.permute.xlu0 %1531
        %1533 = vrot.lane.b32.xlu0 %v1195, 96
        %v1534 = vpop.permute.xlu0 %1533
        %1535 = vrot.lane.b32.xlu0 %v1196, 96
        %v1536 = vpop.permute.xlu0 %1535
        %1537 = vrot.lane.b32.xlu0 %v1197, 96
        %v1538 = vpop.permute.xlu0 %1537
        %1539 = vrot.lane.b32.xlu0 %v1198, 96
        %v1540 = vpop.permute.xlu0 %1539
        %1541 = vrot.lane.b32.xlu0 %v1199, 96
        %v1542 = vpop.permute.xlu0 %1541
        %1543 = vrot.lane.b32.xlu0 %v1200, 96
        %v1544 = vpop.permute.xlu0 %1543
        %1545 = vrot.lane.b32.xlu0 %v1201, 96
        %v1546 = vpop.permute.xlu0 %1545
        %1547 = vrot.lane.b32.xlu0 %v1202, 96
        %v1548 = vpop.permute.xlu0 %1547
        %1549 = vrot.lane.b32.xlu0 %v1203, 96
        %v1550 = vpop.permute.xlu0 %1549
        %1551 = vrot.lane.b32.xlu0 %v1204, 96
        %v1552 = vpop.permute.xlu0 %1551
        %1553 = vrot.lane.b32.xlu0 %v1205, 96
        %v1554 = vpop.permute.xlu0 %1553
        %1555 = vrot.lane.b32.xlu0 %v1206, 96
        %v1556 = vpop.permute.xlu0 %1555
        %1557 = vrot.lane.b32.xlu0 %v1207, 96
        %v1558 = vpop.permute.xlu0 %1557
        %1559 = vrot.lane.b32.xlu0 %v1208, 96
        %v1560 = vpop.permute.xlu0 %1559
        %v1593 = vsel %vm331, %v1080, %v1242
        %v1594 = vsel %vm331, %v1081, %v1244
        %v1595 = vsel %vm331, %v1082, %v1246
        %v1596 = vsel %vm331, %v1083, %v1248
        %v1597 = vsel %vm331, %v1084, %v1250
        %v1598 = vsel %vm331, %v1085, %v1252
        %v1599 = vsel %vm331, %v1086, %v1254
        %v1600 = vsel %vm331, %v1087, %v1256
        %v1601 = vsel %vm331, %v1088, %v1258
        %v1602 = vsel %vm331, %v1089, %v1260
        %v1603 = vsel %vm331, %v1090, %v1262
        %v1604 = vsel %vm331, %v1091, %v1264
        %v1605 = vsel %vm331, %v1092, %v1266
        %v1606 = vsel %vm331, %v1093, %v1268
        %v1607 = vsel %vm331, %v1094, %v1270
        %v1608 = vsel %vm331, %v1095, %v1272
        %v1609 = vsel %vm331, %v1096, %v1274
        %v1610 = vsel %vm331, %v1097, %v1276
        %v1611 = vsel %vm331, %v1098, %v1278
        %v1612 = vsel %vm331, %v1099, %v1280
        %v1613 = vsel %vm331, %v1100, %v1282
        %v1614 = vsel %vm331, %v1101, %v1284
        %v1615 = vsel %vm331, %v1102, %v1286
        %v1616 = vsel %vm331, %v1103, %v1288
        %v1617 = vsel %vm331, %v1104, %v1290
        %v1618 = vsel %vm331, %v1105, %v1292
        %v1619 = vsel %vm331, %v1106, %v1294
        %v1620 = vsel %vm331, %v1107, %v1296
        %v1621 = vsel %vm331, %v1108, %v1298
        %v1622 = vsel %vm331, %v1109, %v1300
        %v1623 = vsel %vm331, %v1110, %v1302
        %v1624 = vsel %vm331, %v1111, %v1304
        %v1625 = vsel %vm982, %v1593, %v1370
        %v1626 = vsel %vm982, %v1594, %v1372
        %v1627 = vsel %vm982, %v1595, %v1374
        %v1628 = vsel %vm982, %v1596, %v1376
        %v1629 = vsel %vm982, %v1597, %v1378
        %v1630 = vsel %vm982, %v1598, %v1380
        %v1631 = vsel %vm982, %v1599, %v1382
        %v1632 = vsel %vm982, %v1600, %v1384
        %v1633 = vsel %vm982, %v1601, %v1386
        %v1634 = vsel %vm982, %v1602, %v1388
        %v1635 = vsel %vm982, %v1603, %v1390
        %v1636 = vsel %vm982, %v1604, %v1392
        %v1637 = vsel %vm982, %v1605, %v1394
        %v1638 = vsel %vm982, %v1606, %v1396
        %v1639 = vsel %vm982, %v1607, %v1398
        %v1640 = vsel %vm982, %v1608, %v1400
        %v1641 = vsel %vm982, %v1609, %v1402
        %v1642 = vsel %vm982, %v1610, %v1404
        %v1643 = vsel %vm982, %v1611, %v1406
        %v1644 = vsel %vm982, %v1612, %v1408
        %v1645 = vsel %vm982, %v1613, %v1410
        %v1646 = vsel %vm982, %v1614, %v1412
        %v1647 = vsel %vm982, %v1615, %v1414
        %v1648 = vsel %vm982, %v1616, %v1416
        %v1649 = vsel %vm982, %v1617, %v1418
        %v1650 = vsel %vm982, %v1618, %v1420
        %v1651 = vsel %vm982, %v1619, %v1422
        %v1652 = vsel %vm982, %v1620, %v1424
        %v1653 = vsel %vm982, %v1621, %v1426
        %v1654 = vsel %vm982, %v1622, %v1428
        %v1655 = vsel %vm982, %v1623, %v1430
        %v1656 = vsel %vm982, %v1624, %v1432
        %v1657 = vsel %vm1015, %v1625, %v1498
        %v1658 = vsel %vm1015, %v1626, %v1500
        %v1659 = vsel %vm1015, %v1627, %v1502
        %v1660 = vsel %vm1015, %v1628, %v1504
        %v1661 = vsel %vm1015, %v1629, %v1506
        %v1662 = vsel %vm1015, %v1630, %v1508
        %v1663 = vsel %vm1015, %v1631, %v1510
        %v1664 = vsel %vm1015, %v1632, %v1512
        %v1665 = vsel %vm1015, %v1633, %v1514
        %v1666 = vsel %vm1015, %v1634, %v1516
        %v1667 = vsel %vm1015, %v1635, %v1518
        %v1668 = vsel %vm1015, %v1636, %v1520
        %v1669 = vsel %vm1015, %v1637, %v1522
        %v1670 = vsel %vm1015, %v1638, %v1524
        %v1671 = vsel %vm1015, %v1639, %v1526
        %v1672 = vsel %vm1015, %v1640, %v1528
        %v1673 = vsel %vm1015, %v1641, %v1530
        %v1674 = vsel %vm1015, %v1642, %v1532
        %v1675 = vsel %vm1015, %v1643, %v1534
        %v1676 = vsel %vm1015, %v1644, %v1536
        %v1677 = vsel %vm1015, %v1645, %v1538
        %v1678 = vsel %vm1015, %v1646, %v1540
        %v1679 = vsel %vm1015, %v1647, %v1542
        %v1680 = vsel %vm1015, %v1648, %v1544
        %v1681 = vsel %vm1015, %v1649, %v1546
        %v1682 = vsel %vm1015, %v1650, %v1548
        %v1683 = vsel %vm1015, %v1651, %v1550
        %v1684 = vsel %vm1015, %v1652, %v1552
        %v1685 = vsel %vm1015, %v1653, %v1554
        %v1686 = vsel %vm1015, %v1654, %v1556
        %v1687 = vsel %vm1015, %v1655, %v1558
        %v1688 = vsel %vm1015, %v1656, %v1560
        %1689 = vst [vmem:[#allocation3 + $0x8] sm:$0xff] %v1657
        %1690 = vst [vmem:[#allocation3 + $0x20] sm:$0xff] %v1658
        %1691 = vst [vmem:[#allocation3 + $0x38] sm:$0xff] %v1659
        %1692 = vst [vmem:[#allocation3 + $0x50] sm:$0xff] %v1660
        %1693 = vst [vmem:[#allocation3 + $0x68] sm:$0xff] %v1661
        %1694 = vst [vmem:[#allocation3 + $0x80] sm:$0xff] %v1662
        %1695 = vst [vmem:[#allocation3 + $0x98] sm:$0xff] %v1663
        %1696 = vst [vmem:[#allocation3 + $0xb0] sm:$0xff] %v1664
        %1697 = vst [vmem:[#allocation3 + $0xc8] sm:$0xff] %v1665
        %1698 = vst [vmem:[#allocation3 + $0xe0] sm:$0xff] %v1666
        %1699 = vst [vmem:[#allocation3 + $0xf8] sm:$0xff] %v1667
        %1700 = vst [vmem:[#allocation3 + $0x110] sm:$0xff] %v1668
        %1701 = vst [vmem:[#allocation3 + $0x128] sm:$0xff] %v1669
        %1702 = vst [vmem:[#allocation3 + $0x140] sm:$0xff] %v1670
        %1703 = vst [vmem:[#allocation3 + $0x158] sm:$0xff] %v1671
        %1704 = vst [vmem:[#allocation3 + $0x170] sm:$0xff] %v1672
        %1705 = vst [vmem:[#allocation3 + $0x188] sm:$0xff] %v1673
        %1706 = vst [vmem:[#allocation3 + $0x1a0] sm:$0xff] %v1674
        %1707 = vst [vmem:[#allocation3 + $0x1b8] sm:$0xff] %v1675
        %1708 = vst [vmem:[#allocation3 + $0x1d0] sm:$0xff] %v1676
        %1709 = vst [vmem:[#allocation3 + $0x1e8] sm:$0xff] %v1677
        %1710 = vst [vmem:[#allocation3 + $0x200] sm:$0xff] %v1678
        %1711 = vst [vmem:[#allocation3 + $0x218] sm:$0xff] %v1679
        %1712 = vst [vmem:[#allocation3 + $0x230] sm:$0xff] %v1680
        %1713 = vst [vmem:[#allocation3 + $0x248] sm:$0xff] %v1681
        %1714 = vst [vmem:[#allocation3 + $0x260] sm:$0xff] %v1682
        %1715 = vst [vmem:[#allocation3 + $0x278] sm:$0xff] %v1683
        %1716 = vst [vmem:[#allocation3 + $0x290] sm:$0xff] %v1684
        %1717 = vst [vmem:[#allocation3 + $0x2a8] sm:$0xff] %v1685
        %1718 = vst [vmem:[#allocation3 + $0x2c0] sm:$0xff] %v1686
        %1719 = vst [vmem:[#allocation3 + $0x2d8] sm:$0xff] %v1687
        %1720 = vst [vmem:[#allocation3 + $0x2f0] sm:$0xff] %v1688
        %v1721 = vld [vmem:[%s1144 + $0x9] sm:$0xff]
        %v1722 = vld [vmem:[%s1144 + $0x11] sm:$0xff]
        %v1723 = vld [vmem:[%s1144 + $0x29] sm:$0xff]
        %v1724 = vld [vmem:[%s1144 + $0x31] sm:$0xff]
        %v1725 = vld [vmem:[%s1144 + $0x49] sm:$0xff]
        %v1726 = vld [vmem:[%s1144 + $0x51] sm:$0xff]
        %v1727 = vld [vmem:[%s1144 + $0x69] sm:$0xff]
        %v1728 = vld [vmem:[%s1144 + $0x71] sm:$0xff]
        %v1729 = vld [vmem:[%s1144 + $0x89] sm:$0xff]
        %v1730 = vld [vmem:[%s1144 + $0x91] sm:$0xff]
        %v1731 = vld [vmem:[%s1144 + $0xa9] sm:$0xff]
        %v1732 = vld [vmem:[%s1144 + $0xb1] sm:$0xff]
        %v1733 = vld [vmem:[%s1144 + $0xc9] sm:$0xff]
        %v1734 = vld [vmem:[%s1144 + $0xd1] sm:$0xff]
        %v1735 = vld [vmem:[%s1144 + $0xe9] sm:$0xff]
        %v1736 = vld [vmem:[%s1144 + $0xf1] sm:$0xff]
        %v1737 = vld [vmem:[%s1144 + $0x109] sm:$0xff]
        %v1738 = vld [vmem:[%s1144 + $0x111] sm:$0xff]
        %v1739 = vld [vmem:[%s1144 + $0x129] sm:$0xff]
        %v1740 = vld [vmem:[%s1144 + $0x131] sm:$0xff]
        %v1741 = vld [vmem:[%s1144 + $0x149] sm:$0xff]
        %v1742 = vld [vmem:[%s1144 + $0x151] sm:$0xff]
        %v1743 = vld [vmem:[%s1144 + $0x169] sm:$0xff]
        %v1744 = vld [vmem:[%s1144 + $0x171] sm:$0xff]
        %v1745 = vld [vmem:[%s1144 + $0x189] sm:$0xff]
        %v1746 = vld [vmem:[%s1144 + $0x191] sm:$0xff]
        %v1747 = vld [vmem:[%s1144 + $0x1a9] sm:$0xff]
        %v1748 = vld [vmem:[%s1144 + $0x1b1] sm:$0xff]
        %v1749 = vld [vmem:[%s1144 + $0x1c9] sm:$0xff]
        %v1750 = vld [vmem:[%s1144 + $0x1d1] sm:$0xff]
        %v1751 = vld [vmem:[%s1144 + $0x1e9] sm:$0xff]
        %v1752 = vld [vmem:[%s1144 + $0x1f1] sm:$0xff]
        %v1753 = vsel %vm331, %v1721, 0.0
        %v1754 = vsel %vm331, %v1722, 0.0
        %v1755 = vsel %vm331, %v1723, 0.0
        %v1756 = vsel %vm331, %v1724, 0.0
        %v1757 = vsel %vm331, %v1725, 0.0
        %v1758 = vsel %vm331, %v1726, 0.0
        %v1759 = vsel %vm331, %v1727, 0.0
        %v1760 = vsel %vm331, %v1728, 0.0
        %v1761 = vsel %vm331, %v1729, 0.0
        %v1762 = vsel %vm331, %v1730, 0.0
        %v1763 = vsel %vm331, %v1731, 0.0
        %v1764 = vsel %vm331, %v1732, 0.0
        %v1765 = vsel %vm331, %v1733, 0.0
        %v1766 = vsel %vm331, %v1734, 0.0
        %v1767 = vsel %vm331, %v1735, 0.0
        %v1768 = vsel %vm331, %v1736, 0.0
        %v1769 = vsel %vm331, %v1737, 0.0
        %v1770 = vsel %vm331, %v1738, 0.0
        %v1771 = vsel %vm331, %v1739, 0.0
        %v1772 = vsel %vm331, %v1740, 0.0
        %v1773 = vsel %vm331, %v1741, 0.0
        %v1774 = vsel %vm331, %v1742, 0.0
        %v1775 = vsel %vm331, %v1743, 0.0
        %v1776 = vsel %vm331, %v1744, 0.0
        %v1777 = vsel %vm331, %v1745, 0.0
        %v1778 = vsel %vm331, %v1746, 0.0
        %v1779 = vsel %vm331, %v1747, 0.0
        %v1780 = vsel %vm331, %v1748, 0.0
        %v1781 = vsel %vm331, %v1749, 0.0
        %v1782 = vsel %vm331, %v1750, 0.0
        %v1783 = vsel %vm331, %v1751, 0.0
        %v1784 = vsel %vm331, %v1752, 0.0
        %1785 = vst [vmem:[#allocation3 + $0x10] sm:$0xff] %v1753
        %1786 = vst [vmem:[#allocation3 + $0x28] sm:$0xff] %v1754
        %1787 = vst [vmem:[#allocation3 + $0x40] sm:$0xff] %v1755
        %1788 = vst [vmem:[#allocation3 + $0x58] sm:$0xff] %v1756
        %1789 = vst [vmem:[#allocation3 + $0x70] sm:$0xff] %v1757
        %1790 = vst [vmem:[#allocation3 + $0x88] sm:$0xff] %v1758
        %1791 = vst [vmem:[#allocation3 + $0xa0] sm:$0xff] %v1759
        %1792 = vst [vmem:[#allocation3 + $0xb8] sm:$0xff] %v1760
        %1793 = vst [vmem:[#allocation3 + $0xd0] sm:$0xff] %v1761
        %1794 = vst [vmem:[#allocation3 + $0xe8] sm:$0xff] %v1762
        %1795 = vst [vmem:[#allocation3 + $0x100] sm:$0xff] %v1763
        %1796 = vst [vmem:[#allocation3 + $0x118] sm:$0xff] %v1764
        %1797 = vst [vmem:[#allocation3 + $0x130] sm:$0xff] %v1765
        %1798 = vst [vmem:[#allocation3 + $0x148] sm:$0xff] %v1766
        %1799 = vst [vmem:[#allocation3 + $0x160] sm:$0xff] %v1767
        %1800 = vst [vmem:[#allocation3 + $0x178] sm:$0xff] %v1768
        %1801 = vst [vmem:[#allocation3 + $0x190] sm:$0xff] %v1769
        %1802 = vst [vmem:[#allocation3 + $0x1a8] sm:$0xff] %v1770
        %1803 = vst [vmem:[#allocation3 + $0x1c0] sm:$0xff] %v1771
        %1804 = vst [vmem:[#allocation3 + $0x1d8] sm:$0xff] %v1772
        %1805 = vst [vmem:[#allocation3 + $0x1f0] sm:$0xff] %v1773
        %1806 = vst [vmem:[#allocation3 + $0x208] sm:$0xff] %v1774
        %1807 = vst [vmem:[#allocation3 + $0x220] sm:$0xff] %v1775
        %1808 = vst [vmem:[#allocation3 + $0x238] sm:$0xff] %v1776
        %1809 = vst [vmem:[#allocation3 + $0x250] sm:$0xff] %v1777
        %1810 = vst [vmem:[#allocation3 + $0x268] sm:$0xff] %v1778
        %1811 = vst [vmem:[#allocation3 + $0x280] sm:$0xff] %v1779
        %1812 = vst [vmem:[#allocation3 + $0x298] sm:$0xff] %v1780
        %1813 = vst [vmem:[#allocation3 + $0x2b0] sm:$0xff] %v1781
        %1814 = vst [vmem:[#allocation3 + $0x2c8] sm:$0xff] %v1782
        %1815 = vst [vmem:[#allocation3 + $0x2e0] sm:$0xff] %v1783
        %1816 = vst [vmem:[#allocation3 + $0x2f8] sm:$0xff] %v1784
        %v1817 = vld [vmem:[#allocation3] sm:$0xff]
        %v1818 = vld [vmem:[#allocation3 + $0x8] sm:$0xff]
        %v1819 = vld [vmem:[#allocation3 + $0x10] sm:$0xff]
        %v1820 = vld [vmem:[#allocation3 + $0x18] sm:$0xff]
        %v1821 = vld [vmem:[#allocation3 + $0x20] sm:$0xff]
        %v1822 = vld [vmem:[#allocation3 + $0x28] sm:$0xff]
        %v1823 = vld [vmem:[#allocation3 + $0x30] sm:$0xff]
        %v1824 = vld [vmem:[#allocation3 + $0x38] sm:$0xff]
        %v1825 = vld [vmem:[#allocation3 + $0x40] sm:$0xff]
        %v1826 = vld [vmem:[#allocation3 + $0x48] sm:$0xff]
        %v1827 = vld [vmem:[#allocation3 + $0x50] sm:$0xff]
        %v1828 = vld [vmem:[#allocation3 + $0x58] sm:$0xff]
        %v1829 = vld [vmem:[#allocation3 + $0x60] sm:$0xff]
        %v1830 = vld [vmem:[#allocation3 + $0x68] sm:$0xff]
        %v1831 = vld [vmem:[#allocation3 + $0x70] sm:$0xff]
        %v1832 = vld [vmem:[#allocation3 + $0x78] sm:$0xff]
        %v1833 = vld [vmem:[#allocation3 + $0x80] sm:$0xff]
        %v1834 = vld [vmem:[#allocation3 + $0x88] sm:$0xff]
        %v1835 = vld [vmem:[#allocation3 + $0x90] sm:$0xff]
        %v1836 = vld [vmem:[#allocation3 + $0x98] sm:$0xff]
        %v1837 = vld [vmem:[#allocation3 + $0xa0] sm:$0xff]
        %v1838 = vld [vmem:[#allocation3 + $0xa8] sm:$0xff]
        %v1839 = vld [vmem:[#allocation3 + $0xb0] sm:$0xff]
        %v1840 = vld [vmem:[#allocation3 + $0xb8] sm:$0xff]
        %v1841 = vld [vmem:[#allocation3 + $0xc0] sm:$0xff]
        %v1842 = vld [vmem:[#allocation3 + $0xc8] sm:$0xff]
        %v1843 = vld [vmem:[#allocation3 + $0xd0] sm:$0xff]
        %v1844 = vld [vmem:[#allocation3 + $0xd8] sm:$0xff]
        %v1845 = vld [vmem:[#allocation3 + $0xe0] sm:$0xff]
        %v1846 = vld [vmem:[#allocation3 + $0xe8] sm:$0xff]
        %v1847 = vld [vmem:[#allocation3 + $0xf0] sm:$0xff]
        %v1848 = vld [vmem:[#allocation3 + $0xf8] sm:$0xff]
        %v1849 = vld [vmem:[#allocation3 + $0x100] sm:$0xff]
        %v1850 = vld [vmem:[#allocation3 + $0x108] sm:$0xff]
        %v1851 = vld [vmem:[#allocation3 + $0x110] sm:$0xff]
        %v1852 = vld [vmem:[#allocation3 + $0x118] sm:$0xff]
        %v1853 = vld [vmem:[#allocation3 + $0x120] sm:$0xff]
        %v1854 = vld [vmem:[#allocation3 + $0x128] sm:$0xff]
        %v1855 = vld [vmem:[#allocation3 + $0x130] sm:$0xff]
        %v1856 = vld [vmem:[#allocation3 + $0x138] sm:$0xff]
        %v1857 = vld [vmem:[#allocation3 + $0x140] sm:$0xff]
        %v1858 = vld [vmem:[#allocation3 + $0x148] sm:$0xff]
        %v1859 = vld [vmem:[#allocation3 + $0x150] sm:$0xff]
        %v1860 = vld [vmem:[#allocation3 + $0x158] sm:$0xff]
        %v1861 = vld [vmem:[#allocation3 + $0x160] sm:$0xff]
        %v1862 = vld [vmem:[#allocation3 + $0x168] sm:$0xff]
        %v1863 = vld [vmem:[#allocation3 + $0x170] sm:$0xff]
        %v1864 = vld [vmem:[#allocation3 + $0x178] sm:$0xff]
        %v1865 = vld [vmem:[#allocation3 + $0x180] sm:$0xff]
        %v1866 = vld [vmem:[#allocation3 + $0x188] sm:$0xff]
        %v1867 = vld [vmem:[#allocation3 + $0x190] sm:$0xff]
        %v1868 = vld [vmem:[#allocation3 + $0x198] sm:$0xff]
        %v1869 = vld [vmem:[#allocation3 + $0x1a0] sm:$0xff]
        %v1870 = vld [vmem:[#allocation3 + $0x1a8] sm:$0xff]
        %v1871 = vld [vmem:[#allocation3 + $0x1b0] sm:$0xff]
        %v1872 = vld [vmem:[#allocation3 + $0x1b8] sm:$0xff]
        %v1873 = vld [vmem:[#allocation3 + $0x1c0] sm:$0xff]
        %v1874 = vld [vmem:[#allocation3 + $0x1c8] sm:$0xff]
        %v1875 = vld [vmem:[#allocation3 + $0x1d0] sm:$0xff]
        %v1876 = vld [vmem:[#allocation3 + $0x1d8] sm:$0xff]
        %v1877 = vld [vmem:[#allocation3 + $0x1e0] sm:$0xff]
        %v1878 = vld [vmem:[#allocation3 + $0x1e8] sm:$0xff]
        %v1879 = vld [vmem:[#allocation3 + $0x1f0] sm:$0xff]
        %v1880 = vld [vmem:[#allocation3 + $0x1f8] sm:$0xff]
        %v1881 = vld [vmem:[#allocation3 + $0x200] sm:$0xff]
        %v1882 = vld [vmem:[#allocation3 + $0x208] sm:$0xff]
        %v1883 = vld [vmem:[#allocation3 + $0x210] sm:$0xff]
        %v1884 = vld [vmem:[#allocation3 + $0x218] sm:$0xff]
        %v1885 = vld [vmem:[#allocation3 + $0x220] sm:$0xff]
        %v1886 = vld [vmem:[#allocation3 + $0x228] sm:$0xff]
        %v1887 = vld [vmem:[#allocation3 + $0x230] sm:$0xff]
        %v1888 = vld [vmem:[#allocation3 + $0x238] sm:$0xff]
        %v1889 = vld [vmem:[#allocation3 + $0x240] sm:$0xff]
        %v1890 = vld [vmem:[#allocation3 + $0x248] sm:$0xff]
        %v1891 = vld [vmem:[#allocation3 + $0x250] sm:$0xff]
        %v1892 = vld [vmem:[#allocation3 + $0x258] sm:$0xff]
        %v1893 = vld [vmem:[#allocation3 + $0x260] sm:$0xff]
        %v1894 = vld [vmem:[#allocation3 + $0x268] sm:$0xff]
        %v1895 = vld [vmem:[#allocation3 + $0x270] sm:$0xff]
        %v1896 = vld [vmem:[#allocation3 + $0x278] sm:$0xff]
        %v1897 = vld [vmem:[#allocation3 + $0x280] sm:$0xff]
        %v1898 = vld [vmem:[#allocation3 + $0x288] sm:$0xff]
        %v1899 = vld [vmem:[#allocation3 + $0x290] sm:$0xff]
        %v1900 = vld [vmem:[#allocation3 + $0x298] sm:$0xff]
        %v1901 = vld [vmem:[#allocation3 + $0x2a0] sm:$0xff]
        %v1902 = vld [vmem:[#allocation3 + $0x2a8] sm:$0xff]
        %v1903 = vld [vmem:[#allocation3 + $0x2b0] sm:$0xff]
        %v1904 = vld [vmem:[#allocation3 + $0x2b8] sm:$0xff]
        %v1905 = vld [vmem:[#allocation3 + $0x2c0] sm:$0xff]
        %v1906 = vld [vmem:[#allocation3 + $0x2c8] sm:$0xff]
        %v1907 = vld [vmem:[#allocation3 + $0x2d0] sm:$0xff]
        %v1908 = vld [vmem:[#allocation3 + $0x2d8] sm:$0xff]
        %v1909 = vld [vmem:[#allocation3 + $0x2e0] sm:$0xff]
        %v1910 = vld [vmem:[#allocation3 + $0x2e8] sm:$0xff]
        %v1911 = vld [vmem:[#allocation3 + $0x2f0] sm:$0xff]
        %v1912 = vld [vmem:[#allocation3 + $0x2f8] sm:$0xff]
        %v1913 = vld [vmem:[%s1] sm:$0xff]
        %v1914 = vld [vmem:[%s1 + $0x8] sm:$0xff]
        %v1915 = vld [vmem:[%s1 + $0x10] sm:$0xff]
        %v1916 = vld [vmem:[%s1 + $0x18] sm:$0xff]
        %v1917 = vld [vmem:[%s1 + $0x20] sm:$0xff]
        %v1918 = vld [vmem:[%s1 + $0x28] sm:$0xff]
        %v1919 = vld [vmem:[%s1 + $0x30] sm:$0xff]
        %v1920 = vld [vmem:[%s1 + $0x38] sm:$0xff]
        %v1921 = vld [vmem:[%s1 + $0x40] sm:$0xff]
        %v1922 = vld [vmem:[%s1 + $0x48] sm:$0xff]
        %v1923 = vld [vmem:[%s1 + $0x50] sm:$0xff]
        %v1924 = vld [vmem:[%s1 + $0x58] sm:$0xff]
        %v1925 = vld [vmem:[%s1 + $0x60] sm:$0xff]
        %v1926 = vld [vmem:[%s1 + $0x68] sm:$0xff]
        %v1927 = vld [vmem:[%s1 + $0x70] sm:$0xff]
        %v1928 = vld [vmem:[%s1 + $0x78] sm:$0xff]
        %v1929 = vld [vmem:[%s1 + $0x80] sm:$0xff]
        %v1930 = vld [vmem:[%s1 + $0x88] sm:$0xff]
        %v1931 = vld [vmem:[%s1 + $0x90] sm:$0xff]
        %v1932 = vld [vmem:[%s1 + $0x98] sm:$0xff]
        %v1933 = vld [vmem:[%s1 + $0xa0] sm:$0xff]
        %v1934 = vld [vmem:[%s1 + $0xa8] sm:$0xff]
        %v1935 = vld [vmem:[%s1 + $0xb0] sm:$0xff]
        %v1936 = vld [vmem:[%s1 + $0xb8] sm:$0xff]
        %v1937 = vld [vmem:[%s1 + $0xc0] sm:$0xff]
        %v1938 = vld [vmem:[%s1 + $0xc8] sm:$0xff]
        %v1939 = vld [vmem:[%s1 + $0xd0] sm:$0xff]
        %v1940 = vld [vmem:[%s1 + $0xd8] sm:$0xff]
        %v1941 = vld [vmem:[%s1 + $0xe0] sm:$0xff]
        %v1942 = vld [vmem:[%s1 + $0xe8] sm:$0xff]
        %v1943 = vld [vmem:[%s1 + $0xf0] sm:$0xff]
        %v1944 = vld [vmem:[%s1 + $0xf8] sm:$0xff]
        %v1945 = vld [vmem:[%s1 + $0x100] sm:$0xff]
        %v1946 = vld [vmem:[%s1 + $0x108] sm:$0xff]
        %v1947 = vld [vmem:[%s1 + $0x110] sm:$0xff]
        %v1948 = vld [vmem:[%s1 + $0x118] sm:$0xff]
        %v1949 = vld [vmem:[%s1 + $0x120] sm:$0xff]
        %v1950 = vld [vmem:[%s1 + $0x128] sm:$0xff]
        %v1951 = vld [vmem:[%s1 + $0x130] sm:$0xff]
        %v1952 = vld [vmem:[%s1 + $0x138] sm:$0xff]
        %v1953 = vld [vmem:[%s1 + $0x140] sm:$0xff]
        %v1954 = vld [vmem:[%s1 + $0x148] sm:$0xff]
        %v1955 = vld [vmem:[%s1 + $0x150] sm:$0xff]
        %v1956 = vld [vmem:[%s1 + $0x158] sm:$0xff]
        %v1957 = vld [vmem:[%s1 + $0x160] sm:$0xff]
        %v1958 = vld [vmem:[%s1 + $0x168] sm:$0xff]
        %v1959 = vld [vmem:[%s1 + $0x170] sm:$0xff]
        %v1960 = vld [vmem:[%s1 + $0x178] sm:$0xff]
        %v1961 = vld [vmem:[%s2] sm:$0x1]
        %v1963 = vperm.slane %v1961, 0
        %1965 = vmatpush.msra.mxu0 %v1928
        %1966 = vmatpush.msra.mxu0 %v1927
        %1967 = vmatpush.msra.mxu0 %v1926
        %1968 = vmatpush.msra.mxu0 %v1925
        %1969 = vmatpush.msra.mxu0 %v1924
        %1970 = vmatpush.msra.mxu0 %v1923
        %1971 = vmatpush.msra.mxu0 %v1922
        %1972 = vmatpush.msra.mxu0 %v1921
        %1973 = vmatpush.msra.mxu0 %v1920
        %1974 = vmatpush.msra.mxu0 %v1919
        %1975 = vmatpush.msra.mxu0 %v1918
        %1976 = vmatpush.msra.mxu0 %v1917
        %1977 = vmatpush.msra.mxu0 %v1916
        %1978 = vmatpush.msra.mxu0 %v1915
        %1979 = vmatpush.msra.mxu0 %v1914
        %1980 = vmatpush.msra.mxu0 %v1913
        %1981 = vmatmul.f32.gmra.mxu0 %v1817
        %v1982 = vpop.f32.mrf.mxu0
        %v1983 = vadd.f32 %v1963, %v1982
        %1984 = vmatmul.f32.gmra.mxu0 %v1820
        %v1985 = vpop.f32.mrf.mxu0
        %v1986 = vadd.f32 %v1963, %v1985
        %1987 = vmatmul.f32.gmra.mxu0 %v1823
        %v1988 = vpop.f32.mrf.mxu0
        %v1989 = vadd.f32 %v1963, %v1988
        %1990 = vmatmul.f32.gmra.mxu0 %v1826
        %v1991 = vpop.f32.mrf.mxu0
        %v1992 = vadd.f32 %v1963, %v1991
        %1993 = vmatmul.f32.gmra.mxu0 %v1829
        %v1994 = vpop.f32.mrf.mxu0
        %v1995 = vadd.f32 %v1963, %v1994
        %1996 = vmatmul.f32.gmra.mxu0 %v1832
        %v1997 = vpop.f32.mrf.mxu0
        %v1998 = vadd.f32 %v1963, %v1997
        %1999 = vmatmul.f32.gmra.mxu0 %v1835
        %v2000 = vpop.f32.mrf.mxu0
        %v2001 = vadd.f32 %v1963, %v2000
        %2002 = vmatmul.f32.gmra.mxu0 %v1838
        %v2003 = vpop.f32.mrf.mxu0
        %v2004 = vadd.f32 %v1963, %v2003
        %2005 = vmatmul.f32.gmra.mxu0 %v1841
        %v2006 = vpop.f32.mrf.mxu0
        %v2007 = vadd.f32 %v1963, %v2006
        %2008 = vmatmul.f32.gmra.mxu0 %v1844
        %v2009 = vpop.f32.mrf.mxu0
        %v2010 = vadd.f32 %v1963, %v2009
        %2011 = vmatmul.f32.gmra.mxu0 %v1847
        %v2012 = vpop.f32.mrf.mxu0
        %v2013 = vadd.f32 %v1963, %v2012
        %2014 = vmatmul.f32.gmra.mxu0 %v1850
        %v2015 = vpop.f32.mrf.mxu0
        %v2016 = vadd.f32 %v1963, %v2015
        %2017 = vmatmul.f32.gmra.mxu0 %v1853
        %v2018 = vpop.f32.mrf.mxu0
        %v2019 = vadd.f32 %v1963, %v2018
        %2020 = vmatmul.f32.gmra.mxu0 %v1856
        %v2021 = vpop.f32.mrf.mxu0
        %v2022 = vadd.f32 %v1963, %v2021
        %2023 = vmatmul.f32.gmra.mxu0 %v1859
        %v2024 = vpop.f32.mrf.mxu0
        %v2025 = vadd.f32 %v1963, %v2024
        %2026 = vmatmul.f32.gmra.mxu0 %v1862
        %v2027 = vpop.f32.mrf.mxu0
        %v2028 = vadd.f32 %v1963, %v2027
        %2029 = vmatmul.f32.gmra.mxu0 %v1865
        %v2030 = vpop.f32.mrf.mxu0
        %v2031 = vadd.f32 %v1963, %v2030
        %2032 = vmatmul.f32.gmra.mxu0 %v1868
        %v2033 = vpop.f32.mrf.mxu0
        %v2034 = vadd.f32 %v1963, %v2033
        %2035 = vmatmul.f32.gmra.mxu0 %v1871
        %v2036 = vpop.f32.mrf.mxu0
        %v2037 = vadd.f32 %v1963, %v2036
        %2038 = vmatmul.f32.gmra.mxu0 %v1874
        %v2039 = vpop.f32.mrf.mxu0
        %v2040 = vadd.f32 %v1963, %v2039
        %2041 = vmatmul.f32.gmra.mxu0 %v1877
        %v2042 = vpop.f32.mrf.mxu0
        %v2043 = vadd.f32 %v1963, %v2042
        %2044 = vmatmul.f32.gmra.mxu0 %v1880
        %v2045 = vpop.f32.mrf.mxu0
        %v2046 = vadd.f32 %v1963, %v2045
        %2047 = vmatmul.f32.gmra.mxu0 %v1883
        %v2048 = vpop.f32.mrf.mxu0
        %v2049 = vadd.f32 %v1963, %v2048
        %2050 = vmatmul.f32.gmra.mxu0 %v1886
        %v2051 = vpop.f32.mrf.mxu0
        %v2052 = vadd.f32 %v1963, %v2051
        %2053 = vmatmul.f32.gmra.mxu0 %v1889
        %v2054 = vpop.f32.mrf.mxu0
        %v2055 = vadd.f32 %v1963, %v2054
        %2056 = vmatmul.f32.gmra.mxu0 %v1892
        %v2057 = vpop.f32.mrf.mxu0
        %v2058 = vadd.f32 %v1963, %v2057
        %2059 = vmatmul.f32.gmra.mxu0 %v1895
        %v2060 = vpop.f32.mrf.mxu0
        %v2061 = vadd.f32 %v1963, %v2060
        %2062 = vmatmul.f32.gmra.mxu0 %v1898
        %v2063 = vpop.f32.mrf.mxu0
        %v2064 = vadd.f32 %v1963, %v2063
        %2065 = vmatmul.f32.gmra.mxu0 %v1901
        %v2066 = vpop.f32.mrf.mxu0
        %v2067 = vadd.f32 %v1963, %v2066
        %2068 = vmatmul.f32.gmra.mxu0 %v1904
        %v2069 = vpop.f32.mrf.mxu0
        %v2070 = vadd.f32 %v1963, %v2069
        %2071 = vmatmul.f32.gmra.mxu0 %v1907
        %v2072 = vpop.f32.mrf.mxu0
        %v2073 = vadd.f32 %v1963, %v2072
        %2074 = vmatmul.f32.gmra.mxu0 %v1910
        %v2075 = vpop.f32.mrf.mxu0
        %v2076 = vadd.f32 %v1963, %v2075
        %2077 = vdwg.mxu0
        %2078 = vmatpush.msra.mxu0 %v1944
        %2079 = vmatpush.msra.mxu0 %v1943
        %2080 = vmatpush.msra.mxu0 %v1942
        %2081 = vmatpush.msra.mxu0 %v1941
        %2082 = vmatpush.msra.mxu0 %v1940
        %2083 = vmatpush.msra.mxu0 %v1939
        %2084 = vmatpush.msra.mxu0 %v1938
        %2085 = vmatpush.msra.mxu0 %v1937
        %2086 = vmatpush.msra.mxu0 %v1936
        %2087 = vmatpush.msra.mxu0 %v1935
        %2088 = vmatpush.msra.mxu0 %v1934
        %2089 = vmatpush.msra.mxu0 %v1933
        %2090 = vmatpush.msra.mxu0 %v1932
        %2091 = vmatpush.msra.mxu0 %v1931
        %2092 = vmatpush.msra.mxu0 %v1930
        %2093 = vmatpush.msra.mxu0 %v1929
        %2094 = vmatmul.f32.gmra.mxu0 %v1818
        %v2095 = vpop.f32.mrf.mxu0
        %v2096 = vadd.f32 %v1983, %v2095
        %2097 = vmatmul.f32.gmra.mxu0 %v1821
        %v2098 = vpop.f32.mrf.mxu0
        %v2099 = vadd.f32 %v1986, %v2098
        %2100 = vmatmul.f32.gmra.mxu0 %v1824
        %v2101 = vpop.f32.mrf.mxu0
        %v2102 = vadd.f32 %v1989, %v2101
        %2103 = vmatmul.f32.gmra.mxu0 %v1827
        %v2104 = vpop.f32.mrf.mxu0
        %v2105 = vadd.f32 %v1992, %v2104
        %2106 = vmatmul.f32.gmra.mxu0 %v1830
        %v2107 = vpop.f32.mrf.mxu0
        %v2108 = vadd.f32 %v1995, %v2107
        %2109 = vmatmul.f32.gmra.mxu0 %v1833
        %v2110 = vpop.f32.mrf.mxu0
        %v2111 = vadd.f32 %v1998, %v2110
        %2112 = vmatmul.f32.gmra.mxu0 %v1836
        %v2113 = vpop.f32.mrf.mxu0
        %v2114 = vadd.f32 %v2001, %v2113
        %2115 = vmatmul.f32.gmra.mxu0 %v1839
        %v2116 = vpop.f32.mrf.mxu0
        %v2117 = vadd.f32 %v2004, %v2116
        %2118 = vmatmul.f32.gmra.mxu0 %v1842
        %v2119 = vpop.f32.mrf.mxu0
        %v2120 = vadd.f32 %v2007, %v2119
        %2121 = vmatmul.f32.gmra.mxu0 %v1845
        %v2122 = vpop.f32.mrf.mxu0
        %v2123 = vadd.f32 %v2010, %v2122
        %2124 = vmatmul.f32.gmra.mxu0 %v1848
        %v2125 = vpop.f32.mrf.mxu0
        %v2126 = vadd.f32 %v2013, %v2125
        %2127 = vmatmul.f32.gmra.mxu0 %v1851
        %v2128 = vpop.f32.mrf.mxu0
        %v2129 = vadd.f32 %v2016, %v2128
        %2130 = vmatmul.f32.gmra.mxu0 %v1854
        %v2131 = vpop.f32.mrf.mxu0
        %v2132 = vadd.f32 %v2019, %v2131
        %2133 = vmatmul.f32.gmra.mxu0 %v1857
        %v2134 = vpop.f32.mrf.mxu0
        %v2135 = vadd.f32 %v2022, %v2134
        %2136 = vmatmul.f32.gmra.mxu0 %v1860
        %v2137 = vpop.f32.mrf.mxu0
        %v2138 = vadd.f32 %v2025, %v2137
        %2139 = vmatmul.f32.gmra.mxu0 %v1863
        %v2140 = vpop.f32.mrf.mxu0
        %v2141 = vadd.f32 %v2028, %v2140
        %2142 = vmatmul.f32.gmra.mxu0 %v1866
        %v2143 = vpop.f32.mrf.mxu0
        %v2144 = vadd.f32 %v2031, %v2143
        %2145 = vmatmul.f32.gmra.mxu0 %v1869
        %v2146 = vpop.f32.mrf.mxu0
        %v2147 = vadd.f32 %v2034, %v2146
        %2148 = vmatmul.f32.gmra.mxu0 %v1872
        %v2149 = vpop.f32.mrf.mxu0
        %v2150 = vadd.f32 %v2037, %v2149
        %2151 = vmatmul.f32.gmra.mxu0 %v1875
        %v2152 = vpop.f32.mrf.mxu0
        %v2153 = vadd.f32 %v2040, %v2152
        %2154 = vmatmul.f32.gmra.mxu0 %v1878
        %v2155 = vpop.f32.mrf.mxu0
        %v2156 = vadd.f32 %v2043, %v2155
        %2157 = vmatmul.f32.gmra.mxu0 %v1881
        %v2158 = vpop.f32.mrf.mxu0
        %v2159 = vadd.f32 %v2046, %v2158
        %2160 = vmatmul.f32.gmra.mxu0 %v1884
        %v2161 = vpop.f32.mrf.mxu0
        %v2162 = vadd.f32 %v2049, %v2161
        %2163 = vmatmul.f32.gmra.mxu0 %v1887
        %v2164 = vpop.f32.mrf.mxu0
        %v2165 = vadd.f32 %v2052, %v2164
        %2166 = vmatmul.f32.gmra.mxu0 %v1890
        %v2167 = vpop.f32.mrf.mxu0
        %v2168 = vadd.f32 %v2055, %v2167
        %2169 = vmatmul.f32.gmra.mxu0 %v1893
        %v2170 = vpop.f32.mrf.mxu0
        %v2171 = vadd.f32 %v2058, %v2170
        %2172 = vmatmul.f32.gmra.mxu0 %v1896
        %v2173 = vpop.f32.mrf.mxu0
        %v2174 = vadd.f32 %v2061, %v2173
        %2175 = vmatmul.f32.gmra.mxu0 %v1899
        %v2176 = vpop.f32.mrf.mxu0
        %v2177 = vadd.f32 %v2064, %v2176
        %2178 = vmatmul.f32.gmra.mxu0 %v1902
        %v2179 = vpop.f32.mrf.mxu0
        %v2180 = vadd.f32 %v2067, %v2179
        %2181 = vmatmul.f32.gmra.mxu0 %v1905
        %v2182 = vpop.f32.mrf.mxu0
        %v2183 = vadd.f32 %v2070, %v2182
        %2184 = vmatmul.f32.gmra.mxu0 %v1908
        %v2185 = vpop.f32.mrf.mxu0
        %v2186 = vadd.f32 %v2073, %v2185
        %2187 = vmatmul.f32.gmra.mxu0 %v1911
        %v2188 = vpop.f32.mrf.mxu0
        %v2189 = vadd.f32 %v2076, %v2188
        %2190 = vdwg.mxu0
        %2191 = vmatpush.msra.mxu0 %v1960
        %2192 = vmatpush.msra.mxu0 %v1959
        %2193 = vmatpush.msra.mxu0 %v1958
        %2194 = vmatpush.msra.mxu0 %v1957
        %2195 = vmatpush.msra.mxu0 %v1956
        %2196 = vmatpush.msra.mxu0 %v1955
        %2197 = vmatpush.msra.mxu0 %v1954
        %2198 = vmatpush.msra.mxu0 %v1953
        %2199 = vmatpush.msra.mxu0 %v1952
        %2200 = vmatpush.msra.mxu0 %v1951
        %2201 = vmatpush.msra.mxu0 %v1950
        %2202 = vmatpush.msra.mxu0 %v1949
        %2203 = vmatpush.msra.mxu0 %v1948
        %2204 = vmatpush.msra.mxu0 %v1947
        %2205 = vmatpush.msra.mxu0 %v1946
        %2206 = vmatpush.msra.mxu0 %v1945
        %2207 = vmatmul.f32.gmra.mxu0 %v1819
        %v2208 = vpop.f32.mrf.mxu0
        %v2209 = vadd.f32 %v2096, %v2208
        %2210 = vmatmul.f32.gmra.mxu0 %v1822
        %v2211 = vpop.f32.mrf.mxu0
        %v2212 = vadd.f32 %v2099, %v2211
        %2213 = vmatmul.f32.gmra.mxu0 %v1825
        %v2214 = vpop.f32.mrf.mxu0
        %v2215 = vadd.f32 %v2102, %v2214
        %2216 = vmatmul.f32.gmra.mxu0 %v1828
        %v2217 = vpop.f32.mrf.mxu0
        %v2218 = vadd.f32 %v2105, %v2217
        %2219 = vmatmul.f32.gmra.mxu0 %v1831
        %v2220 = vpop.f32.mrf.mxu0
        %v2221 = vadd.f32 %v2108, %v2220
        %2222 = vmatmul.f32.gmra.mxu0 %v1834
        %v2223 = vpop.f32.mrf.mxu0
        %v2224 = vadd.f32 %v2111, %v2223
        %2225 = vmatmul.f32.gmra.mxu0 %v1837
        %v2226 = vpop.f32.mrf.mxu0
        %v2227 = vadd.f32 %v2114, %v2226
        %2228 = vmatmul.f32.gmra.mxu0 %v1840
        %v2229 = vpop.f32.mrf.mxu0
        %v2230 = vadd.f32 %v2117, %v2229
        %2231 = vmatmul.f32.gmra.mxu0 %v1843
        %v2232 = vpop.f32.mrf.mxu0
        %v2233 = vadd.f32 %v2120, %v2232
        %2234 = vmatmul.f32.gmra.mxu0 %v1846
        %v2235 = vpop.f32.mrf.mxu0
        %v2236 = vadd.f32 %v2123, %v2235
        %2237 = vmatmul.f32.gmra.mxu0 %v1849
        %v2238 = vpop.f32.mrf.mxu0
        %v2239 = vadd.f32 %v2126, %v2238
        %2240 = vmatmul.f32.gmra.mxu0 %v1852
        %v2241 = vpop.f32.mrf.mxu0
        %v2242 = vadd.f32 %v2129, %v2241
        %2243 = vmatmul.f32.gmra.mxu0 %v1855
        %v2244 = vpop.f32.mrf.mxu0
        %v2245 = vadd.f32 %v2132, %v2244
        %2246 = vmatmul.f32.gmra.mxu0 %v1858
        %v2247 = vpop.f32.mrf.mxu0
        %v2248 = vadd.f32 %v2135, %v2247
        %2249 = vmatmul.f32.gmra.mxu0 %v1861
        %v2250 = vpop.f32.mrf.mxu0
        %v2251 = vadd.f32 %v2138, %v2250
        %2252 = vmatmul.f32.gmra.mxu0 %v1864
        %v2253 = vpop.f32.mrf.mxu0
        %v2254 = vadd.f32 %v2141, %v2253
        %2255 = vmatmul.f32.gmra.mxu0 %v1867
        %v2256 = vpop.f32.mrf.mxu0
        %v2257 = vadd.f32 %v2144, %v2256
        %2258 = vmatmul.f32.gmra.mxu0 %v1870
        %v2259 = vpop.f32.mrf.mxu0
        %v2260 = vadd.f32 %v2147, %v2259
        %2261 = vmatmul.f32.gmra.mxu0 %v1873
        %v2262 = vpop.f32.mrf.mxu0
        %v2263 = vadd.f32 %v2150, %v2262
        %2264 = vmatmul.f32.gmra.mxu0 %v1876
        %v2265 = vpop.f32.mrf.mxu0
        %v2266 = vadd.f32 %v2153, %v2265
        %2267 = vmatmul.f32.gmra.mxu0 %v1879
        %v2268 = vpop.f32.mrf.mxu0
        %v2269 = vadd.f32 %v2156, %v2268
        %2270 = vmatmul.f32.gmra.mxu0 %v1882
        %v2271 = vpop.f32.mrf.mxu0
        %v2272 = vadd.f32 %v2159, %v2271
        %2273 = vmatmul.f32.gmra.mxu0 %v1885
        %v2274 = vpop.f32.mrf.mxu0
        %v2275 = vadd.f32 %v2162, %v2274
        %2276 = vmatmul.f32.gmra.mxu0 %v1888
        %v2277 = vpop.f32.mrf.mxu0
        %v2278 = vadd.f32 %v2165, %v2277
        %2279 = vmatmul.f32.gmra.mxu0 %v1891
        %v2280 = vpop.f32.mrf.mxu0
        %v2281 = vadd.f32 %v2168, %v2280
        %2282 = vmatmul.f32.gmra.mxu0 %v1894
        %v2283 = vpop.f32.mrf.mxu0
        %v2284 = vadd.f32 %v2171, %v2283
        %2285 = vmatmul.f32.gmra.mxu0 %v1897
        %v2286 = vpop.f32.mrf.mxu0
        %v2287 = vadd.f32 %v2174, %v2286
        %2288 = vmatmul.f32.gmra.mxu0 %v1900
        %v2289 = vpop.f32.mrf.mxu0
        %v2290 = vadd.f32 %v2177, %v2289
        %2291 = vmatmul.f32.gmra.mxu0 %v1903
        %v2292 = vpop.f32.mrf.mxu0
        %v2293 = vadd.f32 %v2180, %v2292
        %2294 = vmatmul.f32.gmra.mxu0 %v1906
        %v2295 = vpop.f32.mrf.mxu0
        %v2296 = vadd.f32 %v2183, %v2295
        %2297 = vmatmul.f32.gmra.mxu0 %v1909
        %v2298 = vpop.f32.mrf.mxu0
        %v2299 = vadd.f32 %v2186, %v2298
        %2300 = vmatmul.f32.gmra.mxu0 %v1912
        %v2301 = vpop.f32.mrf.mxu0
        %v2302 = vadd.f32 %v2189, %v2301
        %2303 = vdwg.mxu0
        %v2304 = vmax.f32 %v2209, 0.0
        %v2305 = vmax.f32 %v2212, 0.0
        %v2306 = vmax.f32 %v2215, 0.0
        %v2307 = vmax.f32 %v2218, 0.0
        %v2308 = vmax.f32 %v2221, 0.0
        %v2309 = vmax.f32 %v2224, 0.0
        %v2310 = vmax.f32 %v2227, 0.0
        %v2311 = vmax.f32 %v2230, 0.0
        %v2312 = vmax.f32 %v2233, 0.0
        %v2313 = vmax.f32 %v2236, 0.0
        %v2314 = vmax.f32 %v2239, 0.0
        %v2315 = vmax.f32 %v2242, 0.0
        %v2316 = vmax.f32 %v2245, 0.0
        %v2317 = vmax.f32 %v2248, 0.0
        %v2318 = vmax.f32 %v2251, 0.0
        %v2319 = vmax.f32 %v2254, 0.0
        %v2320 = vmax.f32 %v2257, 0.0
        %v2321 = vmax.f32 %v2260, 0.0
        %v2322 = vmax.f32 %v2263, 0.0
        %v2323 = vmax.f32 %v2266, 0.0
        %v2324 = vmax.f32 %v2269, 0.0
        %v2325 = vmax.f32 %v2272, 0.0
        %v2326 = vmax.f32 %v2275, 0.0
        %v2327 = vmax.f32 %v2278, 0.0
        %v2328 = vmax.f32 %v2281, 0.0
        %v2329 = vmax.f32 %v2284, 0.0
        %v2330 = vmax.f32 %v2287, 0.0
        %v2331 = vmax.f32 %v2290, 0.0
        %v2332 = vmax.f32 %v2293, 0.0
        %v2333 = vmax.f32 %v2296, 0.0
        %v2334 = vmax.f32 %v2299, 0.0
        %v2335 = vmax.f32 %v2302, 0.0
        %2336 = vst.msk [vmem:[%s341 + $0x8] sm:$0xff] %vm331, %v2304
        %2337 = vst.msk [vmem:[%s341 + $0x10] sm:$0xff] %vm331, %v2305
        %2338 = vst.msk [vmem:[%s341 + $0x28] sm:$0xff] %vm331, %v2306
        %2339 = vst.msk [vmem:[%s341 + $0x30] sm:$0xff] %vm331, %v2307
        %2340 = vst.msk [vmem:[%s341 + $0x48] sm:$0xff] %vm331, %v2308
        %2341 = vst.msk [vmem:[%s341 + $0x50] sm:$0xff] %vm331, %v2309
        %2342 = vst.msk [vmem:[%s341 + $0x68] sm:$0xff] %vm331, %v2310
        %2343 = vst.msk [vmem:[%s341 + $0x70] sm:$0xff] %vm331, %v2311
        %2344 = vst.msk [vmem:[%s341 + $0x88] sm:$0xff] %vm331, %v2312
        %2345 = vst.msk [vmem:[%s341 + $0x90] sm:$0xff] %vm331, %v2313
        %2346 = vst.msk [vmem:[%s341 + $0xa8] sm:$0xff] %vm331, %v2314
        %2347 = vst.msk [vmem:[%s341 + $0xb0] sm:$0xff] %vm331, %v2315
        %2348 = vst.msk [vmem:[%s341 + $0xc8] sm:$0xff] %vm331, %v2316
        %2349 = vst.msk [vmem:[%s341 + $0xd0] sm:$0xff] %vm331, %v2317
        %2350 = vst.msk [vmem:[%s341 + $0xe8] sm:$0xff] %vm331, %v2318
        %2351 = vst.msk [vmem:[%s341 + $0xf0] sm:$0xff] %vm331, %v2319
        %2352 = vst.msk [vmem:[%s341 + $0x108] sm:$0xff] %vm331, %v2320
        %2353 = vst.msk [vmem:[%s341 + $0x110] sm:$0xff] %vm331, %v2321
        %2354 = vst.msk [vmem:[%s341 + $0x128] sm:$0xff] %vm331, %v2322
        %2355 = vst.msk [vmem:[%s341 + $0x130] sm:$0xff] %vm331, %v2323
        %2356 = vst.msk [vmem:[%s341 + $0x148] sm:$0xff] %vm331, %v2324
        %2357 = vst.msk [vmem:[%s341 + $0x150] sm:$0xff] %vm331, %v2325
        %2358 = vst.msk [vmem:[%s341 + $0x168] sm:$0xff] %vm331, %v2326
        %2359 = vst.msk [vmem:[%s341 + $0x170] sm:$0xff] %vm331, %v2327
        %2360 = vst.msk [vmem:[%s341 + $0x188] sm:$0xff] %vm331, %v2328
        %2361 = vst.msk [vmem:[%s341 + $0x190] sm:$0xff] %vm331, %v2329
        %2362 = vst.msk [vmem:[%s341 + $0x1a8] sm:$0xff] %vm331, %v2330
        %2363 = vst.msk [vmem:[%s341 + $0x1b0] sm:$0xff] %vm331, %v2331
        %2364 = vst.msk [vmem:[%s341 + $0x1c8] sm:$0xff] %vm331, %v2332
        %2365 = vst.msk [vmem:[%s341 + $0x1d0] sm:$0xff] %vm331, %v2333
        %2366 = vst.msk [vmem:[%s341 + $0x1e8] sm:$0xff] %vm331, %v2334
        %2367 = vst.msk [vmem:[%s341 + $0x1f0] sm:$0xff] %vm331, %v2335
        %v2368 = vld [vmem:[#allocation2 + $0x7] sm:$0xff]
        %v2369 = vld [vmem:[#allocation2 + $0xf] sm:$0xff]
        %v2370 = vld [vmem:[#allocation2 + $0x27] sm:$0xff]
        %v2371 = vld [vmem:[#allocation2 + $0x2f] sm:$0xff]
        %v2372 = vld [vmem:[#allocation2 + $0x47] sm:$0xff]
        %v2373 = vld [vmem:[#allocation2 + $0x4f] sm:$0xff]
        %v2374 = vld [vmem:[#allocation2 + $0x67] sm:$0xff]
        %v2375 = vld [vmem:[#allocation2 + $0x6f] sm:$0xff]
        %v2376 = vld [vmem:[#allocation2 + $0x87] sm:$0xff]
        %v2377 = vld [vmem:[#allocation2 + $0x8f] sm:$0xff]
        %v2378 = vld [vmem:[#allocation2 + $0xa7] sm:$0xff]
        %v2379 = vld [vmem:[#allocation2 + $0xaf] sm:$0xff]
        %v2380 = vld [vmem:[#allocation2 + $0xc7] sm:$0xff]
        %v2381 = vld [vmem:[#allocation2 + $0xcf] sm:$0xff]
        %v2382 = vld [vmem:[#allocation2 + $0xe7] sm:$0xff]
        %v2383 = vld [vmem:[#allocation2 + $0xef] sm:$0xff]
        %v2384 = vld [vmem:[#allocation2 + $0x107] sm:$0xff]
        %v2385 = vld [vmem:[#allocation2 + $0x10f] sm:$0xff]
        %v2386 = vld [vmem:[#allocation2 + $0x127] sm:$0xff]
        %v2387 = vld [vmem:[#allocation2 + $0x12f] sm:$0xff]
        %v2388 = vld [vmem:[#allocation2 + $0x147] sm:$0xff]
        %v2389 = vld [vmem:[#allocation2 + $0x14f] sm:$0xff]
        %v2390 = vld [vmem:[#allocation2 + $0x167] sm:$0xff]
        %v2391 = vld [vmem:[#allocation2 + $0x16f] sm:$0xff]
        %v2392 = vld [vmem:[#allocation2 + $0x187] sm:$0xff]
        %v2393 = vld [vmem:[#allocation2 + $0x18f] sm:$0xff]
        %v2394 = vld [vmem:[#allocation2 + $0x1a7] sm:$0xff]
        %v2395 = vld [vmem:[#allocation2 + $0x1af] sm:$0xff]
        %v2396 = vld [vmem:[#allocation2 + $0x1c7] sm:$0xff]
        %v2397 = vld [vmem:[#allocation2 + $0x1cf] sm:$0xff]
        %v2398 = vld [vmem:[#allocation2 + $0x1e7] sm:$0xff]
        %v2399 = vld [vmem:[#allocation2 + $0x1ef] sm:$0xff]
        %v2400 = vld [vmem:[#allocation2 + $0x8] sm:$0xff]
        %v2401 = vld [vmem:[#allocation2 + $0x10] sm:$0xff]
        %v2402 = vld [vmem:[#allocation2 + $0x28] sm:$0xff]
        %v2403 = vld [vmem:[#allocation2 + $0x30] sm:$0xff]
        %v2404 = vld [vmem:[#allocation2 + $0x48] sm:$0xff]
        %v2405 = vld [vmem:[#allocation2 + $0x50] sm:$0xff]
        %v2406 = vld [vmem:[#allocation2 + $0x68] sm:$0xff]
        %v2407 = vld [vmem:[#allocation2 + $0x70] sm:$0xff]
        %v2408 = vld [vmem:[#allocation2 + $0x88] sm:$0xff]
        %v2409 = vld [vmem:[#allocation2 + $0x90] sm:$0xff]
        %v2410 = vld [vmem:[#allocation2 + $0xa8] sm:$0xff]
        %v2411 = vld [vmem:[#allocation2 + $0xb0] sm:$0xff]
        %v2412 = vld [vmem:[#allocation2 + $0xc8] sm:$0xff]
        %v2413 = vld [vmem:[#allocation2 + $0xd0] sm:$0xff]
        %v2414 = vld [vmem:[#allocation2 + $0xe8] sm:$0xff]
        %v2415 = vld [vmem:[#allocation2 + $0xf0] sm:$0xff]
        %v2416 = vld [vmem:[#allocation2 + $0x108] sm:$0xff]
        %v2417 = vld [vmem:[#allocation2 + $0x110] sm:$0xff]
        %v2418 = vld [vmem:[#allocation2 + $0x128] sm:$0xff]
        %v2419 = vld [vmem:[#allocation2 + $0x130] sm:$0xff]
        %v2420 = vld [vmem:[#allocation2 + $0x148] sm:$0xff]
        %v2421 = vld [vmem:[#allocation2 + $0x150] sm:$0xff]
        %v2422 = vld [vmem:[#allocation2 + $0x168] sm:$0xff]
        %v2423 = vld [vmem:[#allocation2 + $0x170] sm:$0xff]
        %v2424 = vld [vmem:[#allocation2 + $0x188] sm:$0xff]
        %v2425 = vld [vmem:[#allocation2 + $0x190] sm:$0xff]
        %v2426 = vld [vmem:[#allocation2 + $0x1a8] sm:$0xff]
        %v2427 = vld [vmem:[#allocation2 + $0x1b0] sm:$0xff]
        %v2428 = vld [vmem:[#allocation2 + $0x1c8] sm:$0xff]
        %v2429 = vld [vmem:[#allocation2 + $0x1d0] sm:$0xff]
        %v2430 = vld [vmem:[#allocation2 + $0x1e8] sm:$0xff]
        %v2431 = vld [vmem:[#allocation2 + $0x1f0] sm:$0xff]
        %v2432 = vld [vmem:[#allocation2 + $0x9] sm:$0xff]
        %v2433 = vld [vmem:[#allocation2 + $0x11] sm:$0xff]
        %v2434 = vld [vmem:[#allocation2 + $0x29] sm:$0xff]
        %v2435 = vld [vmem:[#allocation2 + $0x31] sm:$0xff]
        %v2436 = vld [vmem:[#allocation2 + $0x49] sm:$0xff]
        %v2437 = vld [vmem:[#allocation2 + $0x51] sm:$0xff]
        %v2438 = vld [vmem:[#allocation2 + $0x69] sm:$0xff]
        %v2439 = vld [vmem:[#allocation2 + $0x71] sm:$0xff]
        %v2440 = vld [vmem:[#allocation2 + $0x89] sm:$0xff]
        %v2441 = vld [vmem:[#allocation2 + $0x91] sm:$0xff]
        %v2442 = vld [vmem:[#allocation2 + $0xa9] sm:$0xff]
        %v2443 = vld [vmem:[#allocation2 + $0xb1] sm:$0xff]
        %v2444 = vld [vmem:[#allocation2 + $0xc9] sm:$0xff]
        %v2445 = vld [vmem:[#allocation2 + $0xd1] sm:$0xff]
        %v2446 = vld [vmem:[#allocation2 + $0xe9] sm:$0xff]
        %v2447 = vld [vmem:[#allocation2 + $0xf1] sm:$0xff]
        %v2448 = vld [vmem:[#allocation2 + $0x109] sm:$0xff]
        %v2449 = vld [vmem:[#allocation2 + $0x111] sm:$0xff]
        %v2450 = vld [vmem:[#allocation2 + $0x129] sm:$0xff]
        %v2451 = vld [vmem:[#allocation2 + $0x131] sm:$0xff]
        %v2452 = vld [vmem:[#allocation2 + $0x149] sm:$0xff]
        %v2453 = vld [vmem:[#allocation2 + $0x151] sm:$0xff]
        %v2454 = vld [vmem:[#allocation2 + $0x169] sm:$0xff]
        %v2455 = vld [vmem:[#allocation2 + $0x171] sm:$0xff]
        %v2456 = vld [vmem:[#allocation2 + $0x189] sm:$0xff]
        %v2457 = vld [vmem:[#allocation2 + $0x191] sm:$0xff]
        %v2458 = vld [vmem:[#allocation2 + $0x1a9] sm:$0xff]
        %v2459 = vld [vmem:[#allocation2 + $0x1b1] sm:$0xff]
        %v2460 = vld [vmem:[#allocation2 + $0x1c9] sm:$0xff]
        %v2461 = vld [vmem:[#allocation2 + $0x1d1] sm:$0xff]
        %v2462 = vld [vmem:[#allocation2 + $0x1e9] sm:$0xff]
        %v2463 = vld [vmem:[#allocation2 + $0x1f1] sm:$0xff]
        %v2464 = vld [vmem:[%s341 + $0x7] sm:$0xff]
        %v2465 = vld [vmem:[%s341 + $0xf] sm:$0xff]
        %v2466 = vld [vmem:[%s341 + $0x27] sm:$0xff]
        %v2467 = vld [vmem:[%s341 + $0x2f] sm:$0xff]
        %v2468 = vld [vmem:[%s341 + $0x47] sm:$0xff]
        %v2469 = vld [vmem:[%s341 + $0x4f] sm:$0xff]
        %v2470 = vld [vmem:[%s341 + $0x67] sm:$0xff]
        %v2471 = vld [vmem:[%s341 + $0x6f] sm:$0xff]
        %v2472 = vld [vmem:[%s341 + $0x87] sm:$0xff]
        %v2473 = vld [vmem:[%s341 + $0x8f] sm:$0xff]
        %v2474 = vld [vmem:[%s341 + $0xa7] sm:$0xff]
        %v2475 = vld [vmem:[%s341 + $0xaf] sm:$0xff]
        %v2476 = vld [vmem:[%s341 + $0xc7] sm:$0xff]
        %v2477 = vld [vmem:[%s341 + $0xcf] sm:$0xff]
        %v2478 = vld [vmem:[%s341 + $0xe7] sm:$0xff]
        %v2479 = vld [vmem:[%s341 + $0xef] sm:$0xff]
        %v2480 = vld [vmem:[%s341 + $0x107] sm:$0xff]
        %v2481 = vld [vmem:[%s341 + $0x10f] sm:$0xff]
        %v2482 = vld [vmem:[%s341 + $0x127] sm:$0xff]
        %v2483 = vld [vmem:[%s341 + $0x12f] sm:$0xff]
        %v2484 = vld [vmem:[%s341 + $0x147] sm:$0xff]
        %v2485 = vld [vmem:[%s341 + $0x14f] sm:$0xff]
        %v2486 = vld [vmem:[%s341 + $0x167] sm:$0xff]
        %v2487 = vld [vmem:[%s341 + $0x16f] sm:$0xff]
        %v2488 = vld [vmem:[%s341 + $0x187] sm:$0xff]
        %v2489 = vld [vmem:[%s341 + $0x18f] sm:$0xff]
        %v2490 = vld [vmem:[%s341 + $0x1a7] sm:$0xff]
        %v2491 = vld [vmem:[%s341 + $0x1af] sm:$0xff]
        %v2492 = vld [vmem:[%s341 + $0x1c7] sm:$0xff]
        %v2493 = vld [vmem:[%s341 + $0x1cf] sm:$0xff]
        %v2494 = vld [vmem:[%s341 + $0x1e7] sm:$0xff]
        %v2495 = vld [vmem:[%s341 + $0x1ef] sm:$0xff]
        %2528 = vrot.lane.b32.xlu0 %v2400, 32
        %v2529 = vpop.permute.xlu0 %2528
        %2530 = vrot.lane.b32.xlu0 %v2401, 32
        %v2531 = vpop.permute.xlu0 %2530
        %2532 = vrot.lane.b32.xlu0 %v2402, 32
        %v2533 = vpop.permute.xlu0 %2532
        %2534 = vrot.lane.b32.xlu0 %v2403, 32
        %v2535 = vpop.permute.xlu0 %2534
        %2536 = vrot.lane.b32.xlu0 %v2404, 32
        %v2537 = vpop.permute.xlu0 %2536
        %2538 = vrot.lane.b32.xlu0 %v2405, 32
        %v2539 = vpop.permute.xlu0 %2538
        %2540 = vrot.lane.b32.xlu0 %v2406, 32
        %v2541 = vpop.permute.xlu0 %2540
        %2542 = vrot.lane.b32.xlu0 %v2407, 32
        %v2543 = vpop.permute.xlu0 %2542
        %2544 = vrot.lane.b32.xlu0 %v2408, 32
        %v2545 = vpop.permute.xlu0 %2544
        %2546 = vrot.lane.b32.xlu0 %v2409, 32
        %v2547 = vpop.permute.xlu0 %2546
        %2548 = vrot.lane.b32.xlu0 %v2410, 32
        %v2549 = vpop.permute.xlu0 %2548
        %2550 = vrot.lane.b32.xlu0 %v2411, 32
        %v2551 = vpop.permute.xlu0 %2550
        %2552 = vrot.lane.b32.xlu0 %v2412, 32
        %v2553 = vpop.permute.xlu0 %2552
        %2554 = vrot.lane.b32.xlu0 %v2413, 32
        %v2555 = vpop.permute.xlu0 %2554
        %2556 = vrot.lane.b32.xlu0 %v2414, 32
        %v2557 = vpop.permute.xlu0 %2556
        %2558 = vrot.lane.b32.xlu0 %v2415, 32
        %v2559 = vpop.permute.xlu0 %2558
        %2560 = vrot.lane.b32.xlu0 %v2416, 32
        %v2561 = vpop.permute.xlu0 %2560
        %2562 = vrot.lane.b32.xlu0 %v2417, 32
        %v2563 = vpop.permute.xlu0 %2562
        %2564 = vrot.lane.b32.xlu0 %v2418, 32
        %v2565 = vpop.permute.xlu0 %2564
        %2566 = vrot.lane.b32.xlu0 %v2419, 32
        %v2567 = vpop.permute.xlu0 %2566
        %2568 = vrot.lane.b32.xlu0 %v2420, 32
        %v2569 = vpop.permute.xlu0 %2568
        %2570 = vrot.lane.b32.xlu0 %v2421, 32
        %v2571 = vpop.permute.xlu0 %2570
        %2572 = vrot.lane.b32.xlu0 %v2422, 32
        %v2573 = vpop.permute.xlu0 %2572
        %2574 = vrot.lane.b32.xlu0 %v2423, 32
        %v2575 = vpop.permute.xlu0 %2574
        %2576 = vrot.lane.b32.xlu0 %v2424, 32
        %v2577 = vpop.permute.xlu0 %2576
        %2578 = vrot.lane.b32.xlu0 %v2425, 32
        %v2579 = vpop.permute.xlu0 %2578
        %2580 = vrot.lane.b32.xlu0 %v2426, 32
        %v2581 = vpop.permute.xlu0 %2580
        %2582 = vrot.lane.b32.xlu0 %v2427, 32
        %v2583 = vpop.permute.xlu0 %2582
        %2584 = vrot.lane.b32.xlu0 %v2428, 32
        %v2585 = vpop.permute.xlu0 %2584
        %2586 = vrot.lane.b32.xlu0 %v2429, 32
        %v2587 = vpop.permute.xlu0 %2586
        %2588 = vrot.lane.b32.xlu0 %v2430, 32
        %v2589 = vpop.permute.xlu0 %2588
        %2590 = vrot.lane.b32.xlu0 %v2431, 32
        %v2591 = vpop.permute.xlu0 %2590
        %2656 = vrot.lane.b32.xlu0 %v2432, 64
        %v2657 = vpop.permute.xlu0 %2656
        %2658 = vrot.lane.b32.xlu0 %v2433, 64
        %v2659 = vpop.permute.xlu0 %2658
        %2660 = vrot.lane.b32.xlu0 %v2434, 64
        %v2661 = vpop.permute.xlu0 %2660
        %2662 = vrot.lane.b32.xlu0 %v2435, 64
        %v2663 = vpop.permute.xlu0 %2662
        %2664 = vrot.lane.b32.xlu0 %v2436, 64
        %v2665 = vpop.permute.xlu0 %2664
        %2666 = vrot.lane.b32.xlu0 %v2437, 64
        %v2667 = vpop.permute.xlu0 %2666
        %2668 = vrot.lane.b32.xlu0 %v2438, 64
        %v2669 = vpop.permute.xlu0 %2668
        %2670 = vrot.lane.b32.xlu0 %v2439, 64
        %v2671 = vpop.permute.xlu0 %2670
        %2672 = vrot.lane.b32.xlu0 %v2440, 64
        %v2673 = vpop.permute.xlu0 %2672
        %2674 = vrot.lane.b32.xlu0 %v2441, 64
        %v2675 = vpop.permute.xlu0 %2674
        %2676 = vrot.lane.b32.xlu0 %v2442, 64
        %v2677 = vpop.permute.xlu0 %2676
        %2678 = vrot.lane.b32.xlu0 %v2443, 64
        %v2679 = vpop.permute.xlu0 %2678
        %2680 = vrot.lane.b32.xlu0 %v2444, 64
        %v2681 = vpop.permute.xlu0 %2680
        %2682 = vrot.lane.b32.xlu0 %v2445, 64
        %v2683 = vpop.permute.xlu0 %2682
        %2684 = vrot.lane.b32.xlu0 %v2446, 64
        %v2685 = vpop.permute.xlu0 %2684
        %2686 = vrot.lane.b32.xlu0 %v2447, 64
        %v2687 = vpop.permute.xlu0 %2686
        %2688 = vrot.lane.b32.xlu0 %v2448, 64
        %v2689 = vpop.permute.xlu0 %2688
        %2690 = vrot.lane.b32.xlu0 %v2449, 64
        %v2691 = vpop.permute.xlu0 %2690
        %2692 = vrot.lane.b32.xlu0 %v2450, 64
        %v2693 = vpop.permute.xlu0 %2692
        %2694 = vrot.lane.b32.xlu0 %v2451, 64
        %v2695 = vpop.permute.xlu0 %2694
        %2696 = vrot.lane.b32.xlu0 %v2452, 64
        %v2697 = vpop.permute.xlu0 %2696
        %2698 = vrot.lane.b32.xlu0 %v2453, 64
        %v2699 = vpop.permute.xlu0 %2698
        %2700 = vrot.lane.b32.xlu0 %v2454, 64
        %v2701 = vpop.permute.xlu0 %2700
        %2702 = vrot.lane.b32.xlu0 %v2455, 64
        %v2703 = vpop.permute.xlu0 %2702
        %2704 = vrot.lane.b32.xlu0 %v2456, 64
        %v2705 = vpop.permute.xlu0 %2704
        %2706 = vrot.lane.b32.xlu0 %v2457, 64
        %v2707 = vpop.permute.xlu0 %2706
        %2708 = vrot.lane.b32.xlu0 %v2458, 64
        %v2709 = vpop.permute.xlu0 %2708
        %2710 = vrot.lane.b32.xlu0 %v2459, 64
        %v2711 = vpop.permute.xlu0 %2710
        %2712 = vrot.lane.b32.xlu0 %v2460, 64
        %v2713 = vpop.permute.xlu0 %2712
        %2714 = vrot.lane.b32.xlu0 %v2461, 64
        %v2715 = vpop.permute.xlu0 %2714
        %2716 = vrot.lane.b32.xlu0 %v2462, 64
        %v2717 = vpop.permute.xlu0 %2716
        %2718 = vrot.lane.b32.xlu0 %v2463, 64
        %v2719 = vpop.permute.xlu0 %2718
        %2784 = vrot.lane.b32.xlu0 %v2464, 96
        %v2785 = vpop.permute.xlu0 %2784
        %2786 = vrot.lane.b32.xlu0 %v2465, 96
        %v2787 = vpop.permute.xlu0 %2786
        %2788 = vrot.lane.b32.xlu0 %v2466, 96
        %v2789 = vpop.permute.xlu0 %2788
        %2790 = vrot.lane.b32.xlu0 %v2467, 96
        %v2791 = vpop.permute.xlu0 %2790
        %2792 = vrot.lane.b32.xlu0 %v2468, 96
        %v2793 = vpop.permute.xlu0 %2792
        %2794 = vrot.lane.b32.xlu0 %v2469, 96
        %v2795 = vpop.permute.xlu0 %2794
        %2796 = vrot.lane.b32.xlu0 %v2470, 96
        %v2797 = vpop.permute.xlu0 %2796
        %2798 = vrot.lane.b32.xlu0 %v2471, 96
        %v2799 = vpop.permute.xlu0 %2798
        %2800 = vrot.lane.b32.xlu0 %v2472, 96
        %v2801 = vpop.permute.xlu0 %2800
        %2802 = vrot.lane.b32.xlu0 %v2473, 96
        %v2803 = vpop.permute.xlu0 %2802
        %2804 = vrot.lane.b32.xlu0 %v2474, 96
        %v2805 = vpop.permute.xlu0 %2804
        %2806 = vrot.lane.b32.xlu0 %v2475, 96
        %v2807 = vpop.permute.xlu0 %2806
        %2808 = vrot.lane.b32.xlu0 %v2476, 96
        %v2809 = vpop.permute.xlu0 %2808
        %2810 = vrot.lane.b32.xlu0 %v2477, 96
        %v2811 = vpop.permute.xlu0 %2810
        %2812 = vrot.lane.b32.xlu0 %v2478, 96
        %v2813 = vpop.permute.xlu0 %2812
        %2814 = vrot.lane.b32.xlu0 %v2479, 96
        %v2815 = vpop.permute.xlu0 %2814
        %2816 = vrot.lane.b32.xlu0 %v2480, 96
        %v2817 = vpop.permute.xlu0 %2816
        %2818 = vrot.lane.b32.xlu0 %v2481, 96
        %v2819 = vpop.permute.xlu0 %2818
        %2820 = vrot.lane.b32.xlu0 %v2482, 96
        %v2821 = vpop.permute.xlu0 %2820
        %2822 = vrot.lane.b32.xlu0 %v2483, 96
        %v2823 = vpop.permute.xlu0 %2822
        %2824 = vrot.lane.b32.xlu0 %v2484, 96
        %v2825 = vpop.permute.xlu0 %2824
        %2826 = vrot.lane.b32.xlu0 %v2485, 96
        %v2827 = vpop.permute.xlu0 %2826
        %2828 = vrot.lane.b32.xlu0 %v2486, 96
        %v2829 = vpop.permute.xlu0 %2828
        %2830 = vrot.lane.b32.xlu0 %v2487, 96
        %v2831 = vpop.permute.xlu0 %2830
        %2832 = vrot.lane.b32.xlu0 %v2488, 96
        %v2833 = vpop.permute.xlu0 %2832
        %2834 = vrot.lane.b32.xlu0 %v2489, 96
        %v2835 = vpop.permute.xlu0 %2834
        %2836 = vrot.lane.b32.xlu0 %v2490, 96
        %v2837 = vpop.permute.xlu0 %2836
        %2838 = vrot.lane.b32.xlu0 %v2491, 96
        %v2839 = vpop.permute.xlu0 %2838
        %2840 = vrot.lane.b32.xlu0 %v2492, 96
        %v2841 = vpop.permute.xlu0 %2840
        %2842 = vrot.lane.b32.xlu0 %v2493, 96
        %v2843 = vpop.permute.xlu0 %2842
        %2844 = vrot.lane.b32.xlu0 %v2494, 96
        %v2845 = vpop.permute.xlu0 %2844
        %2846 = vrot.lane.b32.xlu0 %v2495, 96
        %v2847 = vpop.permute.xlu0 %2846
        %v2880 = vsel %vm331, %v2368, %v2529
        %v2881 = vsel %vm331, %v2369, %v2531
        %v2882 = vsel %vm331, %v2370, %v2533
        %v2883 = vsel %vm331, %v2371, %v2535
        %v2884 = vsel %vm331, %v2372, %v2537
        %v2885 = vsel %vm331, %v2373, %v2539
        %v2886 = vsel %vm331, %v2374, %v2541
        %v2887 = vsel %vm331, %v2375, %v2543
        %v2888 = vsel %vm331, %v2376, %v2545
        %v2889 = vsel %vm331, %v2377, %v2547
        %v2890 = vsel %vm331, %v2378, %v2549
        %v2891 = vsel %vm331, %v2379, %v2551
        %v2892 = vsel %vm331, %v2380, %v2553
        %v2893 = vsel %vm331, %v2381, %v2555
        %v2894 = vsel %vm331, %v2382, %v2557
        %v2895 = vsel %vm331, %v2383, %v2559
        %v2896 = vsel %vm331, %v2384, %v2561
        %v2897 = vsel %vm331, %v2385, %v2563
        %v2898 = vsel %vm331, %v2386, %v2565
        %v2899 = vsel %vm331, %v2387, %v2567
        %v2900 = vsel %vm331, %v2388, %v2569
        %v2901 = vsel %vm331, %v2389, %v2571
        %v2902 = vsel %vm331, %v2390, %v2573
        %v2903 = vsel %vm331, %v2391, %v2575
        %v2904 = vsel %vm331, %v2392, %v2577
        %v2905 = vsel %vm331, %v2393, %v2579
        %v2906 = vsel %vm331, %v2394, %v2581
        %v2907 = vsel %vm331, %v2395, %v2583
        %v2908 = vsel %vm331, %v2396, %v2585
        %v2909 = vsel %vm331, %v2397, %v2587
        %v2910 = vsel %vm331, %v2398, %v2589
        %v2911 = vsel %vm331, %v2399, %v2591
        %v2912 = vsel %vm982, %v2880, %v2657
        %v2913 = vsel %vm982, %v2881, %v2659
        %v2914 = vsel %vm982, %v2882, %v2661
        %v2915 = vsel %vm982, %v2883, %v2663
        %v2916 = vsel %vm982, %v2884, %v2665
        %v2917 = vsel %vm982, %v2885, %v2667
        %v2918 = vsel %vm982, %v2886, %v2669
        %v2919 = vsel %vm982, %v2887, %v2671
        %v2920 = vsel %vm982, %v2888, %v2673
        %v2921 = vsel %vm982, %v2889, %v2675
        %v2922 = vsel %vm982, %v2890, %v2677
        %v2923 = vsel %vm982, %v2891, %v2679
        %v2924 = vsel %vm982, %v2892, %v2681
        %v2925 = vsel %vm982, %v2893, %v2683
        %v2926 = vsel %vm982, %v2894, %v2685
        %v2927 = vsel %vm982, %v2895, %v2687
        %v2928 = vsel %vm982, %v2896, %v2689
        %v2929 = vsel %vm982, %v2897, %v2691
        %v2930 = vsel %vm982, %v2898, %v2693
        %v2931 = vsel %vm982, %v2899, %v2695
        %v2932 = vsel %vm982, %v2900, %v2697
        %v2933 = vsel %vm982, %v2901, %v2699
        %v2934 = vsel %vm982, %v2902, %v2701
        %v2935 = vsel %vm982, %v2903, %v2703
        %v2936 = vsel %vm982, %v2904, %v2705
        %v2937 = vsel %vm982, %v2905, %v2707
        %v2938 = vsel %vm982, %v2906, %v2709
        %v2939 = vsel %vm982, %v2907, %v2711
        %v2940 = vsel %vm982, %v2908, %v2713
        %v2941 = vsel %vm982, %v2909, %v2715
        %v2942 = vsel %vm982, %v2910, %v2717
        %v2943 = vsel %vm982, %v2911, %v2719
        %v2944 = vsel %vm1015, %v2912, %v2785
        %v2945 = vsel %vm1015, %v2913, %v2787
        %v2946 = vsel %vm1015, %v2914, %v2789
        %v2947 = vsel %vm1015, %v2915, %v2791
        %v2948 = vsel %vm1015, %v2916, %v2793
        %v2949 = vsel %vm1015, %v2917, %v2795
        %v2950 = vsel %vm1015, %v2918, %v2797
        %v2951 = vsel %vm1015, %v2919, %v2799
        %v2952 = vsel %vm1015, %v2920, %v2801
        %v2953 = vsel %vm1015, %v2921, %v2803
        %v2954 = vsel %vm1015, %v2922, %v2805
        %v2955 = vsel %vm1015, %v2923, %v2807
        %v2956 = vsel %vm1015, %v2924, %v2809
        %v2957 = vsel %vm1015, %v2925, %v2811
        %v2958 = vsel %vm1015, %v2926, %v2813
        %v2959 = vsel %vm1015, %v2927, %v2815
        %v2960 = vsel %vm1015, %v2928, %v2817
        %v2961 = vsel %vm1015, %v2929, %v2819
        %v2962 = vsel %vm1015, %v2930, %v2821
        %v2963 = vsel %vm1015, %v2931, %v2823
        %v2964 = vsel %vm1015, %v2932, %v2825
        %v2965 = vsel %vm1015, %v2933, %v2827
        %v2966 = vsel %vm1015, %v2934, %v2829
        %v2967 = vsel %vm1015, %v2935, %v2831
        %v2968 = vsel %vm1015, %v2936, %v2833
        %v2969 = vsel %vm1015, %v2937, %v2835
        %v2970 = vsel %vm1015, %v2938, %v2837
        %v2971 = vsel %vm1015, %v2939, %v2839
        %v2972 = vsel %vm1015, %v2940, %v2841
        %v2973 = vsel %vm1015, %v2941, %v2843
        %v2974 = vsel %vm1015, %v2942, %v2845
        %v2975 = vsel %vm1015, %v2943, %v2847
        %2976 = vst [vmem:[#allocation3] sm:$0xff] %v2944
        %2977 = vst [vmem:[#allocation3 + $0x18] sm:$0xff] %v2945
        %2978 = vst [vmem:[#allocation3 + $0x30] sm:$0xff] %v2946
        %2979 = vst [vmem:[#allocation3 + $0x48] sm:$0xff] %v2947
        %2980 = vst [vmem:[#allocation3 + $0x60] sm:$0xff] %v2948
        %2981 = vst [vmem:[#allocation3 + $0x78] sm:$0xff] %v2949
        %2982 = vst [vmem:[#allocation3 + $0x90] sm:$0xff] %v2950
        %2983 = vst [vmem:[#allocation3 + $0xa8] sm:$0xff] %v2951
        %2984 = vst [vmem:[#allocation3 + $0xc0] sm:$0xff] %v2952
        %2985 = vst [vmem:[#allocation3 + $0xd8] sm:$0xff] %v2953
        %2986 = vst [vmem:[#allocation3 + $0xf0] sm:$0xff] %v2954
        %2987 = vst [vmem:[#allocation3 + $0x108] sm:$0xff] %v2955
        %2988 = vst [vmem:[#allocation3 + $0x120] sm:$0xff] %v2956
        %2989 = vst [vmem:[#allocation3 + $0x138] sm:$0xff] %v2957
        %2990 = vst [vmem:[#allocation3 + $0x150] sm:$0xff] %v2958
        %2991 = vst [vmem:[#allocation3 + $0x168] sm:$0xff] %v2959
        %2992 = vst [vmem:[#allocation3 + $0x180] sm:$0xff] %v2960
        %2993 = vst [vmem:[#allocation3 + $0x198] sm:$0xff] %v2961
        %2994 = vst [vmem:[#allocation3 + $0x1b0] sm:$0xff] %v2962
        %2995 = vst [vmem:[#allocation3 + $0x1c8] sm:$0xff] %v2963
        %2996 = vst [vmem:[#allocation3 + $0x1e0] sm:$0xff] %v2964
        %2997 = vst [vmem:[#allocation3 + $0x1f8] sm:$0xff] %v2965
        %2998 = vst [vmem:[#allocation3 + $0x210] sm:$0xff] %v2966
        %2999 = vst [vmem:[#allocation3 + $0x228] sm:$0xff] %v2967
        %3000 = vst [vmem:[#allocation3 + $0x240] sm:$0xff] %v2968
        %3001 = vst [vmem:[#allocation3 + $0x258] sm:$0xff] %v2969
        %3002 = vst [vmem:[#allocation3 + $0x270] sm:$0xff] %v2970
        %3003 = vst [vmem:[#allocation3 + $0x288] sm:$0xff] %v2971
        %3004 = vst [vmem:[#allocation3 + $0x2a0] sm:$0xff] %v2972
        %3005 = vst [vmem:[#allocation3 + $0x2b8] sm:$0xff] %v2973
        %3006 = vst [vmem:[#allocation3 + $0x2d0] sm:$0xff] %v2974
        %3007 = vst [vmem:[#allocation3 + $0x2e8] sm:$0xff] %v2975
        %v3008 = vld [vmem:[%s341 + $0x8] sm:$0xff]
        %v3009 = vld [vmem:[%s341 + $0x10] sm:$0xff]
        %v3010 = vld [vmem:[%s341 + $0x28] sm:$0xff]
        %v3011 = vld [vmem:[%s341 + $0x30] sm:$0xff]
        %v3012 = vld [vmem:[%s341 + $0x48] sm:$0xff]
        %v3013 = vld [vmem:[%s341 + $0x50] sm:$0xff]
        %v3014 = vld [vmem:[%s341 + $0x68] sm:$0xff]
        %v3015 = vld [vmem:[%s341 + $0x70] sm:$0xff]
        %v3016 = vld [vmem:[%s341 + $0x88] sm:$0xff]
        %v3017 = vld [vmem:[%s341 + $0x90] sm:$0xff]
        %v3018 = vld [vmem:[%s341 + $0xa8] sm:$0xff]
        %v3019 = vld [vmem:[%s341 + $0xb0] sm:$0xff]
        %v3020 = vld [vmem:[%s341 + $0xc8] sm:$0xff]
        %v3021 = vld [vmem:[%s341 + $0xd0] sm:$0xff]
        %v3022 = vld [vmem:[%s341 + $0xe8] sm:$0xff]
        %v3023 = vld [vmem:[%s341 + $0xf0] sm:$0xff]
        %v3024 = vld [vmem:[%s341 + $0x108] sm:$0xff]
        %v3025 = vld [vmem:[%s341 + $0x110] sm:$0xff]
        %v3026 = vld [vmem:[%s341 + $0x128] sm:$0xff]
        %v3027 = vld [vmem:[%s341 + $0x130] sm:$0xff]
        %v3028 = vld [vmem:[%s341 + $0x148] sm:$0xff]
        %v3029 = vld [vmem:[%s341 + $0x150] sm:$0xff]
        %v3030 = vld [vmem:[%s341 + $0x168] sm:$0xff]
        %v3031 = vld [vmem:[%s341 + $0x170] sm:$0xff]
        %v3032 = vld [vmem:[%s341 + $0x188] sm:$0xff]
        %v3033 = vld [vmem:[%s341 + $0x190] sm:$0xff]
        %v3034 = vld [vmem:[%s341 + $0x1a8] sm:$0xff]
        %v3035 = vld [vmem:[%s341 + $0x1b0] sm:$0xff]
        %v3036 = vld [vmem:[%s341 + $0x1c8] sm:$0xff]
        %v3037 = vld [vmem:[%s341 + $0x1d0] sm:$0xff]
        %v3038 = vld [vmem:[%s341 + $0x1e8] sm:$0xff]
        %v3039 = vld [vmem:[%s341 + $0x1f0] sm:$0xff]
        %v3040 = vld [vmem:[%s341 + $0x9] sm:$0xff]
        %v3041 = vld [vmem:[%s341 + $0x11] sm:$0xff]
        %v3042 = vld [vmem:[%s341 + $0x29] sm:$0xff]
        %v3043 = vld [vmem:[%s341 + $0x31] sm:$0xff]
        %v3044 = vld [vmem:[%s341 + $0x49] sm:$0xff]
        %v3045 = vld [vmem:[%s341 + $0x51] sm:$0xff]
        %v3046 = vld [vmem:[%s341 + $0x69] sm:$0xff]
        %v3047 = vld [vmem:[%s341 + $0x71] sm:$0xff]
        %v3048 = vld [vmem:[%s341 + $0x89] sm:$0xff]
        %v3049 = vld [vmem:[%s341 + $0x91] sm:$0xff]
        %v3050 = vld [vmem:[%s341 + $0xa9] sm:$0xff]
        %v3051 = vld [vmem:[%s341 + $0xb1] sm:$0xff]
        %v3052 = vld [vmem:[%s341 + $0xc9] sm:$0xff]
        %v3053 = vld [vmem:[%s341 + $0xd1] sm:$0xff]
        %v3054 = vld [vmem:[%s341 + $0xe9] sm:$0xff]
        %v3055 = vld [vmem:[%s341 + $0xf1] sm:$0xff]
        %v3056 = vld [vmem:[%s341 + $0x109] sm:$0xff]
        %v3057 = vld [vmem:[%s341 + $0x111] sm:$0xff]
        %v3058 = vld [vmem:[%s341 + $0x129] sm:$0xff]
        %v3059 = vld [vmem:[%s341 + $0x131] sm:$0xff]
        %v3060 = vld [vmem:[%s341 + $0x149] sm:$0xff]
        %v3061 = vld [vmem:[%s341 + $0x151] sm:$0xff]
        %v3062 = vld [vmem:[%s341 + $0x169] sm:$0xff]
        %v3063 = vld [vmem:[%s341 + $0x171] sm:$0xff]
        %v3064 = vld [vmem:[%s341 + $0x189] sm:$0xff]
        %v3065 = vld [vmem:[%s341 + $0x191] sm:$0xff]
        %v3066 = vld [vmem:[%s341 + $0x1a9] sm:$0xff]
        %v3067 = vld [vmem:[%s341 + $0x1b1] sm:$0xff]
        %v3068 = vld [vmem:[%s341 + $0x1c9] sm:$0xff]
        %v3069 = vld [vmem:[%s341 + $0x1d1] sm:$0xff]
        %v3070 = vld [vmem:[%s341 + $0x1e9] sm:$0xff]
        %v3071 = vld [vmem:[%s341 + $0x1f1] sm:$0xff]
        %v3072 = vld [vmem:[%s1144 + $0x7] sm:$0xff]
        %v3073 = vld [vmem:[%s1144 + $0xf] sm:$0xff]
        %v3074 = vld [vmem:[%s1144 + $0x27] sm:$0xff]
        %v3075 = vld [vmem:[%s1144 + $0x2f] sm:$0xff]
        %v3076 = vld [vmem:[%s1144 + $0x47] sm:$0xff]
        %v3077 = vld [vmem:[%s1144 + $0x4f] sm:$0xff]
        %v3078 = vld [vmem:[%s1144 + $0x67] sm:$0xff]
        %v3079 = vld [vmem:[%s1144 + $0x6f] sm:$0xff]
        %v3080 = vld [vmem:[%s1144 + $0x87] sm:$0xff]
        %v3081 = vld [vmem:[%s1144 + $0x8f] sm:$0xff]
        %v3082 = vld [vmem:[%s1144 + $0xa7] sm:$0xff]
        %v3083 = vld [vmem:[%s1144 + $0xaf] sm:$0xff]
        %v3084 = vld [vmem:[%s1144 + $0xc7] sm:$0xff]
        %v3085 = vld [vmem:[%s1144 + $0xcf] sm:$0xff]
        %v3086 = vld [vmem:[%s1144 + $0xe7] sm:$0xff]
        %v3087 = vld [vmem:[%s1144 + $0xef] sm:$0xff]
        %v3088 = vld [vmem:[%s1144 + $0x107] sm:$0xff]
        %v3089 = vld [vmem:[%s1144 + $0x10f] sm:$0xff]
        %v3090 = vld [vmem:[%s1144 + $0x127] sm:$0xff]
        %v3091 = vld [vmem:[%s1144 + $0x12f] sm:$0xff]
        %v3092 = vld [vmem:[%s1144 + $0x147] sm:$0xff]
        %v3093 = vld [vmem:[%s1144 + $0x14f] sm:$0xff]
        %v3094 = vld [vmem:[%s1144 + $0x167] sm:$0xff]
        %v3095 = vld [vmem:[%s1144 + $0x16f] sm:$0xff]
        %v3096 = vld [vmem:[%s1144 + $0x187] sm:$0xff]
        %v3097 = vld [vmem:[%s1144 + $0x18f] sm:$0xff]
        %v3098 = vld [vmem:[%s1144 + $0x1a7] sm:$0xff]
        %v3099 = vld [vmem:[%s1144 + $0x1af] sm:$0xff]
        %v3100 = vld [vmem:[%s1144 + $0x1c7] sm:$0xff]
        %v3101 = vld [vmem:[%s1144 + $0x1cf] sm:$0xff]
        %v3102 = vld [vmem:[%s1144 + $0x1e7] sm:$0xff]
        %v3103 = vld [vmem:[%s1144 + $0x1ef] sm:$0xff]
        %v3104 = vld [vmem:[%s1144 + $0x8] sm:$0xff]
        %v3105 = vld [vmem:[%s1144 + $0x10] sm:$0xff]
        %v3106 = vld [vmem:[%s1144 + $0x28] sm:$0xff]
        %v3107 = vld [vmem:[%s1144 + $0x30] sm:$0xff]
        %v3108 = vld [vmem:[%s1144 + $0x48] sm:$0xff]
        %v3109 = vld [vmem:[%s1144 + $0x50] sm:$0xff]
        %v3110 = vld [vmem:[%s1144 + $0x68] sm:$0xff]
        %v3111 = vld [vmem:[%s1144 + $0x70] sm:$0xff]
        %v3112 = vld [vmem:[%s1144 + $0x88] sm:$0xff]
        %v3113 = vld [vmem:[%s1144 + $0x90] sm:$0xff]
        %v3114 = vld [vmem:[%s1144 + $0xa8] sm:$0xff]
        %v3115 = vld [vmem:[%s1144 + $0xb0] sm:$0xff]
        %v3116 = vld [vmem:[%s1144 + $0xc8] sm:$0xff]
        %v3117 = vld [vmem:[%s1144 + $0xd0] sm:$0xff]
        %v3118 = vld [vmem:[%s1144 + $0xe8] sm:$0xff]
        %v3119 = vld [vmem:[%s1144 + $0xf0] sm:$0xff]
        %v3120 = vld [vmem:[%s1144 + $0x108] sm:$0xff]
        %v3121 = vld [vmem:[%s1144 + $0x110] sm:$0xff]
        %v3122 = vld [vmem:[%s1144 + $0x128] sm:$0xff]
        %v3123 = vld [vmem:[%s1144 + $0x130] sm:$0xff]
        %v3124 = vld [vmem:[%s1144 + $0x148] sm:$0xff]
        %v3125 = vld [vmem:[%s1144 + $0x150] sm:$0xff]
        %v3126 = vld [vmem:[%s1144 + $0x168] sm:$0xff]
        %v3127 = vld [vmem:[%s1144 + $0x170] sm:$0xff]
        %v3128 = vld [vmem:[%s1144 + $0x188] sm:$0xff]
        %v3129 = vld [vmem:[%s1144 + $0x190] sm:$0xff]
        %v3130 = vld [vmem:[%s1144 + $0x1a8] sm:$0xff]
        %v3131 = vld [vmem:[%s1144 + $0x1b0] sm:$0xff]
        %v3132 = vld [vmem:[%s1144 + $0x1c8] sm:$0xff]
        %v3133 = vld [vmem:[%s1144 + $0x1d0] sm:$0xff]
        %v3134 = vld [vmem:[%s1144 + $0x1e8] sm:$0xff]
        %v3135 = vld [vmem:[%s1144 + $0x1f0] sm:$0xff]
        %3168 = vrot.lane.b32.xlu0 %v3040, 32
        %v3169 = vpop.permute.xlu0 %3168
        %3170 = vrot.lane.b32.xlu0 %v3041, 32
        %v3171 = vpop.permute.xlu0 %3170
        %3172 = vrot.lane.b32.xlu0 %v3042, 32
        %v3173 = vpop.permute.xlu0 %3172
        %3174 = vrot.lane.b32.xlu0 %v3043, 32
        %v3175 = vpop.permute.xlu0 %3174
        %3176 = vrot.lane.b32.xlu0 %v3044, 32
        %v3177 = vpop.permute.xlu0 %3176
        %3178 = vrot.lane.b32.xlu0 %v3045, 32
        %v3179 = vpop.permute.xlu0 %3178
        %3180 = vrot.lane.b32.xlu0 %v3046, 32
        %v3181 = vpop.permute.xlu0 %3180
        %3182 = vrot.lane.b32.xlu0 %v3047, 32
        %v3183 = vpop.permute.xlu0 %3182
        %3184 = vrot.lane.b32.xlu0 %v3048, 32
        %v3185 = vpop.permute.xlu0 %3184
        %3186 = vrot.lane.b32.xlu0 %v3049, 32
        %v3187 = vpop.permute.xlu0 %3186
        %3188 = vrot.lane.b32.xlu0 %v3050, 32
        %v3189 = vpop.permute.xlu0 %3188
        %3190 = vrot.lane.b32.xlu0 %v3051, 32
        %v3191 = vpop.permute.xlu0 %3190
        %3192 = vrot.lane.b32.xlu0 %v3052, 32
        %v3193 = vpop.permute.xlu0 %3192
        %3194 = vrot.lane.b32.xlu0 %v3053, 32
        %v3195 = vpop.permute.xlu0 %3194
        %3196 = vrot.lane.b32.xlu0 %v3054, 32
        %v3197 = vpop.permute.xlu0 %3196
        %3198 = vrot.lane.b32.xlu0 %v3055, 32
        %v3199 = vpop.permute.xlu0 %3198
        %3200 = vrot.lane.b32.xlu0 %v3056, 32
        %v3201 = vpop.permute.xlu0 %3200
        %3202 = vrot.lane.b32.xlu0 %v3057, 32
        %v3203 = vpop.permute.xlu0 %3202
        %3204 = vrot.lane.b32.xlu0 %v3058, 32
        %v3205 = vpop.permute.xlu0 %3204
        %3206 = vrot.lane.b32.xlu0 %v3059, 32
        %v3207 = vpop.permute.xlu0 %3206
        %3208 = vrot.lane.b32.xlu0 %v3060, 32
        %v3209 = vpop.permute.xlu0 %3208
        %3210 = vrot.lane.b32.xlu0 %v3061, 32
        %v3211 = vpop.permute.xlu0 %3210
        %3212 = vrot.lane.b32.xlu0 %v3062, 32
        %v3213 = vpop.permute.xlu0 %3212
        %3214 = vrot.lane.b32.xlu0 %v3063, 32
        %v3215 = vpop.permute.xlu0 %3214
        %3216 = vrot.lane.b32.xlu0 %v3064, 32
        %v3217 = vpop.permute.xlu0 %3216
        %3218 = vrot.lane.b32.xlu0 %v3065, 32
        %v3219 = vpop.permute.xlu0 %3218
        %3220 = vrot.lane.b32.xlu0 %v3066, 32
        %v3221 = vpop.permute.xlu0 %3220
        %3222 = vrot.lane.b32.xlu0 %v3067, 32
        %v3223 = vpop.permute.xlu0 %3222
        %3224 = vrot.lane.b32.xlu0 %v3068, 32
        %v3225 = vpop.permute.xlu0 %3224
        %3226 = vrot.lane.b32.xlu0 %v3069, 32
        %v3227 = vpop.permute.xlu0 %3226
        %3228 = vrot.lane.b32.xlu0 %v3070, 32
        %v3229 = vpop.permute.xlu0 %3228
        %3230 = vrot.lane.b32.xlu0 %v3071, 32
        %v3231 = vpop.permute.xlu0 %3230
        %3296 = vrot.lane.b32.xlu0 %v3072, 64
        %v3297 = vpop.permute.xlu0 %3296
        %3298 = vrot.lane.b32.xlu0 %v3073, 64
        %v3299 = vpop.permute.xlu0 %3298
        %3300 = vrot.lane.b32.xlu0 %v3074, 64
        %v3301 = vpop.permute.xlu0 %3300
        %3302 = vrot.lane.b32.xlu0 %v3075, 64
        %v3303 = vpop.permute.xlu0 %3302
        %3304 = vrot.lane.b32.xlu0 %v3076, 64
        %v3305 = vpop.permute.xlu0 %3304
        %3306 = vrot.lane.b32.xlu0 %v3077, 64
        %v3307 = vpop.permute.xlu0 %3306
        %3308 = vrot.lane.b32.xlu0 %v3078, 64
        %v3309 = vpop.permute.xlu0 %3308
        %3310 = vrot.lane.b32.xlu0 %v3079, 64
        %v3311 = vpop.permute.xlu0 %3310
        %3312 = vrot.lane.b32.xlu0 %v3080, 64
        %v3313 = vpop.permute.xlu0 %3312
        %3314 = vrot.lane.b32.xlu0 %v3081, 64
        %v3315 = vpop.permute.xlu0 %3314
        %3316 = vrot.lane.b32.xlu0 %v3082, 64
        %v3317 = vpop.permute.xlu0 %3316
        %3318 = vrot.lane.b32.xlu0 %v3083, 64
        %v3319 = vpop.permute.xlu0 %3318
        %3320 = vrot.lane.b32.xlu0 %v3084, 64
        %v3321 = vpop.permute.xlu0 %3320
        %3322 = vrot.lane.b32.xlu0 %v3085, 64
        %v3323 = vpop.permute.xlu0 %3322
        %3324 = vrot.lane.b32.xlu0 %v3086, 64
        %v3325 = vpop.permute.xlu0 %3324
        %3326 = vrot.lane.b32.xlu0 %v3087, 64
        %v3327 = vpop.permute.xlu0 %3326
        %3328 = vrot.lane.b32.xlu0 %v3088, 64
        %v3329 = vpop.permute.xlu0 %3328
        %3330 = vrot.lane.b32.xlu0 %v3089, 64
        %v3331 = vpop.permute.xlu0 %3330
        %3332 = vrot.lane.b32.xlu0 %v3090, 64
        %v3333 = vpop.permute.xlu0 %3332
        %3334 = vrot.lane.b32.xlu0 %v3091, 64
        %v3335 = vpop.permute.xlu0 %3334
        %3336 = vrot.lane.b32.xlu0 %v3092, 64
        %v3337 = vpop.permute.xlu0 %3336
        %3338 = vrot.lane.b32.xlu0 %v3093, 64
        %v3339 = vpop.permute.xlu0 %3338
        %3340 = vrot.lane.b32.xlu0 %v3094, 64
        %v3341 = vpop.permute.xlu0 %3340
        %3342 = vrot.lane.b32.xlu0 %v3095, 64
        %v3343 = vpop.permute.xlu0 %3342
        %3344 = vrot.lane.b32.xlu0 %v3096, 64
        %v3345 = vpop.permute.xlu0 %3344
        %3346 = vrot.lane.b32.xlu0 %v3097, 64
        %v3347 = vpop.permute.xlu0 %3346
        %3348 = vrot.lane.b32.xlu0 %v3098, 64
        %v3349 = vpop.permute.xlu0 %3348
        %3350 = vrot.lane.b32.xlu0 %v3099, 64
        %v3351 = vpop.permute.xlu0 %3350
        %3352 = vrot.lane.b32.xlu0 %v3100, 64
        %v3353 = vpop.permute.xlu0 %3352
        %3354 = vrot.lane.b32.xlu0 %v3101, 64
        %v3355 = vpop.permute.xlu0 %3354
        %3356 = vrot.lane.b32.xlu0 %v3102, 64
        %v3357 = vpop.permute.xlu0 %3356
        %3358 = vrot.lane.b32.xlu0 %v3103, 64
        %v3359 = vpop.permute.xlu0 %3358
        %3424 = vrot.lane.b32.xlu0 %v3104, 96
        %v3425 = vpop.permute.xlu0 %3424
        %3426 = vrot.lane.b32.xlu0 %v3105, 96
        %v3427 = vpop.permute.xlu0 %3426
        %3428 = vrot.lane.b32.xlu0 %v3106, 96
        %v3429 = vpop.permute.xlu0 %3428
        %3430 = vrot.lane.b32.xlu0 %v3107, 96
        %v3431 = vpop.permute.xlu0 %3430
        %3432 = vrot.lane.b32.xlu0 %v3108, 96
        %v3433 = vpop.permute.xlu0 %3432
        %3434 = vrot.lane.b32.xlu0 %v3109, 96
        %v3435 = vpop.permute.xlu0 %3434
        %3436 = vrot.lane.b32.xlu0 %v3110, 96
        %v3437 = vpop.permute.xlu0 %3436
        %3438 = vrot.lane.b32.xlu0 %v3111, 96
        %v3439 = vpop.permute.xlu0 %3438
        %3440 = vrot.lane.b32.xlu0 %v3112, 96
        %v3441 = vpop.permute.xlu0 %3440
        %3442 = vrot.lane.b32.xlu0 %v3113, 96
        %v3443 = vpop.permute.xlu0 %3442
        %3444 = vrot.lane.b32.xlu0 %v3114, 96
        %v3445 = vpop.permute.xlu0 %3444
        %3446 = vrot.lane.b32.xlu0 %v3115, 96
        %v3447 = vpop.permute.xlu0 %3446
        %3448 = vrot.lane.b32.xlu0 %v3116, 96
        %v3449 = vpop.permute.xlu0 %3448
        %3450 = vrot.lane.b32.xlu0 %v3117, 96
        %v3451 = vpop.permute.xlu0 %3450
        %3452 = vrot.lane.b32.xlu0 %v3118, 96
        %v3453 = vpop.permute.xlu0 %3452
        %3454 = vrot.lane.b32.xlu0 %v3119, 96
        %v3455 = vpop.permute.xlu0 %3454
        %3456 = vrot.lane.b32.xlu0 %v3120, 96
        %v3457 = vpop.permute.xlu0 %3456
        %3458 = vrot.lane.b32.xlu0 %v3121, 96
        %v3459 = vpop.permute.xlu0 %3458
        %3460 = vrot.lane.b32.xlu0 %v3122, 96
        %v3461 = vpop.permute.xlu0 %3460
        %3462 = vrot.lane.b32.xlu0 %v3123, 96
        %v3463 = vpop.permute.xlu0 %3462
        %3464 = vrot.lane.b32.xlu0 %v3124, 96
        %v3465 = vpop.permute.xlu0 %3464
        %3466 = vrot.lane.b32.xlu0 %v3125, 96
        %v3467 = vpop.permute.xlu0 %3466
        %3468 = vrot.lane.b32.xlu0 %v3126, 96
        %v3469 = vpop.permute.xlu0 %3468
        %3470 = vrot.lane.b32.xlu0 %v3127, 96
        %v3471 = vpop.permute.xlu0 %3470
        %3472 = vrot.lane.b32.xlu0 %v3128, 96
        %v3473 = vpop.permute.xlu0 %3472
        %3474 = vrot.lane.b32.xlu0 %v3129, 96
        %v3475 = vpop.permute.xlu0 %3474
        %3476 = vrot.lane.b32.xlu0 %v3130, 96
        %v3477 = vpop.permute.xlu0 %3476
        %3478 = vrot.lane.b32.xlu0 %v3131, 96
        %v3479 = vpop.permute.xlu0 %3478
        %3480 = vrot.lane.b32.xlu0 %v3132, 96
        %v3481 = vpop.permute.xlu0 %3480
        %3482 = vrot.lane.b32.xlu0 %v3133, 96
        %v3483 = vpop.permute.xlu0 %3482
        %3484 = vrot.lane.b32.xlu0 %v3134, 96
        %v3485 = vpop.permute.xlu0 %3484
        %3486 = vrot.lane.b32.xlu0 %v3135, 96
        %v3487 = vpop.permute.xlu0 %3486
        %v3520 = vsel %vm331, %v3008, %v3169
        %v3521 = vsel %vm331, %v3009, %v3171
        %v3522 = vsel %vm331, %v3010, %v3173
        %v3523 = vsel %vm331, %v3011, %v3175
        %v3524 = vsel %vm331, %v3012, %v3177
        %v3525 = vsel %vm331, %v3013, %v3179
        %v3526 = vsel %vm331, %v3014, %v3181
        %v3527 = vsel %vm331, %v3015, %v3183
        %v3528 = vsel %vm331, %v3016, %v3185
        %v3529 = vsel %vm331, %v3017, %v3187
        %v3530 = vsel %vm331, %v3018, %v3189
        %v3531 = vsel %vm331, %v3019, %v3191
        %v3532 = vsel %vm331, %v3020, %v3193
        %v3533 = vsel %vm331, %v3021, %v3195
        %v3534 = vsel %vm331, %v3022, %v3197
        %v3535 = vsel %vm331, %v3023, %v3199
        %v3536 = vsel %vm331, %v3024, %v3201
        %v3537 = vsel %vm331, %v3025, %v3203
        %v3538 = vsel %vm331, %v3026, %v3205
        %v3539 = vsel %vm331, %v3027, %v3207
        %v3540 = vsel %vm331, %v3028, %v3209
        %v3541 = vsel %vm331, %v3029, %v3211
        %v3542 = vsel %vm331, %v3030, %v3213
        %v3543 = vsel %vm331, %v3031, %v3215
        %v3544 = vsel %vm331, %v3032, %v3217
        %v3545 = vsel %vm331, %v3033, %v3219
        %v3546 = vsel %vm331, %v3034, %v3221
        %v3547 = vsel %vm331, %v3035, %v3223
        %v3548 = vsel %vm331, %v3036, %v3225
        %v3549 = vsel %vm331, %v3037, %v3227
        %v3550 = vsel %vm331, %v3038, %v3229
        %v3551 = vsel %vm331, %v3039, %v3231
        %v3552 = vsel %vm982, %v3520, %v3297
        %v3553 = vsel %vm982, %v3521, %v3299
        %v3554 = vsel %vm982, %v3522, %v3301
        %v3555 = vsel %vm982, %v3523, %v3303
        %v3556 = vsel %vm982, %v3524, %v3305
        %v3557 = vsel %vm982, %v3525, %v3307
        %v3558 = vsel %vm982, %v3526, %v3309
        %v3559 = vsel %vm982, %v3527, %v3311
        %v3560 = vsel %vm982, %v3528, %v3313
        %v3561 = vsel %vm982, %v3529, %v3315
        %v3562 = vsel %vm982, %v3530, %v3317
        %v3563 = vsel %vm982, %v3531, %v3319
        %v3564 = vsel %vm982, %v3532, %v3321
        %v3565 = vsel %vm982, %v3533, %v3323
        %v3566 = vsel %vm982, %v3534, %v3325
        %v3567 = vsel %vm982, %v3535, %v3327
        %v3568 = vsel %vm982, %v3536, %v3329
        %v3569 = vsel %vm982, %v3537, %v3331
        %v3570 = vsel %vm982, %v3538, %v3333
        %v3571 = vsel %vm982, %v3539, %v3335
        %v3572 = vsel %vm982, %v3540, %v3337
        %v3573 = vsel %vm982, %v3541, %v3339
        %v3574 = vsel %vm982, %v3542, %v3341
        %v3575 = vsel %vm982, %v3543, %v3343
        %v3576 = vsel %vm982, %v3544, %v3345
        %v3577 = vsel %vm982, %v3545, %v3347
        %v3578 = vsel %vm982, %v3546, %v3349
        %v3579 = vsel %vm982, %v3547, %v3351
        %v3580 = vsel %vm982, %v3548, %v3353
        %v3581 = vsel %vm982, %v3549, %v3355
        %v3582 = vsel %vm982, %v3550, %v3357
        %v3583 = vsel %vm982, %v3551, %v3359
        %v3584 = vsel %vm1015, %v3552, %v3425
        %v3585 = vsel %vm1015, %v3553, %v3427
        %v3586 = vsel %vm1015, %v3554, %v3429
        %v3587 = vsel %vm1015, %v3555, %v3431
        %v3588 = vsel %vm1015, %v3556, %v3433
        %v3589 = vsel %vm1015, %v3557, %v3435
        %v3590 = vsel %vm1015, %v3558, %v3437
        %v3591 = vsel %vm1015, %v3559, %v3439
        %v3592 = vsel %vm1015, %v3560, %v3441
        %v3593 = vsel %vm1015, %v3561, %v3443
        %v3594 = vsel %vm1015, %v3562, %v3445
        %v3595 = vsel %vm1015, %v3563, %v3447
        %v3596 = vsel %vm1015, %v3564, %v3449
        %v3597 = vsel %vm1015, %v3565, %v3451
        %v3598 = vsel %vm1015, %v3566, %v3453
        %v3599 = vsel %vm1015, %v3567, %v3455
        %v3600 = vsel %vm1015, %v3568, %v3457
        %v3601 = vsel %vm1015, %v3569, %v3459
        %v3602 = vsel %vm1015, %v3570, %v3461
        %v3603 = vsel %vm1015, %v3571, %v3463
        %v3604 = vsel %vm1015, %v3572, %v3465
        %v3605 = vsel %vm1015, %v3573, %v3467
        %v3606 = vsel %vm1015, %v3574, %v3469
        %v3607 = vsel %vm1015, %v3575, %v3471
        %v3608 = vsel %vm1015, %v3576, %v3473
        %v3609 = vsel %vm1015, %v3577, %v3475
        %v3610 = vsel %vm1015, %v3578, %v3477
        %v3611 = vsel %vm1015, %v3579, %v3479
        %v3612 = vsel %vm1015, %v3580, %v3481
        %v3613 = vsel %vm1015, %v3581, %v3483
        %v3614 = vsel %vm1015, %v3582, %v3485
        %v3615 = vsel %vm1015, %v3583, %v3487
        %3616 = vst [vmem:[#allocation3 + $0x8] sm:$0xff] %v3584
        %3617 = vst [vmem:[#allocation3 + $0x20] sm:$0xff] %v3585
        %3618 = vst [vmem:[#allocation3 + $0x38] sm:$0xff] %v3586
        %3619 = vst [vmem:[#allocation3 + $0x50] sm:$0xff] %v3587
        %3620 = vst [vmem:[#allocation3 + $0x68] sm:$0xff] %v3588
        %3621 = vst [vmem:[#allocation3 + $0x80] sm:$0xff] %v3589
        %3622 = vst [vmem:[#allocation3 + $0x98] sm:$0xff] %v3590
        %3623 = vst [vmem:[#allocation3 + $0xb0] sm:$0xff] %v3591
        %3624 = vst [vmem:[#allocation3 + $0xc8] sm:$0xff] %v3592
        %3625 = vst [vmem:[#allocation3 + $0xe0] sm:$0xff] %v3593
        %3626 = vst [vmem:[#allocation3 + $0xf8] sm:$0xff] %v3594
        %3627 = vst [vmem:[#allocation3 + $0x110] sm:$0xff] %v3595
        %3628 = vst [vmem:[#allocation3 + $0x128] sm:$0xff] %v3596
        %3629 = vst [vmem:[#allocation3 + $0x140] sm:$0xff] %v3597
        %3630 = vst [vmem:[#allocation3 + $0x158] sm:$0xff] %v3598
        %3631 = vst [vmem:[#allocation3 + $0x170] sm:$0xff] %v3599
        %3632 = vst [vmem:[#allocation3 + $0x188] sm:$0xff] %v3600
        %3633 = vst [vmem:[#allocation3 + $0x1a0] sm:$0xff] %v3601
        %3634 = vst [vmem:[#allocation3 + $0x1b8] sm:$0xff] %v3602
        %3635 = vst [vmem:[#allocation3 + $0x1d0] sm:$0xff] %v3603
        %3636 = vst [vmem:[#allocation3 + $0x1e8] sm:$0xff] %v3604
        %3637 = vst [vmem:[#allocation3 + $0x200] sm:$0xff] %v3605
        %3638 = vst [vmem:[#allocation3 + $0x218] sm:$0xff] %v3606
        %3639 = vst [vmem:[#allocation3 + $0x230] sm:$0xff] %v3607
        %3640 = vst [vmem:[#allocation3 + $0x248] sm:$0xff] %v3608
        %3641 = vst [vmem:[#allocation3 + $0x260] sm:$0xff] %v3609
        %3642 = vst [vmem:[#allocation3 + $0x278] sm:$0xff] %v3610
        %3643 = vst [vmem:[#allocation3 + $0x290] sm:$0xff] %v3611
        %3644 = vst [vmem:[#allocation3 + $0x2a8] sm:$0xff] %v3612
        %3645 = vst [vmem:[#allocation3 + $0x2c0] sm:$0xff] %v3613
        %3646 = vst [vmem:[#allocation3 + $0x2d8] sm:$0xff] %v3614
        %3647 = vst [vmem:[#allocation3 + $0x2f0] sm:$0xff] %v3615
        %v3648 = vld [vmem:[%s1144 + $0x9] sm:$0xff]
        %v3649 = vld [vmem:[%s1144 + $0x11] sm:$0xff]
        %v3650 = vld [vmem:[%s1144 + $0x29] sm:$0xff]
        %v3651 = vld [vmem:[%s1144 + $0x31] sm:$0xff]
        %v3652 = vld [vmem:[%s1144 + $0x49] sm:$0xff]
        %v3653 = vld [vmem:[%s1144 + $0x51] sm:$0xff]
        %v3654 = vld [vmem:[%s1144 + $0x69] sm:$0xff]
        %v3655 = vld [vmem:[%s1144 + $0x71] sm:$0xff]
        %v3656 = vld [vmem:[%s1144 + $0x89] sm:$0xff]
        %v3657 = vld [vmem:[%s1144 + $0x91] sm:$0xff]
        %v3658 = vld [vmem:[%s1144 + $0xa9] sm:$0xff]
        %v3659 = vld [vmem:[%s1144 + $0xb1] sm:$0xff]
        %v3660 = vld [vmem:[%s1144 + $0xc9] sm:$0xff]
        %v3661 = vld [vmem:[%s1144 + $0xd1] sm:$0xff]
        %v3662 = vld [vmem:[%s1144 + $0xe9] sm:$0xff]
        %v3663 = vld [vmem:[%s1144 + $0xf1] sm:$0xff]
        %v3664 = vld [vmem:[%s1144 + $0x109] sm:$0xff]
        %v3665 = vld [vmem:[%s1144 + $0x111] sm:$0xff]
        %v3666 = vld [vmem:[%s1144 + $0x129] sm:$0xff]
        %v3667 = vld [vmem:[%s1144 + $0x131] sm:$0xff]
        %v3668 = vld [vmem:[%s1144 + $0x149] sm:$0xff]
        %v3669 = vld [vmem:[%s1144 + $0x151] sm:$0xff]
        %v3670 = vld [vmem:[%s1144 + $0x169] sm:$0xff]
        %v3671 = vld [vmem:[%s1144 + $0x171] sm:$0xff]
        %v3672 = vld [vmem:[%s1144 + $0x189] sm:$0xff]
        %v3673 = vld [vmem:[%s1144 + $0x191] sm:$0xff]
        %v3674 = vld [vmem:[%s1144 + $0x1a9] sm:$0xff]
        %v3675 = vld [vmem:[%s1144 + $0x1b1] sm:$0xff]
        %v3676 = vld [vmem:[%s1144 + $0x1c9] sm:$0xff]
        %v3677 = vld [vmem:[%s1144 + $0x1d1] sm:$0xff]
        %v3678 = vld [vmem:[%s1144 + $0x1e9] sm:$0xff]
        %v3679 = vld [vmem:[%s1144 + $0x1f1] sm:$0xff]
        %v3680 = vsel %vm331, %v3648, 0.0
        %v3681 = vsel %vm331, %v3649, 0.0
        %v3682 = vsel %vm331, %v3650, 0.0
        %v3683 = vsel %vm331, %v3651, 0.0
        %v3684 = vsel %vm331, %v3652, 0.0
        %v3685 = vsel %vm331, %v3653, 0.0
        %v3686 = vsel %vm331, %v3654, 0.0
        %v3687 = vsel %vm331, %v3655, 0.0
        %v3688 = vsel %vm331, %v3656, 0.0
        %v3689 = vsel %vm331, %v3657, 0.0
        %v3690 = vsel %vm331, %v3658, 0.0
        %v3691 = vsel %vm331, %v3659, 0.0
        %v3692 = vsel %vm331, %v3660, 0.0
        %v3693 = vsel %vm331, %v3661, 0.0
        %v3694 = vsel %vm331, %v3662, 0.0
        %v3695 = vsel %vm331, %v3663, 0.0
        %v3696 = vsel %vm331, %v3664, 0.0
        %v3697 = vsel %vm331, %v3665, 0.0
        %v3698 = vsel %vm331, %v3666, 0.0
        %v3699 = vsel %vm331, %v3667, 0.0
        %v3700 = vsel %vm331, %v3668, 0.0
        %v3701 = vsel %vm331, %v3669, 0.0
        %v3702 = vsel %vm331, %v3670, 0.0
        %v3703 = vsel %vm331, %v3671, 0.0
        %v3704 = vsel %vm331, %v3672, 0.0
        %v3705 = vsel %vm331, %v3673, 0.0
        %v3706 = vsel %vm331, %v3674, 0.0
        %v3707 = vsel %vm331, %v3675, 0.0
        %v3708 = vsel %vm331, %v3676, 0.0
        %v3709 = vsel %vm331, %v3677, 0.0
        %v3710 = vsel %vm331, %v3678, 0.0
        %v3711 = vsel %vm331, %v3679, 0.0
        %3712 = vst [vmem:[#allocation3 + $0x10] sm:$0xff] %v3680
        %3713 = vst [vmem:[#allocation3 + $0x28] sm:$0xff] %v3681
        %3714 = vst [vmem:[#allocation3 + $0x40] sm:$0xff] %v3682
        %3715 = vst [vmem:[#allocation3 + $0x58] sm:$0xff] %v3683
        %3716 = vst [vmem:[#allocation3 + $0x70] sm:$0xff] %v3684
        %3717 = vst [vmem:[#allocation3 + $0x88] sm:$0xff] %v3685
        %3718 = vst [vmem:[#allocation3 + $0xa0] sm:$0xff] %v3686
        %3719 = vst [vmem:[#allocation3 + $0xb8] sm:$0xff] %v3687
        %3720 = vst [vmem:[#allocation3 + $0xd0] sm:$0xff] %v3688
        %3721 = vst [vmem:[#allocation3 + $0xe8] sm:$0xff] %v3689
        %3722 = vst [vmem:[#allocation3 + $0x100] sm:$0xff] %v3690
        %3723 = vst [vmem:[#allocation3 + $0x118] sm:$0xff] %v3691
        %3724 = vst [vmem:[#allocation3 + $0x130] sm:$0xff] %v3692
        %3725 = vst [vmem:[#allocation3 + $0x148] sm:$0xff] %v3693
        %3726 = vst [vmem:[#allocation3 + $0x160] sm:$0xff] %v3694
        %3727 = vst [vmem:[#allocation3 + $0x178] sm:$0xff] %v3695
        %3728 = vst [vmem:[#allocation3 + $0x190] sm:$0xff] %v3696
        %3729 = vst [vmem:[#allocation3 + $0x1a8] sm:$0xff] %v3697
        %3730 = vst [vmem:[#allocation3 + $0x1c0] sm:$0xff] %v3698
        %3731 = vst [vmem:[#allocation3 + $0x1d8] sm:$0xff] %v3699
        %3732 = vst [vmem:[#allocation3 + $0x1f0] sm:$0xff] %v3700
        %3733 = vst [vmem:[#allocation3 + $0x208] sm:$0xff] %v3701
        %3734 = vst [vmem:[#allocation3 + $0x220] sm:$0xff] %v3702
        %3735 = vst [vmem:[#allocation3 + $0x238] sm:$0xff] %v3703
        %3736 = vst [vmem:[#allocation3 + $0x250] sm:$0xff] %v3704
        %3737 = vst [vmem:[#allocation3 + $0x268] sm:$0xff] %v3705
        %3738 = vst [vmem:[#allocation3 + $0x280] sm:$0xff] %v3706
        %3739 = vst [vmem:[#allocation3 + $0x298] sm:$0xff] %v3707
        %3740 = vst [vmem:[#allocation3 + $0x2b0] sm:$0xff] %v3708
        %3741 = vst [vmem:[#allocation3 + $0x2c8] sm:$0xff] %v3709
        %3742 = vst [vmem:[#allocation3 + $0x2e0] sm:$0xff] %v3710
        %3743 = vst [vmem:[#allocation3 + $0x2f8] sm:$0xff] %v3711
        %v3744 = vld [vmem:[#allocation3] sm:$0xff]
        %v3745 = vld [vmem:[#allocation3 + $0x8] sm:$0xff]
        %v3746 = vld [vmem:[#allocation3 + $0x10] sm:$0xff]
        %v3747 = vld [vmem:[#allocation3 + $0x18] sm:$0xff]
        %v3748 = vld [vmem:[#allocation3 + $0x20] sm:$0xff]
        %v3749 = vld [vmem:[#allocation3 + $0x28] sm:$0xff]
        %v3750 = vld [vmem:[#allocation3 + $0x30] sm:$0xff]
        %v3751 = vld [vmem:[#allocation3 + $0x38] sm:$0xff]
        %v3752 = vld [vmem:[#allocation3 + $0x40] sm:$0xff]
        %v3753 = vld [vmem:[#allocation3 + $0x48] sm:$0xff]
        %v3754 = vld [vmem:[#allocation3 + $0x50] sm:$0xff]
        %v3755 = vld [vmem:[#allocation3 + $0x58] sm:$0xff]
        %v3756 = vld [vmem:[#allocation3 + $0x60] sm:$0xff]
        %v3757 = vld [vmem:[#allocation3 + $0x68] sm:$0xff]
        %v3758 = vld [vmem:[#allocation3 + $0x70] sm:$0xff]
        %v3759 = vld [vmem:[#allocation3 + $0x78] sm:$0xff]
        %v3760 = vld [vmem:[#allocation3 + $0x80] sm:$0xff]
        %v3761 = vld [vmem:[#allocation3 + $0x88] sm:$0xff]
        %v3762 = vld [vmem:[#allocation3 + $0x90] sm:$0xff]
        %v3763 = vld [vmem:[#allocation3 + $0x98] sm:$0xff]
        %v3764 = vld [vmem:[#allocation3 + $0xa0] sm:$0xff]
        %v3765 = vld [vmem:[#allocation3 + $0xa8] sm:$0xff]
        %v3766 = vld [vmem:[#allocation3 + $0xb0] sm:$0xff]
        %v3767 = vld [vmem:[#allocation3 + $0xb8] sm:$0xff]
        %v3768 = vld [vmem:[#allocation3 + $0xc0] sm:$0xff]
        %v3769 = vld [vmem:[#allocation3 + $0xc8] sm:$0xff]
        %v3770 = vld [vmem:[#allocation3 + $0xd0] sm:$0xff]
        %v3771 = vld [vmem:[#allocation3 + $0xd8] sm:$0xff]
        %v3772 = vld [vmem:[#allocation3 + $0xe0] sm:$0xff]
        %v3773 = vld [vmem:[#allocation3 + $0xe8] sm:$0xff]
        %v3774 = vld [vmem:[#allocation3 + $0xf0] sm:$0xff]
        %v3775 = vld [vmem:[#allocation3 + $0xf8] sm:$0xff]
        %v3776 = vld [vmem:[#allocation3 + $0x100] sm:$0xff]
        %v3777 = vld [vmem:[#allocation3 + $0x108] sm:$0xff]
        %v3778 = vld [vmem:[#allocation3 + $0x110] sm:$0xff]
        %v3779 = vld [vmem:[#allocation3 + $0x118] sm:$0xff]
        %v3780 = vld [vmem:[#allocation3 + $0x120] sm:$0xff]
        %v3781 = vld [vmem:[#allocation3 + $0x128] sm:$0xff]
        %v3782 = vld [vmem:[#allocation3 + $0x130] sm:$0xff]
        %v3783 = vld [vmem:[#allocation3 + $0x138] sm:$0xff]
        %v3784 = vld [vmem:[#allocation3 + $0x140] sm:$0xff]
        %v3785 = vld [vmem:[#allocation3 + $0x148] sm:$0xff]
        %v3786 = vld [vmem:[#allocation3 + $0x150] sm:$0xff]
        %v3787 = vld [vmem:[#allocation3 + $0x158] sm:$0xff]
        %v3788 = vld [vmem:[#allocation3 + $0x160] sm:$0xff]
        %v3789 = vld [vmem:[#allocation3 + $0x168] sm:$0xff]
        %v3790 = vld [vmem:[#allocation3 + $0x170] sm:$0xff]
        %v3791 = vld [vmem:[#allocation3 + $0x178] sm:$0xff]
        %v3792 = vld [vmem:[#allocation3 + $0x180] sm:$0xff]
        %v3793 = vld [vmem:[#allocation3 + $0x188] sm:$0xff]
        %v3794 = vld [vmem:[#allocation3 + $0x190] sm:$0xff]
        %v3795 = vld [vmem:[#allocation3 + $0x198] sm:$0xff]
        %v3796 = vld [vmem:[#allocation3 + $0x1a0] sm:$0xff]
        %v3797 = vld [vmem:[#allocation3 + $0x1a8] sm:$0xff]
        %v3798 = vld [vmem:[#allocation3 + $0x1b0] sm:$0xff]
        %v3799 = vld [vmem:[#allocation3 + $0x1b8] sm:$0xff]
        %v3800 = vld [vmem:[#allocation3 + $0x1c0] sm:$0xff]
        %v3801 = vld [vmem:[#allocation3 + $0x1c8] sm:$0xff]
        %v3802 = vld [vmem:[#allocation3 + $0x1d0] sm:$0xff]
        %v3803 = vld [vmem:[#allocation3 + $0x1d8] sm:$0xff]
        %v3804 = vld [vmem:[#allocation3 + $0x1e0] sm:$0xff]
        %v3805 = vld [vmem:[#allocation3 + $0x1e8] sm:$0xff]
        %v3806 = vld [vmem:[#allocation3 + $0x1f0] sm:$0xff]
        %v3807 = vld [vmem:[#allocation3 + $0x1f8] sm:$0xff]
        %v3808 = vld [vmem:[#allocation3 + $0x200] sm:$0xff]
        %v3809 = vld [vmem:[#allocation3 + $0x208] sm:$0xff]
        %v3810 = vld [vmem:[#allocation3 + $0x210] sm:$0xff]
        %v3811 = vld [vmem:[#allocation3 + $0x218] sm:$0xff]
        %v3812 = vld [vmem:[#allocation3 + $0x220] sm:$0xff]
        %v3813 = vld [vmem:[#allocation3 + $0x228] sm:$0xff]
        %v3814 = vld [vmem:[#allocation3 + $0x230] sm:$0xff]
        %v3815 = vld [vmem:[#allocation3 + $0x238] sm:$0xff]
        %v3816 = vld [vmem:[#allocation3 + $0x240] sm:$0xff]
        %v3817 = vld [vmem:[#allocation3 + $0x248] sm:$0xff]
        %v3818 = vld [vmem:[#allocation3 + $0x250] sm:$0xff]
        %v3819 = vld [vmem:[#allocation3 + $0x258] sm:$0xff]
        %v3820 = vld [vmem:[#allocation3 + $0x260] sm:$0xff]
        %v3821 = vld [vmem:[#allocation3 + $0x268] sm:$0xff]
        %v3822 = vld [vmem:[#allocation3 + $0x270] sm:$0xff]
        %v3823 = vld [vmem:[#allocation3 + $0x278] sm:$0xff]
        %v3824 = vld [vmem:[#allocation3 + $0x280] sm:$0xff]
        %v3825 = vld [vmem:[#allocation3 + $0x288] sm:$0xff]
        %v3826 = vld [vmem:[#allocation3 + $0x290] sm:$0xff]
        %v3827 = vld [vmem:[#allocation3 + $0x298] sm:$0xff]
        %v3828 = vld [vmem:[#allocation3 + $0x2a0] sm:$0xff]
        %v3829 = vld [vmem:[#allocation3 + $0x2a8] sm:$0xff]
        %v3830 = vld [vmem:[#allocation3 + $0x2b0] sm:$0xff]
        %v3831 = vld [vmem:[#allocation3 + $0x2b8] sm:$0xff]
        %v3832 = vld [vmem:[#allocation3 + $0x2c0] sm:$0xff]
        %v3833 = vld [vmem:[#allocation3 + $0x2c8] sm:$0xff]
        %v3834 = vld [vmem:[#allocation3 + $0x2d0] sm:$0xff]
        %v3835 = vld [vmem:[#allocation3 + $0x2d8] sm:$0xff]
        %v3836 = vld [vmem:[#allocation3 + $0x2e0] sm:$0xff]
        %v3837 = vld [vmem:[#allocation3 + $0x2e8] sm:$0xff]
        %v3838 = vld [vmem:[#allocation3 + $0x2f0] sm:$0xff]
        %v3839 = vld [vmem:[#allocation3 + $0x2f8] sm:$0xff]
        %v3840 = vld [vmem:[%s3] sm:$0xff]
        %v3841 = vld [vmem:[%s3 + $0x8] sm:$0xff]
        %v3842 = vld [vmem:[%s3 + $0x10] sm:$0xff]
        %v3843 = vld [vmem:[%s3 + $0x18] sm:$0xff]
        %v3844 = vld [vmem:[%s3 + $0x20] sm:$0xff]
        %v3845 = vld [vmem:[%s3 + $0x28] sm:$0xff]
        %v3846 = vld [vmem:[%s3 + $0x30] sm:$0xff]
        %v3847 = vld [vmem:[%s3 + $0x38] sm:$0xff]
        %v3848 = vld [vmem:[%s3 + $0x40] sm:$0xff]
        %v3849 = vld [vmem:[%s3 + $0x48] sm:$0xff]
        %v3850 = vld [vmem:[%s3 + $0x50] sm:$0xff]
        %v3851 = vld [vmem:[%s3 + $0x58] sm:$0xff]
        %v3852 = vld [vmem:[%s3 + $0x60] sm:$0xff]
        %v3853 = vld [vmem:[%s3 + $0x68] sm:$0xff]
        %v3854 = vld [vmem:[%s3 + $0x70] sm:$0xff]
        %v3855 = vld [vmem:[%s3 + $0x78] sm:$0xff]
        %v3856 = vld [vmem:[%s3 + $0x80] sm:$0xff]
        %v3857 = vld [vmem:[%s3 + $0x88] sm:$0xff]
        %v3858 = vld [vmem:[%s3 + $0x90] sm:$0xff]
        %v3859 = vld [vmem:[%s3 + $0x98] sm:$0xff]
        %v3860 = vld [vmem:[%s3 + $0xa0] sm:$0xff]
        %v3861 = vld [vmem:[%s3 + $0xa8] sm:$0xff]
        %v3862 = vld [vmem:[%s3 + $0xb0] sm:$0xff]
        %v3863 = vld [vmem:[%s3 + $0xb8] sm:$0xff]
        %v3864 = vld [vmem:[%s3 + $0xc0] sm:$0xff]
        %v3865 = vld [vmem:[%s3 + $0xc8] sm:$0xff]
        %v3866 = vld [vmem:[%s3 + $0xd0] sm:$0xff]
        %v3867 = vld [vmem:[%s3 + $0xd8] sm:$0xff]
        %v3868 = vld [vmem:[%s3 + $0xe0] sm:$0xff]
        %v3869 = vld [vmem:[%s3 + $0xe8] sm:$0xff]
        %v3870 = vld [vmem:[%s3 + $0xf0] sm:$0xff]
        %v3871 = vld [vmem:[%s3 + $0xf8] sm:$0xff]
        %v3872 = vld [vmem:[%s3 + $0x100] sm:$0xff]
        %v3873 = vld [vmem:[%s3 + $0x108] sm:$0xff]
        %v3874 = vld [vmem:[%s3 + $0x110] sm:$0xff]
        %v3875 = vld [vmem:[%s3 + $0x118] sm:$0xff]
        %v3876 = vld [vmem:[%s3 + $0x120] sm:$0xff]
        %v3877 = vld [vmem:[%s3 + $0x128] sm:$0xff]
        %v3878 = vld [vmem:[%s3 + $0x130] sm:$0xff]
        %v3879 = vld [vmem:[%s3 + $0x138] sm:$0xff]
        %v3880 = vld [vmem:[%s3 + $0x140] sm:$0xff]
        %v3881 = vld [vmem:[%s3 + $0x148] sm:$0xff]
        %v3882 = vld [vmem:[%s3 + $0x150] sm:$0xff]
        %v3883 = vld [vmem:[%s3 + $0x158] sm:$0xff]
        %v3884 = vld [vmem:[%s3 + $0x160] sm:$0xff]
        %v3885 = vld [vmem:[%s3 + $0x168] sm:$0xff]
        %v3886 = vld [vmem:[%s3 + $0x170] sm:$0xff]
        %v3887 = vld [vmem:[%s3 + $0x178] sm:$0xff]
        %v3888 = vld [vmem:[%s4] sm:$0x1]
        %v3890 = vperm.slane %v3888, 0
        %3892 = vmatpush.msra.mxu0 %v3855
        %3893 = vmatpush.msra.mxu0 %v3854
        %3894 = vmatpush.msra.mxu0 %v3853
        %3895 = vmatpush.msra.mxu0 %v3852
        %3896 = vmatpush.msra.mxu0 %v3851
        %3897 = vmatpush.msra.mxu0 %v3850
        %3898 = vmatpush.msra.mxu0 %v3849
        %3899 = vmatpush.msra.mxu0 %v3848
        %3900 = vmatpush.msra.mxu0 %v3847
        %3901 = vmatpush.msra.mxu0 %v3846
        %3902 = vmatpush.msra.mxu0 %v3845
        %3903 = vmatpush.msra.mxu0 %v3844
        %3904 = vmatpush.msra.mxu0 %v3843
        %3905 = vmatpush.msra.mxu0 %v3842
        %3906 = vmatpush.msra.mxu0 %v3841
        %3907 = vmatpush.msra.mxu0 %v3840
        %3908 = vmatmul.f32.gmra.mxu0 %v3744
        %v3909 = vpop.f32.mrf.mxu0
        %v3910 = vadd.f32 %v3890, %v3909
        %3911 = vmatmul.f32.gmra.mxu0 %v3747
        %v3912 = vpop.f32.mrf.mxu0
        %v3913 = vadd.f32 %v3890, %v3912
        %3914 = vmatmul.f32.gmra.mxu0 %v3750
        %v3915 = vpop.f32.mrf.mxu0
        %v3916 = vadd.f32 %v3890, %v3915
        %3917 = vmatmul.f32.gmra.mxu0 %v3753
        %v3918 = vpop.f32.mrf.mxu0
        %v3919 = vadd.f32 %v3890, %v3918
        %3920 = vmatmul.f32.gmra.mxu0 %v3756
        %v3921 = vpop.f32.mrf.mxu0
        %v3922 = vadd.f32 %v3890, %v3921
        %3923 = vmatmul.f32.gmra.mxu0 %v3759
        %v3924 = vpop.f32.mrf.mxu0
        %v3925 = vadd.f32 %v3890, %v3924
        %3926 = vmatmul.f32.gmra.mxu0 %v3762
        %v3927 = vpop.f32.mrf.mxu0
        %v3928 = vadd.f32 %v3890, %v3927
        %3929 = vmatmul.f32.gmra.mxu0 %v3765
        %v3930 = vpop.f32.mrf.mxu0
        %v3931 = vadd.f32 %v3890, %v3930
        %3932 = vmatmul.f32.gmra.mxu0 %v3768
        %v3933 = vpop.f32.mrf.mxu0
        %v3934 = vadd.f32 %v3890, %v3933
        %3935 = vmatmul.f32.gmra.mxu0 %v3771
        %v3936 = vpop.f32.mrf.mxu0
        %v3937 = vadd.f32 %v3890, %v3936
        %3938 = vmatmul.f32.gmra.mxu0 %v3774
        %v3939 = vpop.f32.mrf.mxu0
        %v3940 = vadd.f32 %v3890, %v3939
        %3941 = vmatmul.f32.gmra.mxu0 %v3777
        %v3942 = vpop.f32.mrf.mxu0
        %v3943 = vadd.f32 %v3890, %v3942
        %3944 = vmatmul.f32.gmra.mxu0 %v3780
        %v3945 = vpop.f32.mrf.mxu0
        %v3946 = vadd.f32 %v3890, %v3945
        %3947 = vmatmul.f32.gmra.mxu0 %v3783
        %v3948 = vpop.f32.mrf.mxu0
        %v3949 = vadd.f32 %v3890, %v3948
        %3950 = vmatmul.f32.gmra.mxu0 %v3786
        %v3951 = vpop.f32.mrf.mxu0
        %v3952 = vadd.f32 %v3890, %v3951
        %3953 = vmatmul.f32.gmra.mxu0 %v3789
        %v3954 = vpop.f32.mrf.mxu0
        %v3955 = vadd.f32 %v3890, %v3954
        %3956 = vmatmul.f32.gmra.mxu0 %v3792
        %v3957 = vpop.f32.mrf.mxu0
        %v3958 = vadd.f32 %v3890, %v3957
        %3959 = vmatmul.f32.gmra.mxu0 %v3795
        %v3960 = vpop.f32.mrf.mxu0
        %v3961 = vadd.f32 %v3890, %v3960
        %3962 = vmatmul.f32.gmra.mxu0 %v3798
        %v3963 = vpop.f32.mrf.mxu0
        %v3964 = vadd.f32 %v3890, %v3963
        %3965 = vmatmul.f32.gmra.mxu0 %v3801
        %v3966 = vpop.f32.mrf.mxu0
        %v3967 = vadd.f32 %v3890, %v3966
        %3968 = vmatmul.f32.gmra.mxu0 %v3804
        %v3969 = vpop.f32.mrf.mxu0
        %v3970 = vadd.f32 %v3890, %v3969
        %3971 = vmatmul.f32.gmra.mxu0 %v3807
        %v3972 = vpop.f32.mrf.mxu0
        %v3973 = vadd.f32 %v3890, %v3972
        %3974 = vmatmul.f32.gmra.mxu0 %v3810
        %v3975 = vpop.f32.mrf.mxu0
        %v3976 = vadd.f32 %v3890, %v3975
        %3977 = vmatmul.f32.gmra.mxu0 %v3813
        %v3978 = vpop.f32.mrf.mxu0
        %v3979 = vadd.f32 %v3890, %v3978
        %3980 = vmatmul.f32.gmra.mxu0 %v3816
        %v3981 = vpop.f32.mrf.mxu0
        %v3982 = vadd.f32 %v3890, %v3981
        %3983 = vmatmul.f32.gmra.mxu0 %v3819
        %v3984 = vpop.f32.mrf.mxu0
        %v3985 = vadd.f32 %v3890, %v3984
        %3986 = vmatmul.f32.gmra.mxu0 %v3822
        %v3987 = vpop.f32.mrf.mxu0
        %v3988 = vadd.f32 %v3890, %v3987
        %3989 = vmatmul.f32.gmra.mxu0 %v3825
        %v3990 = vpop.f32.mrf.mxu0
        %v3991 = vadd.f32 %v3890, %v3990
        %3992 = vmatmul.f32.gmra.mxu0 %v3828
        %v3993 = vpop.f32.mrf.mxu0
        %v3994 = vadd.f32 %v3890, %v3993
        %3995 = vmatmul.f32.gmra.mxu0 %v3831
        %v3996 = vpop.f32.mrf.mxu0
        %v3997 = vadd.f32 %v3890, %v3996
        %3998 = vmatmul.f32.gmra.mxu0 %v3834
        %v3999 = vpop.f32.mrf.mxu0
        %v4000 = vadd.f32 %v3890, %v3999
        %4001 = vmatmul.f32.gmra.mxu0 %v3837
        %v4002 = vpop.f32.mrf.mxu0
        %v4003 = vadd.f32 %v3890, %v4002
        %4004 = vdwg.mxu0
        %4005 = vmatpush.msra.mxu0 %v3871
        %4006 = vmatpush.msra.mxu0 %v3870
        %4007 = vmatpush.msra.mxu0 %v3869
        %4008 = vmatpush.msra.mxu0 %v3868
        %4009 = vmatpush.msra.mxu0 %v3867
        %4010 = vmatpush.msra.mxu0 %v3866
        %4011 = vmatpush.msra.mxu0 %v3865
        %4012 = vmatpush.msra.mxu0 %v3864
        %4013 = vmatpush.msra.mxu0 %v3863
        %4014 = vmatpush.msra.mxu0 %v3862
        %4015 = vmatpush.msra.mxu0 %v3861
        %4016 = vmatpush.msra.mxu0 %v3860
        %4017 = vmatpush.msra.mxu0 %v3859
        %4018 = vmatpush.msra.mxu0 %v3858
        %4019 = vmatpush.msra.mxu0 %v3857
        %4020 = vmatpush.msra.mxu0 %v3856
        %4021 = vmatmul.f32.gmra.mxu0 %v3745
        %v4022 = vpop.f32.mrf.mxu0
        %v4023 = vadd.f32 %v3910, %v4022
        %4024 = vmatmul.f32.gmra.mxu0 %v3748
        %v4025 = vpop.f32.mrf.mxu0
        %v4026 = vadd.f32 %v3913, %v4025
        %4027 = vmatmul.f32.gmra.mxu0 %v3751
        %v4028 = vpop.f32.mrf.mxu0
        %v4029 = vadd.f32 %v3916, %v4028
        %4030 = vmatmul.f32.gmra.mxu0 %v3754
        %v4031 = vpop.f32.mrf.mxu0
        %v4032 = vadd.f32 %v3919, %v4031
        %4033 = vmatmul.f32.gmra.mxu0 %v3757
        %v4034 = vpop.f32.mrf.mxu0
        %v4035 = vadd.f32 %v3922, %v4034
        %4036 = vmatmul.f32.gmra.mxu0 %v3760
        %v4037 = vpop.f32.mrf.mxu0
        %v4038 = vadd.f32 %v3925, %v4037
        %4039 = vmatmul.f32.gmra.mxu0 %v3763
        %v4040 = vpop.f32.mrf.mxu0
        %v4041 = vadd.f32 %v3928, %v4040
        %4042 = vmatmul.f32.gmra.mxu0 %v3766
        %v4043 = vpop.f32.mrf.mxu0
        %v4044 = vadd.f32 %v3931, %v4043
        %4045 = vmatmul.f32.gmra.mxu0 %v3769
        %v4046 = vpop.f32.mrf.mxu0
        %v4047 = vadd.f32 %v3934, %v4046
        %4048 = vmatmul.f32.gmra.mxu0 %v3772
        %v4049 = vpop.f32.mrf.mxu0
        %v4050 = vadd.f32 %v3937, %v4049
        %4051 = vmatmul.f32.gmra.mxu0 %v3775
        %v4052 = vpop.f32.mrf.mxu0
        %v4053 = vadd.f32 %v3940, %v4052
        %4054 = vmatmul.f32.gmra.mxu0 %v3778
        %v4055 = vpop.f32.mrf.mxu0
        %v4056 = vadd.f32 %v3943, %v4055
        %4057 = vmatmul.f32.gmra.mxu0 %v3781
        %v4058 = vpop.f32.mrf.mxu0
        %v4059 = vadd.f32 %v3946, %v4058
        %4060 = vmatmul.f32.gmra.mxu0 %v3784
        %v4061 = vpop.f32.mrf.mxu0
        %v4062 = vadd.f32 %v3949, %v4061
        %4063 = vmatmul.f32.gmra.mxu0 %v3787
        %v4064 = vpop.f32.mrf.mxu0
        %v4065 = vadd.f32 %v3952, %v4064
        %4066 = vmatmul.f32.gmra.mxu0 %v3790
        %v4067 = vpop.f32.mrf.mxu0
        %v4068 = vadd.f32 %v3955, %v4067
        %4069 = vmatmul.f32.gmra.mxu0 %v3793
        %v4070 = vpop.f32.mrf.mxu0
        %v4071 = vadd.f32 %v3958, %v4070
        %4072 = vmatmul.f32.gmra.mxu0 %v3796
        %v4073 = vpop.f32.mrf.mxu0
        %v4074 = vadd.f32 %v3961, %v4073
        %4075 = vmatmul.f32.gmra.mxu0 %v3799
        %v4076 = vpop.f32.mrf.mxu0
        %v4077 = vadd.f32 %v3964, %v4076
        %4078 = vmatmul.f32.gmra.mxu0 %v3802
        %v4079 = vpop.f32.mrf.mxu0
        %v4080 = vadd.f32 %v3967, %v4079
        %4081 = vmatmul.f32.gmra.mxu0 %v3805
        %v4082 = vpop.f32.mrf.mxu0
        %v4083 = vadd.f32 %v3970, %v4082
        %4084 = vmatmul.f32.gmra.mxu0 %v3808
        %v4085 = vpop.f32.mrf.mxu0
        %v4086 = vadd.f32 %v3973, %v4085
        %4087 = vmatmul.f32.gmra.mxu0 %v3811
        %v4088 = vpop.f32.mrf.mxu0
        %v4089 = vadd.f32 %v3976, %v4088
        %4090 = vmatmul.f32.gmra.mxu0 %v3814
        %v4091 = vpop.f32.mrf.mxu0
        %v4092 = vadd.f32 %v3979, %v4091
        %4093 = vmatmul.f32.gmra.mxu0 %v3817
        %v4094 = vpop.f32.mrf.mxu0
        %v4095 = vadd.f32 %v3982, %v4094
        %4096 = vmatmul.f32.gmra.mxu0 %v3820
        %v4097 = vpop.f32.mrf.mxu0
        %v4098 = vadd.f32 %v3985, %v4097
        %4099 = vmatmul.f32.gmra.mxu0 %v3823
        %v4100 = vpop.f32.mrf.mxu0
        %v4101 = vadd.f32 %v3988, %v4100
        %4102 = vmatmul.f32.gmra.mxu0 %v3826
        %v4103 = vpop.f32.mrf.mxu0
        %v4104 = vadd.f32 %v3991, %v4103
        %4105 = vmatmul.f32.gmra.mxu0 %v3829
        %v4106 = vpop.f32.mrf.mxu0
        %v4107 = vadd.f32 %v3994, %v4106
        %4108 = vmatmul.f32.gmra.mxu0 %v3832
        %v4109 = vpop.f32.mrf.mxu0
        %v4110 = vadd.f32 %v3997, %v4109
        %4111 = vmatmul.f32.gmra.mxu0 %v3835
        %v4112 = vpop.f32.mrf.mxu0
        %v4113 = vadd.f32 %v4000, %v4112
        %4114 = vmatmul.f32.gmra.mxu0 %v3838
        %v4115 = vpop.f32.mrf.mxu0
        %v4116 = vadd.f32 %v4003, %v4115
        %4117 = vdwg.mxu0
        %4118 = vmatpush.msra.mxu0 %v3887
        %4119 = vmatpush.msra.mxu0 %v3886
        %4120 = vmatpush.msra.mxu0 %v3885
        %4121 = vmatpush.msra.mxu0 %v3884
        %4122 = vmatpush.msra.mxu0 %v3883
        %4123 = vmatpush.msra.mxu0 %v3882
        %4124 = vmatpush.msra.mxu0 %v3881
        %4125 = vmatpush.msra.mxu0 %v3880
        %4126 = vmatpush.msra.mxu0 %v3879
        %4127 = vmatpush.msra.mxu0 %v3878
        %4128 = vmatpush.msra.mxu0 %v3877
        %4129 = vmatpush.msra.mxu0 %v3876
        %4130 = vmatpush.msra.mxu0 %v3875
        %4131 = vmatpush.msra.mxu0 %v3874
        %4132 = vmatpush.msra.mxu0 %v3873
        %4133 = vmatpush.msra.mxu0 %v3872
        %4134 = vmatmul.f32.gmra.mxu0 %v3746
        %v4135 = vpop.f32.mrf.mxu0
        %v4136 = vadd.f32 %v4023, %v4135
        %4137 = vmatmul.f32.gmra.mxu0 %v3749
        %v4138 = vpop.f32.mrf.mxu0
        %v4139 = vadd.f32 %v4026, %v4138
        %4140 = vmatmul.f32.gmra.mxu0 %v3752
        %v4141 = vpop.f32.mrf.mxu0
        %v4142 = vadd.f32 %v4029, %v4141
        %4143 = vmatmul.f32.gmra.mxu0 %v3755
        %v4144 = vpop.f32.mrf.mxu0
        %v4145 = vadd.f32 %v4032, %v4144
        %4146 = vmatmul.f32.gmra.mxu0 %v3758
        %v4147 = vpop.f32.mrf.mxu0
        %v4148 = vadd.f32 %v4035, %v4147
        %4149 = vmatmul.f32.gmra.mxu0 %v3761
        %v4150 = vpop.f32.mrf.mxu0
        %v4151 = vadd.f32 %v4038, %v4150
        %4152 = vmatmul.f32.gmra.mxu0 %v3764
        %v4153 = vpop.f32.mrf.mxu0
        %v4154 = vadd.f32 %v4041, %v4153
        %4155 = vmatmul.f32.gmra.mxu0 %v3767
        %v4156 = vpop.f32.mrf.mxu0
        %v4157 = vadd.f32 %v4044, %v4156
        %4158 = vmatmul.f32.gmra.mxu0 %v3770
        %v4159 = vpop.f32.mrf.mxu0
        %v4160 = vadd.f32 %v4047, %v4159
        %4161 = vmatmul.f32.gmra.mxu0 %v3773
        %v4162 = vpop.f32.mrf.mxu0
        %v4163 = vadd.f32 %v4050, %v4162
        %4164 = vmatmul.f32.gmra.mxu0 %v3776
        %v4165 = vpop.f32.mrf.mxu0
        %v4166 = vadd.f32 %v4053, %v4165
        %4167 = vmatmul.f32.gmra.mxu0 %v3779
        %v4168 = vpop.f32.mrf.mxu0
        %v4169 = vadd.f32 %v4056, %v4168
        %4170 = vmatmul.f32.gmra.mxu0 %v3782
        %v4171 = vpop.f32.mrf.mxu0
        %v4172 = vadd.f32 %v4059, %v4171
        %4173 = vmatmul.f32.gmra.mxu0 %v3785
        %v4174 = vpop.f32.mrf.mxu0
        %v4175 = vadd.f32 %v4062, %v4174
        %4176 = vmatmul.f32.gmra.mxu0 %v3788
        %v4177 = vpop.f32.mrf.mxu0
        %v4178 = vadd.f32 %v4065, %v4177
        %4179 = vmatmul.f32.gmra.mxu0 %v3791
        %v4180 = vpop.f32.mrf.mxu0
        %v4181 = vadd.f32 %v4068, %v4180
        %4182 = vmatmul.f32.gmra.mxu0 %v3794
        %v4183 = vpop.f32.mrf.mxu0
        %v4184 = vadd.f32 %v4071, %v4183
        %4185 = vmatmul.f32.gmra.mxu0 %v3797
        %v4186 = vpop.f32.mrf.mxu0
        %v4187 = vadd.f32 %v4074, %v4186
        %4188 = vmatmul.f32.gmra.mxu0 %v3800
        %v4189 = vpop.f32.mrf.mxu0
        %v4190 = vadd.f32 %v4077, %v4189
        %4191 = vmatmul.f32.gmra.mxu0 %v3803
        %v4192 = vpop.f32.mrf.mxu0
        %v4193 = vadd.f32 %v4080, %v4192
        %4194 = vmatmul.f32.gmra.mxu0 %v3806
        %v4195 = vpop.f32.mrf.mxu0
        %v4196 = vadd.f32 %v4083, %v4195
        %4197 = vmatmul.f32.gmra.mxu0 %v3809
        %v4198 = vpop.f32.mrf.mxu0
        %v4199 = vadd.f32 %v4086, %v4198
        %4200 = vmatmul.f32.gmra.mxu0 %v3812
        %v4201 = vpop.f32.mrf.mxu0
        %v4202 = vadd.f32 %v4089, %v4201
        %4203 = vmatmul.f32.gmra.mxu0 %v3815
        %v4204 = vpop.f32.mrf.mxu0
        %v4205 = vadd.f32 %v4092, %v4204
        %4206 = vmatmul.f32.gmra.mxu0 %v3818
        %v4207 = vpop.f32.mrf.mxu0
        %v4208 = vadd.f32 %v4095, %v4207
        %4209 = vmatmul.f32.gmra.mxu0 %v3821
        %v4210 = vpop.f32.mrf.mxu0
        %v4211 = vadd.f32 %v4098, %v4210
        %4212 = vmatmul.f32.gmra.mxu0 %v3824
        %v4213 = vpop.f32.mrf.mxu0
        %v4214 = vadd.f32 %v4101, %v4213
        %4215 = vmatmul.f32.gmra.mxu0 %v3827
        %v4216 = vpop.f32.mrf.mxu0
        %v4217 = vadd.f32 %v4104, %v4216
        %4218 = vmatmul.f32.gmra.mxu0 %v3830
        %v4219 = vpop.f32.mrf.mxu0
        %v4220 = vadd.f32 %v4107, %v4219
        %4221 = vmatmul.f32.gmra.mxu0 %v3833
        %v4222 = vpop.f32.mrf.mxu0
        %v4223 = vadd.f32 %v4110, %v4222
        %4224 = vmatmul.f32.gmra.mxu0 %v3836
        %v4225 = vpop.f32.mrf.mxu0
        %v4226 = vadd.f32 %v4113, %v4225
        %4227 = vmatmul.f32.gmra.mxu0 %v3839
        %v4228 = vpop.f32.mrf.mxu0
        %v4229 = vadd.f32 %v4116, %v4228
        %4230 = vdwg.mxu0
        %v4231 = vsel %vm331, %v4136, 0.0
        %v4232 = vsel %vm331, %v4139, 0.0
        %v4233 = vadd.f32 %v4231, %v4232
        %v4234 = vsel %vm331, %v4142, 0.0
        %v4235 = vadd.f32 %v4233, %v4234
        %v4236 = vsel %vm331, %v4145, 0.0
        %v4237 = vadd.f32 %v4235, %v4236
        %v4238 = vsel %vm331, %v4148, 0.0
        %v4239 = vadd.f32 %v4237, %v4238
        %v4240 = vsel %vm331, %v4151, 0.0
        %v4241 = vadd.f32 %v4239, %v4240
        %v4242 = vsel %vm331, %v4154, 0.0
        %v4243 = vadd.f32 %v4241, %v4242
        %v4244 = vsel %vm331, %v4157, 0.0
        %v4245 = vadd.f32 %v4243, %v4244
        %v4246 = vsel %vm331, %v4160, 0.0
        %v4247 = vadd.f32 %v4245, %v4246
        %v4248 = vsel %vm331, %v4163, 0.0
        %v4249 = vadd.f32 %v4247, %v4248
        %v4250 = vsel %vm331, %v4166, 0.0
        %v4251 = vadd.f32 %v4249, %v4250
        %v4252 = vsel %vm331, %v4169, 0.0
        %v4253 = vadd.f32 %v4251, %v4252
        %v4254 = vsel %vm331, %v4172, 0.0
        %v4255 = vadd.f32 %v4253, %v4254
        %v4256 = vsel %vm331, %v4175, 0.0
        %v4257 = vadd.f32 %v4255, %v4256
        %v4258 = vsel %vm331, %v4178, 0.0
        %v4259 = vadd.f32 %v4257, %v4258
        %v4260 = vsel %vm331, %v4181, 0.0
        %v4261 = vadd.f32 %v4259, %v4260
        %v4262 = vsel %vm331, %v4184, 0.0
        %v4263 = vadd.f32 %v4261, %v4262
        %v4264 = vsel %vm331, %v4187, 0.0
        %v4265 = vadd.f32 %v4263, %v4264
        %v4266 = vsel %vm331, %v4190, 0.0
        %v4267 = vadd.f32 %v4265, %v4266
        %v4268 = vsel %vm331, %v4193, 0.0
        %v4269 = vadd.f32 %v4267, %v4268
        %v4270 = vsel %vm331, %v4196, 0.0
        %v4271 = vadd.f32 %v4269, %v4270
        %v4272 = vsel %vm331, %v4199, 0.0
        %v4273 = vadd.f32 %v4271, %v4272
        %v4274 = vsel %vm331, %v4202, 0.0
        %v4275 = vadd.f32 %v4273, %v4274
        %v4276 = vsel %vm331, %v4205, 0.0
        %v4277 = vadd.f32 %v4275, %v4276
        %v4278 = vsel %vm331, %v4208, 0.0
        %v4279 = vadd.f32 %v4277, %v4278
        %v4280 = vsel %vm331, %v4211, 0.0
        %v4281 = vadd.f32 %v4279, %v4280
        %v4282 = vsel %vm331, %v4214, 0.0
        %v4283 = vadd.f32 %v4281, %v4282
        %v4284 = vsel %vm331, %v4217, 0.0
        %v4285 = vadd.f32 %v4283, %v4284
        %v4286 = vsel %vm331, %v4220, 0.0
        %v4287 = vadd.f32 %v4285, %v4286
        %v4288 = vsel %vm331, %v4223, 0.0
        %v4289 = vadd.f32 %v4287, %v4288
        %v4290 = vsel %vm331, %v4226, 0.0
        %v4291 = vadd.f32 %v4289, %v4290
        %v4292 = vsel %vm331, %v4229, 0.0
        %v4293 = vadd.f32 %v4291, %v4292
        %v4294 = vrot.slane %v4293, 4
        %v4295 = vadd.f32 %v4293, %v4294
        %v4296 = vrot.slane %v4295, 2
        %v4297 = vadd.f32 %v4295, %v4296
        %v4298 = vrot.slane %v4297, 1
        %v4299 = vadd.f32 %v4297, %v4298
        %v4300 = vmul.f32 %v4299, 0.00390625
        %v4301 = vld [vmem:[%s5] sm:$0x3]
        %v4302 = vmul.f32 %v4300, %v4301
        %vm4303 = vcmask 254976
        %v4304 = vsel %vm4303, %v4302, 0.0
        %4305 = vadd.xlane.f32.xlu0 %v4304
        %v4306 = vpop.xlane.xlu0 %4305
        %v4307 = vld [vmem:[%s6] sm:$0x3]
        %v4308 = vadd.f32 %v4306, %v4307
        %v4309 = vmax.f32 %v4308, 0.0
        %v4310 = vld [vmem:[%s7] sm:$0x3]
        %4312 = vset.pattern.permute.xlu0 0
        %4313 = vperm.xlu0 %4312, %v4309
        %v4314 = vpop.permute.xlu0 %4313
        %v4316 = vmul.f32 %v4314, %v4310
        %v4317 = vsel %vm4303, %v4316, 0.0
        %v4318 = vrot.slane %v4317, 4
        %v4319 = vadd.f32 %v4317, %v4318
        %v4320 = vrot.slane %v4319, 2
        %v4321 = vadd.f32 %v4319, %v4320
        %v4322 = vrot.slane %v4321, 1
        %v4323 = vadd.f32 %v4321, %v4322
        %v4324 = vld [vmem:[%s8] sm:$0x1]
        %v4325 = vadd.f32 %v4323, %v4324
        %v4326 = vxor.u32 %v4325, 2147483648
        %v4327 = vmul.f32 %v4326, 1.442695
        %v4328 = vpow.pop %v4327
        %v4329 = vadd.f32 %v4328, 1.0
        %v4330 = vrcp.pop %v4329
        %v4331 = vmul.f32 %v4329, %v4330
        %v4332 = vsub.f32 1.0, %v4331
        %v4333 = vmul.f32 %v4330, %v4332
        %v4334 = vadd.f32 %v4330, %v4333
        %vm4335 = vweird.f32 %v4329
        %vm4336 = vweird.f32 %v4330
        %vm4337 = vmor %vm4335, %vm4336
        %v4338 = vsel %vm4337, %v4330, %v4334
        %v4339 = vand.u32 2147483647, %v4329
        %vm4340 = vcmp.eq.f32.partialorder %v4339, 8.507059e+37
        %v4341 = vand.u32 %v4329, 2147483648
        %v4342 = vor.u32 1.1754944e-38, %v4341
        %v4343 = vsel %vm4340, %v4342, %v4338
        %v4344 = vmul.f32 1.0, %v4343
        %v4345 = vperm.slane %v4344, 0
        %v4346 = vmul.f32 %v4136, %v4345
        %v4347 = vmul.f32 %v4139, %v4345
        %v4348 = vmul.f32 %v4142, %v4345
        %v4349 = vmul.f32 %v4145, %v4345
        %v4350 = vmul.f32 %v4148, %v4345
        %v4351 = vmul.f32 %v4151, %v4345
        %v4352 = vmul.f32 %v4154, %v4345
        %v4353 = vmul.f32 %v4157, %v4345
        %v4354 = vmul.f32 %v4160, %v4345
        %v4355 = vmul.f32 %v4163, %v4345
        %v4356 = vmul.f32 %v4166, %v4345
        %v4357 = vmul.f32 %v4169, %v4345
        %v4358 = vmul.f32 %v4172, %v4345
        %v4359 = vmul.f32 %v4175, %v4345
        %v4360 = vmul.f32 %v4178, %v4345
        %v4361 = vmul.f32 %v4181, %v4345
        %v4362 = vmul.f32 %v4184, %v4345
        %v4363 = vmul.f32 %v4187, %v4345
        %v4364 = vmul.f32 %v4190, %v4345
        %v4365 = vmul.f32 %v4193, %v4345
        %v4366 = vmul.f32 %v4196, %v4345
        %v4367 = vmul.f32 %v4199, %v4345
        %v4368 = vmul.f32 %v4202, %v4345
        %v4369 = vmul.f32 %v4205, %v4345
        %v4370 = vmul.f32 %v4208, %v4345
        %v4371 = vmul.f32 %v4211, %v4345
        %v4372 = vmul.f32 %v4214, %v4345
        %v4373 = vmul.f32 %v4217, %v4345
        %v4374 = vmul.f32 %v4220, %v4345
        %v4375 = vmul.f32 %v4223, %v4345
        %v4376 = vmul.f32 %v4226, %v4345
        %v4377 = vmul.f32 %v4229, %v4345
        %v4378 = vld [vmem:[%s330] sm:$0xff]
        %v4379 = vld [vmem:[%s330 + $0x8] sm:$0xff]
        %v4380 = vld [vmem:[%s330 + $0x10] sm:$0xff]
        %v4381 = vld [vmem:[%s330 + $0x18] sm:$0xff]
        %v4382 = vld [vmem:[%s330 + $0x20] sm:$0xff]
        %v4383 = vld [vmem:[%s330 + $0x28] sm:$0xff]
        %v4384 = vld [vmem:[%s330 + $0x30] sm:$0xff]
        %v4385 = vld [vmem:[%s330 + $0x38] sm:$0xff]
        %v4386 = vld [vmem:[%s330 + $0x40] sm:$0xff]
        %v4387 = vld [vmem:[%s330 + $0x48] sm:$0xff]
        %v4388 = vld [vmem:[%s330 + $0x50] sm:$0xff]
        %v4389 = vld [vmem:[%s330 + $0x58] sm:$0xff]
        %v4390 = vld [vmem:[%s330 + $0x60] sm:$0xff]
        %v4391 = vld [vmem:[%s330 + $0x68] sm:$0xff]
        %v4392 = vld [vmem:[%s330 + $0x70] sm:$0xff]
        %v4393 = vld [vmem:[%s330 + $0x78] sm:$0xff]
        %v4394 = vld [vmem:[%s330 + $0x80] sm:$0xff]
        %v4395 = vld [vmem:[%s330 + $0x88] sm:$0xff]
        %v4396 = vld [vmem:[%s330 + $0x90] sm:$0xff]
        %v4397 = vld [vmem:[%s330 + $0x98] sm:$0xff]
        %v4398 = vld [vmem:[%s330 + $0xa0] sm:$0xff]
        %v4399 = vld [vmem:[%s330 + $0xa8] sm:$0xff]
        %v4400 = vld [vmem:[%s330 + $0xb0] sm:$0xff]
        %v4401 = vld [vmem:[%s330 + $0xb8] sm:$0xff]
        %v4402 = vld [vmem:[%s330 + $0xc0] sm:$0xff]
        %v4403 = vld [vmem:[%s330 + $0xc8] sm:$0xff]
        %v4404 = vld [vmem:[%s330 + $0xd0] sm:$0xff]
        %v4405 = vld [vmem:[%s330 + $0xd8] sm:$0xff]
        %v4406 = vld [vmem:[%s330 + $0xe0] sm:$0xff]
        %v4407 = vld [vmem:[%s330 + $0xe8] sm:$0xff]
        %v4408 = vld [vmem:[%s330 + $0xf0] sm:$0xff]
        %v4409 = vld [vmem:[%s330 + $0xf8] sm:$0xff]
        %v4410 = vadd.f32 %v4346, %v4378
        %v4411 = vadd.f32 %v4347, %v4379
        %v4412 = vadd.f32 %v4348, %v4380
        %v4413 = vadd.f32 %v4349, %v4381
        %v4414 = vadd.f32 %v4350, %v4382
        %v4415 = vadd.f32 %v4351, %v4383
        %v4416 = vadd.f32 %v4352, %v4384
        %v4417 = vadd.f32 %v4353, %v4385
        %v4418 = vadd.f32 %v4354, %v4386
        %v4419 = vadd.f32 %v4355, %v4387
        %v4420 = vadd.f32 %v4356, %v4388
        %v4421 = vadd.f32 %v4357, %v4389
        %v4422 = vadd.f32 %v4358, %v4390
        %v4423 = vadd.f32 %v4359, %v4391
        %v4424 = vadd.f32 %v4360, %v4392
        %v4425 = vadd.f32 %v4361, %v4393
        %v4426 = vadd.f32 %v4362, %v4394
        %v4427 = vadd.f32 %v4363, %v4395
        %v4428 = vadd.f32 %v4364, %v4396
        %v4429 = vadd.f32 %v4365, %v4397
        %v4430 = vadd.f32 %v4366, %v4398
        %v4431 = vadd.f32 %v4367, %v4399
        %v4432 = vadd.f32 %v4368, %v4400
        %v4433 = vadd.f32 %v4369, %v4401
        %v4434 = vadd.f32 %v4370, %v4402
        %v4435 = vadd.f32 %v4371, %v4403
        %v4436 = vadd.f32 %v4372, %v4404
        %v4437 = vadd.f32 %v4373, %v4405
        %v4438 = vadd.f32 %v4374, %v4406
        %v4439 = vadd.f32 %v4375, %v4407
        %v4440 = vadd.f32 %v4376, %v4408
        %v4441 = vadd.f32 %v4377, %v4409
        %4442 = vst.msk [vmem:[%s325] sm:$0xff] %vm331, %v4410
        %4443 = vst.msk [vmem:[%s325 + $0x8] sm:$0xff] %vm331, %v4411
        %4444 = vst.msk [vmem:[%s325 + $0x10] sm:$0xff] %vm331, %v4412
        %4445 = vst.msk [vmem:[%s325 + $0x18] sm:$0xff] %vm331, %v4413
        %4446 = vst.msk [vmem:[%s325 + $0x20] sm:$0xff] %vm331, %v4414
        %4447 = vst.msk [vmem:[%s325 + $0x28] sm:$0xff] %vm331, %v4415
        %4448 = vst.msk [vmem:[%s325 + $0x30] sm:$0xff] %vm331, %v4416
        %4449 = vst.msk [vmem:[%s325 + $0x38] sm:$0xff] %vm331, %v4417
        %4450 = vst.msk [vmem:[%s325 + $0x40] sm:$0xff] %vm331, %v4418
        %4451 = vst.msk [vmem:[%s325 + $0x48] sm:$0xff] %vm331, %v4419
        %4452 = vst.msk [vmem:[%s325 + $0x50] sm:$0xff] %vm331, %v4420
        %4453 = vst.msk [vmem:[%s325 + $0x58] sm:$0xff] %vm331, %v4421
        %4454 = vst.msk [vmem:[%s325 + $0x60] sm:$0xff] %vm331, %v4422
        %4455 = vst.msk [vmem:[%s325 + $0x68] sm:$0xff] %vm331, %v4423
        %4456 = vst.msk [vmem:[%s325 + $0x70] sm:$0xff] %vm331, %v4424
        %4457 = vst.msk [vmem:[%s325 + $0x78] sm:$0xff] %vm331, %v4425
        %4458 = vst.msk [vmem:[%s325 + $0x80] sm:$0xff] %vm331, %v4426
        %4459 = vst.msk [vmem:[%s325 + $0x88] sm:$0xff] %vm331, %v4427
        %4460 = vst.msk [vmem:[%s325 + $0x90] sm:$0xff] %vm331, %v4428
        %4461 = vst.msk [vmem:[%s325 + $0x98] sm:$0xff] %vm331, %v4429
        %4462 = vst.msk [vmem:[%s325 + $0xa0] sm:$0xff] %vm331, %v4430
        %4463 = vst.msk [vmem:[%s325 + $0xa8] sm:$0xff] %vm331, %v4431
        %4464 = vst.msk [vmem:[%s325 + $0xb0] sm:$0xff] %vm331, %v4432
        %4465 = vst.msk [vmem:[%s325 + $0xb8] sm:$0xff] %vm331, %v4433
        %4466 = vst.msk [vmem:[%s325 + $0xc0] sm:$0xff] %vm331, %v4434
        %4467 = vst.msk [vmem:[%s325 + $0xc8] sm:$0xff] %vm331, %v4435
        %4468 = vst.msk [vmem:[%s325 + $0xd0] sm:$0xff] %vm331, %v4436
        %4469 = vst.msk [vmem:[%s325 + $0xd8] sm:$0xff] %vm331, %v4437
        %4470 = vst.msk [vmem:[%s325 + $0xe0] sm:$0xff] %vm331, %v4438
        %4471 = vst.msk [vmem:[%s325 + $0xe8] sm:$0xff] %vm331, %v4439
        %4472 = vst.msk [vmem:[%s325 + $0xf0] sm:$0xff] %vm331, %v4440
        %4473 = vst.msk [vmem:[%s325 + $0xf8] sm:$0xff] %vm331, %v4441
        %s4474 = sand.u32 %s225, 1
        %s4475 = scalar_lea.sflag [#allocation5], %s4474
        %s4476 = sand.u32 %s225, 1
        %s4477 = smul.addr %s4476, 256
        %s4478 = scalar_lea.vmem [#allocation4], %s4477
        // Predicated region
        $region57: #{rcab_forward.1} parent=55 // pred_check
          %p4479 = pneg %p235
        $region58: #{rcab_forward.1} parent=55 // pred_check_branch
          %4481 = sbr.rel (%p4479) target = $region60
        $region59: #{rcab_forward.1} parent=55 // pred_region
          %4483 = vsyncadd %s4475, 0
          %s4484 = smul.addr %s23, 32
          %s4485 = smul.addr %s4484, 8
          %s4486 = scalar_lea.hbm %s9, %s4485
          %s4487 = sshll.u32 %s4478, 4
          %s4488 = int_to_ptr.vmem [resolvable:$true] %s4487
          %s4489 = sshll.u32 %s4486, 4
          %s4490 = int_to_ptr.hbm [resolvable:$true] %s4489
          %4495 = dma.vmem_to_hbm [thread:$0]  %s4488, 4096, %s4490, %s4475, 128, 128, 8
        $region60: #{rcab_forward.1} parent=55 // pred_fallthru
          _
      $region56: #{rcab_forward.1} parent=5 // pred_fallthru
        _
      %p4496 = scmp.le.s32.totalorder 2, %s18
      // Predicated region
      $region61: #{rcab_forward.1} parent=5 // pred_check
        %p4497 = pneg %p4496
      $region62: #{rcab_forward.1} parent=5 // pred_check_branch
        %4499 = sbr.rel (%p4497) target = $region64
      $region63: #{rcab_forward.1} parent=5 // pred_region
        %s4500 = ssub.s32 %s18, 2
        // Predicated region
        $region65: #{rcab_forward.1} parent=63 // pred_check
          %p4501 = pneg %p241
        $region66: #{rcab_forward.1} parent=63 // pred_check_branch
          %4503 = sbr.rel (%p4501) target = $region68
        $region67: #{rcab_forward.1} parent=63 // pred_region
          %s4504 = sand.u32 %s226, 1
          %s4505 = scalar_lea.sflag [#allocation5], %s4504
          %s4506 = sand.u32 %s226, 1
          %s4507 = smul.addr %s4506, 256
          %s4508 = scalar_lea.vmem [#allocation4], %s4507
          %4510 = dma.done %s4505, 4096
        $region68: #{rcab_forward.1} parent=63 // pred_fallthru
          _
      $region64: #{rcab_forward.1} parent=5 // pred_fallthru
        _
    $region6: #{rcab_forward.1} parent=1 // loop_footer
      %s22 = sadd.s32 1, %s18
    $region7: #{rcab_forward.1} parent=1 // loop_footer_branch
      %17 = sbr.rel target = $region3
    $region8: #{rcab_forward.1} parent=1 // loop_exit
      _
    %4511 = vsyncpa [#allocation5], 1
    %s4512 = scalar_lea.sflag [#allocation5], 1
    %4513 = vsyncpa %s4512, 1

</llo_original>
